<compile_context>
chip_gen: v7x
topology: tpu7x:2x2x1
jax: 0.10.0
libtpu: 0.0.40
codegen_flags: <defaults>
</compile_context>

<pallas_src>
import functools
import math

import jax
import jax.numpy as jnp
from jax.experimental import pallas as pl
from jax.experimental.pallas import tpu as pltpu


def _fused_residual_cnn_kernel(x_ref, w_ref, b_ref, o_ref, pad_ref, *,
                               layer_dims, pmax, bt, t, sigmoid):
    """One grid step = `bt` batch elements, time-interleaved on the lane axis.

    x_ref  : (1, Cin0, N)          f32   N = t*bt, lane index = time*bt + elem
    w_ref  : (L, Cout, KCpad)      bf16  flattened weights, column = k*Cin_l + ci
    b_ref  : (Cout, L)             f32   biases
    o_ref  : (1, L, Cout, N)       f32   stacked output (interleaved lanes)
    pad_ref: (Cmax, (t+2*pmax)*bt) bf16  VMEM scratch: zero halo + current activation
    """
    n = t * bt
    halo = pmax * bt
    num_layers = len(layer_dims)
    cout = o_ref.shape[2]
    cmax = pad_ref.shape[0]

    # Zero the halo lanes once per step.  Because all `bt` elements share each padded
    # time index, a conv shift of d time steps is a contiguous lane shift of d*bt and
    # out-of-range taps read these zeros (exact "same" zero padding, no cross-element
    # bleed).  The activation region [halo, halo+n) is overwritten below every layer.
    if halo > 0:
        pad_ref[:, :halo] = jnp.zeros((cmax, halo), jnp.bfloat16)
        pad_ref[:, halo + n:] = jnp.zeros((cmax, halo), jnp.bfloat16)

    # Stage the layer-0 input (single f32 -> bf16 cast of the small input slab).
    cin0 = layer_dims[0][0]
    pad_ref[:cin0, halo:halo + n] = x_ref[0].astype(jnp.bfloat16)

    for l, (cin, k) in enumerate(layer_dims):
        p = (k - 1) // 2
        acc = None
        # K per-tap MXU matmuls; taps are lane-shifted VMEM reads (vld path, no XLU).
        for kk in range(k):
            w_tap = w_ref[l, :, kk * cin:(kk + 1) * cin]          # (Cout, cin) bf16
            lane0 = (kk + pmax - p) * bt                          # static offset
            x_tap = pad_ref[:cin, lane0:lane0 + n]                # (cin, N)   bf16
            d = jnp.dot(w_tap, x_tap, preferred_element_type=jnp.float32)
            acc = d if acc is None else acc + d
        y = acc + b_ref[:, l:l + 1]                               # bias broadcast over N

        # Module applies sigmoid only to the stacked output, not to the carried x.
        o_ref[0, l, :, :] = jax.nn.sigmoid(y) if sigmoid else y

        if l + 1 < num_layers:
            # Carry pre-sigmoid activation to the next layer: ONE bf16 cast per layer.
            pad_ref[:cout, halo:halo + n] = y.astype(jnp.bfloat16)


def pack_params(params):
    """One-time packing (call OUTSIDE the jitted forward).

    Weights -> (L, Cout, KCpad) bf16 slab with column index k*Cin_l + ci holding
    w_l[co, ci, k]; biases -> (Cout, L) f32.
    """
    num_layers = len(params)
    cout = params[0][0].shape[0]
    kcs = [int(w.shape[1] * w.shape[2]) for w, _ in params]
    kcpad = max(128, ((max(kcs) + 127) // 128) * 128)   # lane-friendly stride
    w_slab = jnp.zeros((num_layers, cout, kcpad), jnp.float32)
    for l, (w, _) in enumerate(params):
        co, ci, k = w.shape
        wf = jnp.transpose(w, (0, 2, 1)).reshape(co, k * ci)
        w_slab = w_slab.at[l, :, :k * ci].set(wf)
    b_slab = jnp.stack([b for _, b in params], axis=1).astype(jnp.float32)   # (Cout, L)
    return w_slab.astype(jnp.bfloat16), b_slab


def residual_cnn_forward(x, w_slab, b_slab, *, kernel_sizes, sigmoid=False,
                         batch_tile=None):
    """x: (B, in_channels, T) -> (B, out_chans, height, T).  stride=1, odd kernels."""
    B, cin0, T = x.shape
    L, cout, kcpad = w_slab.shape
    assert L == len(kernel_sizes)
    for k in kernel_sizes:
        assert k % 2 == 1, "stride=1 'same' conv requires odd kernel sizes"
    layer_dims = tuple((cin0 if l == 0 else cout, int(kernel_sizes[l]))
                       for l in range(L))
    pmax = max((k - 1) // 2 for _, k in layer_dims)

    # Batch tile: widen the matmul N dimension to ~512 lanes (v6e/v7x MXU is 256 wide,
    # v5e needs multiples of 128), while leaving >=2 grid steps when B allows (v7x TCs).
    bt = batch_tile if batch_tile is not None else max(1, 512 // max(T, 1))
    bt = max(1, min(bt, B))
    G = -(-B // bt)
    Bp = G * bt
    n = T * bt
    cmax = max(cin0, cout)

    xg = x.astype(jnp.float32)
    if Bp != B:
        xg = jnp.pad(xg, ((0, Bp - B), (0, 0), (0, 0)))
    # Interleave `bt` elements on the lane axis: lane = time*bt + elem.
    xg = xg.reshape(G, bt, cin0, T).transpose(0, 2, 3, 1).reshape(G, cin0, n)

    flops = 2 * sum(cout * k * ci for ci, k in layer_dims) * T * Bp
    transcendentals = Bp * L * cout * T if sigmoid else 0
    bytes_accessed = (xg.size * 4 + G * L * cout * n * 4
                      + w_slab.size * 2 + b_slab.size * 4)

    kernel = functools.partial(
        _fused_residual_cnn_kernel,
        layer_dims=layer_dims, pmax=pmax, bt=bt, t=T, sigmoid=sigmoid)

    out_g = pl.pallas_call(
        kernel,
        out_shape=jax.ShapeDtypeStruct((G, L, cout, n), jnp.float32),
        grid=(G,),
        in_specs=[
            pl.BlockSpec((1, cin0, n), lambda g: (g, 0, 0)),
            pl.BlockSpec((L, cout, kcpad), lambda g: (0, 0, 0)),   # constant block
            pl.BlockSpec((cout, L), lambda g: (0, 0)),             # constant block
        ],
        out_specs=pl.BlockSpec((1, L, cout, n), lambda g: (g, 0, 0, 0)),
        scratch_shapes=[pltpu.VMEM((cmax, (T + 2 * pmax) * bt), jnp.bfloat16)],
        compiler_params=pltpu.CompilerParams(dimension_semantics=("parallel",)),
        cost_estimate=pl.CostEstimate(flops=flops, transcendentals=transcendentals,
                                      bytes_accessed=bytes_accessed),
    )(xg, w_slab, b_slab)

    # De-interleave: (G, L, Cout, T*bt) -> (B, L, Cout, T).
    out = out_g.reshape(G, L, cout, T, bt).transpose(0, 4, 1, 2, 3)
    out = out.reshape(Bp, L, cout, T)
    return out[:B]


def init_params(key, in_channels, base_filters, kernel_sizes):
    """Deterministic init mirroring the module: kaiming_normal_ weights (reinit=True),
    PyTorch-default uniform bias (reinit does not touch conv bias)."""
    params = []
    cin = in_channels
    for k in kernel_sizes:
        cout = base_filters
        key, wk, bk = jax.random.split(key, 3)
        fan_in = cin * k
        w = jax.random.normal(wk, (cout, cin, k), jnp.float32) * math.sqrt(2.0 / fan_in)
        bound = 1.0 / math.sqrt(fan_in)
        b = jax.random.uniform(bk, (cout,), jnp.float32, minval=-bound, maxval=bound)
        params.append((w, b))
        cin = cout
    return params


def _ref_forward(x_nct, params, sigmoid=False):
    """Pure-JAX reference (lax.conv) with the same bf16-input / f32-accumulate scheme."""
    x = x_nct
    outs = []
    for w, b in params:
        k = w.shape[2]
        p = (k - 1) // 2
        y = jax.lax.conv_general_dilated(
            x.astype(jnp.bfloat16), w.astype(jnp.bfloat16),
            window_strides=(1,), padding=[(p, p)],
            dimension_numbers=("NCH", "OIH", "NCH"),
            preferred_element_type=jnp.float32,
        ) + b[None, :, None]
        outs.append(y)
        x = y
    img = jnp.stack(outs, axis=1)
    return jax.nn.sigmoid(img) if sigmoid else img


if __name__ == "__main__":
    B, Cin, T = 8, 3, 128          # T multiple of 128 -> lane-dense; bt=4 -> N=512, G=2
    base_filters = 32
    kernel_sizes = (5, 3, 3, 3)    # odd kernels + stride=1 so torch.stack shapes match

    key = jax.random.PRNGKey(0)
    pkey, xkey = jax.random.split(key)
    params = init_params(pkey, Cin, base_filters, kernel_sizes)
    x = jax.random.normal(xkey, (B, Cin, T), jnp.float32)

    w_slab, b_slab = pack_params(params)       # one-time weight prep, outside jit

    fwd = jax.jit(residual_cnn_forward,
                  static_argnames=("kernel_sizes", "sigmoid", "batch_tile"))

    out = jax.block_until_ready(
        fwd(x, w_slab, b_slab, kernel_sizes=kernel_sizes, sigmoid=False))
    assert out.shape == (B, len(kernel_sizes), base_filters, T), out.shape
    ref = _ref_forward(x, params, sigmoid=False)
    assert jnp.allclose(out, ref, atol=2e-3, rtol=2e-3), "mismatch vs JAX reference"

    out_s = jax.block_until_ready(
        fwd(x, w_slab, b_slab, kernel_sizes=kernel_sizes, sigmoid=True))
    ref_s = _ref_forward(x, params, sigmoid=True)
    assert jnp.allclose(out_s, ref_s, atol=2e-3, rtol=2e-3), "sigmoid mismatch"

    print("KERNEL_OK")
</pallas_src>

<mosaic_0001>
module attributes {stable_mosaic.version = 11 : i64} {
  func.func @_fused_residual_cnn_kernel(%arg0: i32, %arg1: memref<1x3x512xf32, #tpu.memory_space<vmem>>, %arg2: memref<4x32x128xbf16, #tpu.memory_space<vmem>>, %arg3: memref<32x4xf32, #tpu.memory_space<vmem>>, %arg4: memref<1x4x32x512xf32, #tpu.memory_space<vmem>>, %arg5: memref<32x528xbf16, #tpu.memory_space<vmem>>) attributes {dimension_semantics = [#tpu.dimension_semantics<parallel>], iteration_bounds = array<i64: 2>, scalar_prefetch = 0 : i64, scratch_operands = 1 : i64, tpu.core_type = #tpu.core_type<tc>, window_params = [{transform_indices = @transform_0, window_bounds = array<i64: 1, 3, 512>}, {pipeline_mode = #tpu.pipeline_mode<synchronous>, transform_indices = @transform_1, window_bounds = array<i64: 4, 32, 128>}, {pipeline_mode = #tpu.pipeline_mode<synchronous>, transform_indices = @transform_2, window_bounds = array<i64: 32, 4>}, {transform_indices = @transform_3, window_bounds = array<i64: 1, 4, 32, 512>}]} {
    %cst = arith.constant 0.000000e+00 : bf16
    %0 = vector.broadcast %cst : bf16 to vector<32x8xbf16>
    %c0 = arith.constant 0 : index
    %c0_0 = arith.constant 0 : index
    %1 = vector.load %arg5[%c0, %c0_0] : memref<32x528xbf16, #tpu.memory_space<vmem>>, vector<32x8xbf16>
    tpu.vector_store %arg5[%c0, %c0_0], %0 {strides = array<i32>} : memref<32x528xbf16, #tpu.memory_space<vmem>>, vector<32x8xbf16>,
    %cst_1 = arith.constant 0.000000e+00 : bf16
    %2 = vector.broadcast %cst_1 : bf16 to vector<32x8xbf16>
    %c0_2 = arith.constant 0 : index
    %c520 = arith.constant 520 : index
    %3 = vector.load %arg5[%c0_2, %c520] : memref<32x528xbf16, #tpu.memory_space<vmem>>, vector<32x8xbf16>
    tpu.vector_store %arg5[%c0_2, %c520], %2 {strides = array<i32>} : memref<32x528xbf16, #tpu.memory_space<vmem>>, vector<32x8xbf16>,
    %c0_3 = arith.constant 0 : index
    %c0_4 = arith.constant 0 : index
    %c0_5 = arith.constant 0 : index
    %4 = vector.load %arg1[%c0_3, %c0_4, %c0_5] : memref<1x3x512xf32, #tpu.memory_space<vmem>>, vector<1x3x512xf32>
    %5 = vector.shape_cast %4 : vector<1x3x512xf32> to vector<3x512xf32>
    %6 = arith.truncf %5 : vector<3x512xf32> to vector<3x512xbf16>
    %c0_6 = arith.constant 0 : index
    %c8 = arith.constant 8 : index
    %7 = vector.load %arg5[%c0_6, %c8] : memref<32x528xbf16, #tpu.memory_space<vmem>>, vector<3x512xbf16>
    tpu.vector_store %arg5[%c0_6, %c8], %6 {strides = array<i32>} : memref<32x528xbf16, #tpu.memory_space<vmem>>, vector<3x512xbf16>,
    %c0_7 = arith.constant 0 : index
    %c0_8 = arith.constant 0 : index
    %c0_9 = arith.constant 0 : index
    %8 = vector.load %arg2[%c0_7, %c0_8, %c0_9] : memref<4x32x128xbf16, #tpu.memory_space<vmem>>, vector<1x32x3xbf16>
    %9 = vector.shape_cast %8 : vector<1x32x3xbf16> to vector<32x3xbf16>
    %c0_10 = arith.constant 0 : index
    %c0_11 = arith.constant 0 : index
    %10 = vector.load %arg5[%c0_10, %c0_11] : memref<32x528xbf16, #tpu.memory_space<vmem>>, vector<3x512xbf16>
    %cst_12 = arith.constant dense<0.000000e+00> : vector<32x512xf32>
    %11 = tpu.matmul %9, %10, %cst_12 {dimension_numbers = #tpu.dot_dimension_numbers<[1], [0], [0], [1], [0, 0, 1, 1], [], []>} : vector<32x3xbf16>, vector<3x512xbf16>, vector<32x512xf32> -> vector<32x512xf32>
    %c0_13 = arith.constant 0 : index
    %c0_14 = arith.constant 0 : index
    %c3 = arith.constant 3 : index
    %12 = vector.load %arg2[%c0_13, %c0_14, %c3] : memref<4x32x128xbf16, #tpu.memory_space<vmem>>, vector<1x32x3xbf16>
    %13 = vector.shape_cast %12 : vector<1x32x3xbf16> to vector<32x3xbf16>
    %c0_15 = arith.constant 0 : index
    %c4 = arith.constant 4 : index
    %14 = vector.load %arg5[%c0_15, %c4] : memref<32x528xbf16, #tpu.memory_space<vmem>>, vector<3x512xbf16>
    %cst_16 = arith.constant dense<0.000000e+00> : vector<32x512xf32>
    %15 = tpu.matmul %13, %14, %cst_16 {dimension_numbers = #tpu.dot_dimension_numbers<[1], [0], [0], [1], [0, 0, 1, 1], [], []>} : vector<32x3xbf16>, vector<3x512xbf16>, vector<32x512xf32> -> vector<32x512xf32>
    %16 = arith.addf %11, %15 : vector<32x512xf32>
    %c0_17 = arith.constant 0 : index
    %c0_18 = arith.constant 0 : index
    %c6 = arith.constant 6 : index
    %17 = vector.load %arg2[%c0_17, %c0_18, %c6] : memref<4x32x128xbf16, #tpu.memory_space<vmem>>, vector<1x32x3xbf16>
    %18 = vector.shape_cast %17 : vector<1x32x3xbf16> to vector<32x3xbf16>
    %c0_19 = arith.constant 0 : index
    %c8_20 = arith.constant 8 : index
    %19 = vector.load %arg5[%c0_19, %c8_20] : memref<32x528xbf16, #tpu.memory_space<vmem>>, vector<3x512xbf16>
    %cst_21 = arith.constant dense<0.000000e+00> : vector<32x512xf32>
    %20 = tpu.matmul %18, %19, %cst_21 {dimension_numbers = #tpu.dot_dimension_numbers<[1], [0], [0], [1], [0, 0, 1, 1], [], []>} : vector<32x3xbf16>, vector<3x512xbf16>, vector<32x512xf32> -> vector<32x512xf32>
    %21 = arith.addf %16, %20 : vector<32x512xf32>
    %c0_22 = arith.constant 0 : index
    %c0_23 = arith.constant 0 : index
    %c9 = arith.constant 9 : index
    %22 = vector.load %arg2[%c0_22, %c0_23, %c9] : memref<4x32x128xbf16, #tpu.memory_space<vmem>>, vector<1x32x3xbf16>
    %23 = vector.shape_cast %22 : vector<1x32x3xbf16> to vector<32x3xbf16>
    %c0_24 = arith.constant 0 : index
    %c12 = arith.constant 12 : index
    %24 = vector.load %arg5[%c0_24, %c12] : memref<32x528xbf16, #tpu.memory_space<vmem>>, vector<3x512xbf16>
    %cst_25 = arith.constant dense<0.000000e+00> : vector<32x512xf32>
    %25 = tpu.matmul %23, %24, %cst_25 {dimension_numbers = #tpu.dot_dimension_numbers<[1], [0], [0], [1], [0, 0, 1, 1], [], []>} : vector<32x3xbf16>, vector<3x512xbf16>, vector<32x512xf32> -> vector<32x512xf32>
    %26 = arith.addf %21, %25 : vector<32x512xf32>
    %c0_26 = arith.constant 0 : index
    %c0_27 = arith.constant 0 : index
    %c12_28 = arith.constant 12 : index
    %27 = vector.load %arg2[%c0_26, %c0_27, %c12_28] : memref<4x32x128xbf16, #tpu.memory_space<vmem>>, vector<1x32x3xbf16>
    %28 = vector.shape_cast %27 : vector<1x32x3xbf16> to vector<32x3xbf16>
    %c0_29 = arith.constant 0 : index
    %c16 = arith.constant 16 : index
    %29 = vector.load %arg5[%c0_29, %c16] : memref<32x528xbf16, #tpu.memory_space<vmem>>, vector<3x512xbf16>
    %cst_30 = arith.constant dense<0.000000e+00> : vector<32x512xf32>
    %30 = tpu.matmul %28, %29, %cst_30 {dimension_numbers = #tpu.dot_dimension_numbers<[1], [0], [0], [1], [0, 0, 1, 1], [], []>} : vector<32x3xbf16>, vector<3x512xbf16>, vector<32x512xf32> -> vector<32x512xf32>
    %31 = arith.addf %26, %30 : vector<32x512xf32>
    %c0_31 = arith.constant 0 : index
    %c0_32 = arith.constant 0 : index
    %32 = vector.load %arg3[%c0_31, %c0_32] : memref<32x4xf32, #tpu.memory_space<vmem>>, vector<32x1xf32>
    %33 = vector.broadcast %32 : vector<32x1xf32> to vector<32x512xf32>
    %34 = arith.addf %31, %33 : vector<32x512xf32>
    %c0_33 = arith.constant 0 : index
    %c0_34 = arith.constant 0 : index
    %c0_35 = arith.constant 0 : index
    %c0_36 = arith.constant 0 : index
    %35 = vector.load %arg4[%c0_33, %c0_34, %c0_35, %c0_36] : memref<1x4x32x512xf32, #tpu.memory_space<vmem>>, vector<1x1x32x512xf32>
    %36 = vector.shape_cast %35 : vector<1x1x32x512xf32> to vector<32x512xf32>
    %37 = vector.shape_cast %34 : vector<32x512xf32> to vector<1x1x32x512xf32>
    tpu.vector_store %arg4[%c0_33, %c0_34, %c0_35, %c0_36], %37 {strides = array<i32>} : memref<1x4x32x512xf32, #tpu.memory_space<vmem>>, vector<1x1x32x512xf32>,
    %38 = arith.truncf %34 : vector<32x512xf32> to vector<32x512xbf16>
    %c0_37 = arith.constant 0 : index
    %c8_38 = arith.constant 8 : index
    %39 = vector.load %arg5[%c0_37, %c8_38] : memref<32x528xbf16, #tpu.memory_space<vmem>>, vector<32x512xbf16>
    tpu.vector_store %arg5[%c0_37, %c8_38], %38 {strides = array<i32>} : memref<32x528xbf16, #tpu.memory_space<vmem>>, vector<32x512xbf16>,
    %c1 = arith.constant 1 : index
    %c0_39 = arith.constant 0 : index
    %c0_40 = arith.constant 0 : index
    %40 = vector.load %arg2[%c1, %c0_39, %c0_40] : memref<4x32x128xbf16, #tpu.memory_space<vmem>>, vector<1x32x32xbf16>
    %41 = vector.shape_cast %40 : vector<1x32x32xbf16> to vector<32x32xbf16>
    %c0_41 = arith.constant 0 : index
    %c4_42 = arith.constant 4 : index
    %42 = vector.load %arg5[%c0_41, %c4_42] : memref<32x528xbf16, #tpu.memory_space<vmem>>, vector<32x512xbf16>
    %cst_43 = arith.constant dense<0.000000e+00> : vector<32x512xf32>
    %43 = tpu.matmul %41, %42, %cst_43 {dimension_numbers = #tpu.dot_dimension_numbers<[1], [0], [0], [1], [0, 0, 1, 1], [], []>} : vector<32x32xbf16>, vector<32x512xbf16>, vector<32x512xf32> -> vector<32x512xf32>
    %c1_44 = arith.constant 1 : index
    %c0_45 = arith.constant 0 : index
    %c32 = arith.constant 32 : index
    %44 = vector.load %arg2[%c1_44, %c0_45, %c32] : memref<4x32x128xbf16, #tpu.memory_space<vmem>>, vector<1x32x32xbf16>
    %45 = vector.shape_cast %44 : vector<1x32x32xbf16> to vector<32x32xbf16>
    %c0_46 = arith.constant 0 : index
    %c8_47 = arith.constant 8 : index
    %46 = vector.load %arg5[%c0_46, %c8_47] : memref<32x528xbf16, #tpu.memory_space<vmem>>, vector<32x512xbf16>
    %cst_48 = arith.constant dense<0.000000e+00> : vector<32x512xf32>
    %47 = tpu.matmul %45, %46, %cst_48 {dimension_numbers = #tpu.dot_dimension_numbers<[1], [0], [0], [1], [0, 0, 1, 1], [], []>} : vector<32x32xbf16>, vector<32x512xbf16>, vector<32x512xf32> -> vector<32x512xf32>
    %48 = arith.addf %43, %47 : vector<32x512xf32>
    %c1_49 = arith.constant 1 : index
    %c0_50 = arith.constant 0 : index
    %c64 = arith.constant 64 : index
    %49 = vector.load %arg2[%c1_49, %c0_50, %c64] : memref<4x32x128xbf16, #tpu.memory_space<vmem>>, vector<1x32x32xbf16>
    %50 = vector.shape_cast %49 : vector<1x32x32xbf16> to vector<32x32xbf16>
    %c0_51 = arith.constant 0 : index
    %c12_52 = arith.constant 12 : index
    %51 = vector.load %arg5[%c0_51, %c12_52] : memref<32x528xbf16, #tpu.memory_space<vmem>>, vector<32x512xbf16>
    %cst_53 = arith.constant dense<0.000000e+00> : vector<32x512xf32>
    %52 = tpu.matmul %50, %51, %cst_53 {dimension_numbers = #tpu.dot_dimension_numbers<[1], [0], [0], [1], [0, 0, 1, 1], [], []>} : vector<32x32xbf16>, vector<32x512xbf16>, vector<32x512xf32> -> vector<32x512xf32>
    %53 = arith.addf %48, %52 : vector<32x512xf32>
    %c0_54 = arith.constant 0 : index
    %c1_55 = arith.constant 1 : index
    %54 = vector.load %arg3[%c0_54, %c1_55] : memref<32x4xf32, #tpu.memory_space<vmem>>, vector<32x1xf32>
    %55 = vector.broadcast %54 : vector<32x1xf32> to vector<32x512xf32>
    %56 = arith.addf %53, %55 : vector<32x512xf32>
    %c0_56 = arith.constant 0 : index
    %c1_57 = arith.constant 1 : index
    %c0_58 = arith.constant 0 : index
    %c0_59 = arith.constant 0 : index
    %57 = vector.load %arg4[%c0_56, %c1_57, %c0_58, %c0_59] : memref<1x4x32x512xf32, #tpu.memory_space<vmem>>, vector<1x1x32x512xf32>
    %58 = vector.shape_cast %57 : vector<1x1x32x512xf32> to vector<32x512xf32>
    %59 = vector.shape_cast %56 : vector<32x512xf32> to vector<1x1x32x512xf32>
    tpu.vector_store %arg4[%c0_56, %c1_57, %c0_58, %c0_59], %59 {strides = array<i32>} : memref<1x4x32x512xf32, #tpu.memory_space<vmem>>, vector<1x1x32x512xf32>,
    %60 = arith.truncf %56 : vector<32x512xf32> to vector<32x512xbf16>
    %c0_60 = arith.constant 0 : index
    %c8_61 = arith.constant 8 : index
    %61 = vector.load %arg5[%c0_60, %c8_61] : memref<32x528xbf16, #tpu.memory_space<vmem>>, vector<32x512xbf16>
    tpu.vector_store %arg5[%c0_60, %c8_61], %60 {strides = array<i32>} : memref<32x528xbf16, #tpu.memory_space<vmem>>, vector<32x512xbf16>,
    %c2 = arith.constant 2 : index
    %c0_62 = arith.constant 0 : index
    %c0_63 = arith.constant 0 : index
    %62 = vector.load %arg2[%c2, %c0_62, %c0_63] : memref<4x32x128xbf16, #tpu.memory_space<vmem>>, vector<1x32x32xbf16>
    %63 = vector.shape_cast %62 : vector<1x32x32xbf16> to vector<32x32xbf16>
    %c0_64 = arith.constant 0 : index
    %c4_65 = arith.constant 4 : index
    %64 = vector.load %arg5[%c0_64, %c4_65] : memref<32x528xbf16, #tpu.memory_space<vmem>>, vector<32x512xbf16>
    %cst_66 = arith.constant dense<0.000000e+00> : vector<32x512xf32>
    %65 = tpu.matmul %63, %64, %cst_66 {dimension_numbers = #tpu.dot_dimension_numbers<[1], [0], [0], [1], [0, 0, 1, 1], [], []>} : vector<32x32xbf16>, vector<32x512xbf16>, vector<32x512xf32> -> vector<32x512xf32>
    %c2_67 = arith.constant 2 : index
    %c0_68 = arith.constant 0 : index
    %c32_69 = arith.constant 32 : index
    %66 = vector.load %arg2[%c2_67, %c0_68, %c32_69] : memref<4x32x128xbf16, #tpu.memory_space<vmem>>, vector<1x32x32xbf16>
    %67 = vector.shape_cast %66 : vector<1x32x32xbf16> to vector<32x32xbf16>
    %c0_70 = arith.constant 0 : index
    %c8_71 = arith.constant 8 : index
    %68 = vector.load %arg5[%c0_70, %c8_71] : memref<32x528xbf16, #tpu.memory_space<vmem>>, vector<32x512xbf16>
    %cst_72 = arith.constant dense<0.000000e+00> : vector<32x512xf32>
    %69 = tpu.matmul %67, %68, %cst_72 {dimension_numbers = #tpu.dot_dimension_numbers<[1], [0], [0], [1], [0, 0, 1, 1], [], []>} : vector<32x32xbf16>, vector<32x512xbf16>, vector<32x512xf32> -> vector<32x512xf32>
    %70 = arith.addf %65, %69 : vector<32x512xf32>
    %c2_73 = arith.constant 2 : index
    %c0_74 = arith.constant 0 : index
    %c64_75 = arith.constant 64 : index
    %71 = vector.load %arg2[%c2_73, %c0_74, %c64_75] : memref<4x32x128xbf16, #tpu.memory_space<vmem>>, vector<1x32x32xbf16>
    %72 = vector.shape_cast %71 : vector<1x32x32xbf16> to vector<32x32xbf16>
    %c0_76 = arith.constant 0 : index
    %c12_77 = arith.constant 12 : index
    %73 = vector.load %arg5[%c0_76, %c12_77] : memref<32x528xbf16, #tpu.memory_space<vmem>>, vector<32x512xbf16>
    %cst_78 = arith.constant dense<0.000000e+00> : vector<32x512xf32>
    %74 = tpu.matmul %72, %73, %cst_78 {dimension_numbers = #tpu.dot_dimension_numbers<[1], [0], [0], [1], [0, 0, 1, 1], [], []>} : vector<32x32xbf16>, vector<32x512xbf16>, vector<32x512xf32> -> vector<32x512xf32>
    %75 = arith.addf %70, %74 : vector<32x512xf32>
    %c0_79 = arith.constant 0 : index
    %c2_80 = arith.constant 2 : index
    %76 = vector.load %arg3[%c0_79, %c2_80] : memref<32x4xf32, #tpu.memory_space<vmem>>, vector<32x1xf32>
    %77 = vector.broadcast %76 : vector<32x1xf32> to vector<32x512xf32>
    %78 = arith.addf %75, %77 : vector<32x512xf32>
    %c0_81 = arith.constant 0 : index
    %c2_82 = arith.constant 2 : index
    %c0_83 = arith.constant 0 : index
    %c0_84 = arith.constant 0 : index
    %79 = vector.load %arg4[%c0_81, %c2_82, %c0_83, %c0_84] : memref<1x4x32x512xf32, #tpu.memory_space<vmem>>, vector<1x1x32x512xf32>
    %80 = vector.shape_cast %79 : vector<1x1x32x512xf32> to vector<32x512xf32>
    %81 = vector.shape_cast %78 : vector<32x512xf32> to vector<1x1x32x512xf32>
    tpu.vector_store %arg4[%c0_81, %c2_82, %c0_83, %c0_84], %81 {strides = array<i32>} : memref<1x4x32x512xf32, #tpu.memory_space<vmem>>, vector<1x1x32x512xf32>,
    %82 = arith.truncf %78 : vector<32x512xf32> to vector<32x512xbf16>
    %c0_85 = arith.constant 0 : index
    %c8_86 = arith.constant 8 : index
    %83 = vector.load %arg5[%c0_85, %c8_86] : memref<32x528xbf16, #tpu.memory_space<vmem>>, vector<32x512xbf16>
    tpu.vector_store %arg5[%c0_85, %c8_86], %82 {strides = array<i32>} : memref<32x528xbf16, #tpu.memory_space<vmem>>, vector<32x512xbf16>,
    %c3_87 = arith.constant 3 : index
    %c0_88 = arith.constant 0 : index
    %c0_89 = arith.constant 0 : index
    %84 = vector.load %arg2[%c3_87, %c0_88, %c0_89] : memref<4x32x128xbf16, #tpu.memory_space<vmem>>, vector<1x32x32xbf16>
    %85 = vector.shape_cast %84 : vector<1x32x32xbf16> to vector<32x32xbf16>
    %c0_90 = arith.constant 0 : index
    %c4_91 = arith.constant 4 : index
    %86 = vector.load %arg5[%c0_90, %c4_91] : memref<32x528xbf16, #tpu.memory_space<vmem>>, vector<32x512xbf16>
    %cst_92 = arith.constant dense<0.000000e+00> : vector<32x512xf32>
    %87 = tpu.matmul %85, %86, %cst_92 {dimension_numbers = #tpu.dot_dimension_numbers<[1], [0], [0], [1], [0, 0, 1, 1], [], []>} : vector<32x32xbf16>, vector<32x512xbf16>, vector<32x512xf32> -> vector<32x512xf32>
    %c3_93 = arith.constant 3 : index
    %c0_94 = arith.constant 0 : index
    %c32_95 = arith.constant 32 : index
    %88 = vector.load %arg2[%c3_93, %c0_94, %c32_95] : memref<4x32x128xbf16, #tpu.memory_space<vmem>>, vector<1x32x32xbf16>
    %89 = vector.shape_cast %88 : vector<1x32x32xbf16> to vector<32x32xbf16>
    %c0_96 = arith.constant 0 : index
    %c8_97 = arith.constant 8 : index
    %90 = vector.load %arg5[%c0_96, %c8_97] : memref<32x528xbf16, #tpu.memory_space<vmem>>, vector<32x512xbf16>
    %cst_98 = arith.constant dense<0.000000e+00> : vector<32x512xf32>
    %91 = tpu.matmul %89, %90, %cst_98 {dimension_numbers = #tpu.dot_dimension_numbers<[1], [0], [0], [1], [0, 0, 1, 1], [], []>} : vector<32x32xbf16>, vector<32x512xbf16>, vector<32x512xf32> -> vector<32x512xf32>
    %92 = arith.addf %87, %91 : vector<32x512xf32>
    %c3_99 = arith.constant 3 : index
    %c0_100 = arith.constant 0 : index
    %c64_101 = arith.constant 64 : index
    %93 = vector.load %arg2[%c3_99, %c0_100, %c64_101] : memref<4x32x128xbf16, #tpu.memory_space<vmem>>, vector<1x32x32xbf16>
    %94 = vector.shape_cast %93 : vector<1x32x32xbf16> to vector<32x32xbf16>
    %c0_102 = arith.constant 0 : index
    %c12_103 = arith.constant 12 : index
    %95 = vector.load %arg5[%c0_102, %c12_103] : memref<32x528xbf16, #tpu.memory_space<vmem>>, vector<32x512xbf16>
    %cst_104 = arith.constant dense<0.000000e+00> : vector<32x512xf32>
    %96 = tpu.matmul %94, %95, %cst_104 {dimension_numbers = #tpu.dot_dimension_numbers<[1], [0], [0], [1], [0, 0, 1, 1], [], []>} : vector<32x32xbf16>, vector<32x512xbf16>, vector<32x512xf32> -> vector<32x512xf32>
    %97 = arith.addf %92, %96 : vector<32x512xf32>
    %c0_105 = arith.constant 0 : index
    %c3_106 = arith.constant 3 : index
    %98 = vector.load %arg3[%c0_105, %c3_106] : memref<32x4xf32, #tpu.memory_space<vmem>>, vector<32x1xf32>
    %99 = vector.broadcast %98 : vector<32x1xf32> to vector<32x512xf32>
    %100 = arith.addf %97, %99 : vector<32x512xf32>
    %c0_107 = arith.constant 0 : index
    %c3_108 = arith.constant 3 : index
    %c0_109 = arith.constant 0 : index
    %c0_110 = arith.constant 0 : index
    %101 = vector.load %arg4[%c0_107, %c3_108, %c0_109, %c0_110] : memref<1x4x32x512xf32, #tpu.memory_space<vmem>>, vector<1x1x32x512xf32>
    %102 = vector.shape_cast %101 : vector<1x1x32x512xf32> to vector<32x512xf32>
    %103 = vector.shape_cast %100 : vector<32x512xf32> to vector<1x1x32x512xf32>
    tpu.vector_store %arg4[%c0_107, %c3_108, %c0_109, %c0_110], %103 {strides = array<i32>} : memref<1x4x32x512xf32, #tpu.memory_space<vmem>>, vector<1x1x32x512xf32>,
    return
  }
  func.func @transform_0(%arg0: i32) -> (i32, i32, i32) {
    %c0_i32 = arith.constant 0 : i32
    %c0_i32_0 = arith.constant 0 : i32
    %c0_i32_1 = arith.constant 0 : i32
    return %arg0, %c0_i32, %c0_i32_0 : i32, i32, i32
  }
  func.func @transform_1(%arg0: i32) -> (i32, i32, i32) {
    %c0_i32 = arith.constant 0 : i32
    %c0_i32_0 = arith.constant 0 : i32
    %c0_i32_1 = arith.constant 0 : i32
    %c0_i32_2 = arith.constant 0 : i32
    return %c0_i32, %c0_i32_0, %c0_i32_1 : i32, i32, i32
  }
  func.func @transform_2(%arg0: i32) -> (i32, i32) {
    %c0_i32 = arith.constant 0 : i32
    %c0_i32_0 = arith.constant 0 : i32
    %c0_i32_1 = arith.constant 0 : i32
    return %c0_i32, %c0_i32_0 : i32, i32
  }
  func.func @transform_3(%arg0: i32) -> (i32, i32, i32, i32) {
    %c0_i32 = arith.constant 0 : i32
    %c0_i32_0 = arith.constant 0 : i32
    %c0_i32_1 = arith.constant 0 : i32
    %c0_i32_2 = arith.constant 0 : i32
    return %arg0, %c0_i32, %c0_i32_0, %c0_i32_1 : i32, i32, i32, i32
  }
}

</mosaic_0001>

<llo_original>
// kernel: residual_cnn_forward.1
$region0: #{residual_cnn_forward.1}
  #allocation0 [shape = 'u32[]', space=smem, size = 0x4, offset = 0x4, fixed_abs, tag = 'smem constant byte address 0x4 - core index']
  #allocation1 [shape = 'u32[144,128]{1,0:T(1,128)}', space=vmem, size = 0x12000, scoped, tag = 'internal scratch']
  #allocation2 [shape = 'bf16[32,528]{1,0:T(16,128)(2,1)}', space=vmem, size = 0xa000, scoped, tag = 'scratch operand']
  %s0 = inlined_call_operand.vmem [shape: f32[2,3,512], index: 0, kind: input, shape index: {}]
  %s1 = inlined_call_operand.hbm [shape: bf16[4,32,128], index: 1, kind: input, shape index: {}]
  %s2 = inlined_call_operand.vmem [shape: f32[32,4], index: 2, kind: input, shape index: {}]
  %s3 = inlined_call_operand.vmem [shape: f32[2,4,32,512], index: 3, kind: output, shape index: {}]
  %s4 = sld [smem:[#allocation0]]
  $region49: #{residual_cnn_forward.1} parent=0
    _
  %s6 = ssub.s32 1, %s4
  %s7 = scalar_select 0, %s6, %s4
  $region1: #{residual_cnn_forward.1} parent=0
    #allocation3 [shape = 'u8[32768]{0}', space=vmem, size = 0x8000, scoped, tag = 'input window, operand 1, single buffered']
    #allocation4 [shape = 's32[2]{0}', space=sflag, size = 0x8, scoped, tag = 'scoped memory for residual_cnn_forward.1']
    %8 = vsyncpa [#allocation4], 0
    loop: start=0, step=1, limit=4
    $region2: #{residual_cnn_forward.1} parent=1 // loop_pre_header
      _
    $region3: #{residual_cnn_forward.1} parent=1 // loop_header
      %s10 = sphi 0, %s14
      %p11 = scmp.ge.s32.totalorder %s10, 4
      %s20 = sphi 0, %s22
      %s23 = sphi 0, %s20
      %s24 = sphi 0, %s23
      %s40 = sphi 0, %s24
      %s44 = sphi 0, %s44
      %s46 = sphi 0, %s44
      %s47 = sphi 0, %s46
      %s61 = sphi 0, %s47
      %s65 = sphi 0, %s65
      %s67 = sphi 0, %s65
      %s68 = sphi 0, %s67
      %s82 = sphi 0, %s68
      %s88 = sphi 0, %s90
      %s91 = sphi 0, %s88
      %s92 = sphi 0, %s91
      %s108 = sphi 0, %s92
    $region4: #{residual_cnn_forward.1} parent=1 // loop_header_branch
      %13 = sbr.rel (%p11) target = $region8
    $region5: #{residual_cnn_forward.1} parent=1 // loop_body
      %s15 = ssub.s32 %s10, 1
      %s16 = ssub.s32 %s10, 2
      %s17 = sadd.s32 %s10, 1
      %s18 = ssub.s32 %s10, %s17
      %p19 = scmp.eq.s32.totalorder %s18, 0
      %s21 = sadd.s32 %s20, 1
      %s22 = scalar_select %p19, %s20, %s21
      %p25 = pneg %p19
      %p26 = scmp.eq.s32.totalorder %s10, 1
      %p27 = por %p25, %p26
      %p28 = scmp.ne.s32.totalorder %s20, %s23
      %p29 = scmp.eq.s32.totalorder %s10, 0
      %p30 = por %p28, %p29
      %p31 = scmp.ne.s32.totalorder %s20, %s23
      %p32 = scmp.eq.s32.totalorder %s15, 1
      %p33 = por %p31, %p32
      %p34 = scmp.ne.s32.totalorder %s23, %s24
      %p35 = scmp.eq.s32.totalorder %s15, 0
      %p36 = por %p34, %p35
      %p37 = scmp.ne.s32.totalorder %s23, %s24
      %p38 = scmp.eq.s32.totalorder %s16, 1
      %p39 = por %p37, %p38
      %p41 = scmp.ne.s32.totalorder %s24, %s40
      %p42 = scmp.eq.s32.totalorder %s16, 0
      %p43 = por %p41, %p42
      %s45 = sadd.s32 %s44, 1
      %p48 = scmp.eq.s32.totalorder %s10, 1
      %p49 = scmp.ne.s32.totalorder %s44, %s46
      %p50 = scmp.eq.s32.totalorder %s10, 0
      %p51 = por %p49, %p50
      %p52 = scmp.ne.s32.totalorder %s44, %s46
      %p53 = scmp.eq.s32.totalorder %s15, 1
      %p54 = por %p52, %p53
      %p55 = scmp.ne.s32.totalorder %s46, %s47
      %p56 = scmp.eq.s32.totalorder %s15, 0
      %p57 = por %p55, %p56
      %p58 = scmp.ne.s32.totalorder %s46, %s47
      %p59 = scmp.eq.s32.totalorder %s16, 1
      %p60 = por %p58, %p59
      %p62 = scmp.ne.s32.totalorder %s47, %s61
      %p63 = scmp.eq.s32.totalorder %s16, 0
      %p64 = por %p62, %p63
      %s66 = sadd.s32 %s65, 1
      %p69 = scmp.eq.s32.totalorder %s10, 1
      %p70 = scmp.ne.s32.totalorder %s65, %s67
      %p71 = scmp.eq.s32.totalorder %s10, 0
      %p72 = por %p70, %p71
      %p73 = scmp.ne.s32.totalorder %s65, %s67
      %p74 = scmp.eq.s32.totalorder %s15, 1
      %p75 = por %p73, %p74
      %p76 = scmp.ne.s32.totalorder %s67, %s68
      %p77 = scmp.eq.s32.totalorder %s15, 0
      %p78 = por %p76, %p77
      %p79 = scmp.ne.s32.totalorder %s67, %s68
      %p80 = scmp.eq.s32.totalorder %s16, 1
      %p81 = por %p79, %p80
      %p83 = scmp.ne.s32.totalorder %s68, %s82
      %p84 = scmp.eq.s32.totalorder %s16, 0
      %p85 = por %p83, %p84
      %s86 = ssub.s32 %s10, %s17
      %p87 = scmp.eq.s32.totalorder %s86, 0
      %s89 = sadd.s32 %s88, 1
      %s90 = scalar_select %p87, %s88, %s89
      %p93 = pneg %p87
      %p94 = scmp.eq.s32.totalorder %s10, 1
      %p95 = por %p93, %p94
      %p96 = scmp.ne.s32.totalorder %s88, %s91
      %p97 = scmp.eq.s32.totalorder %s10, 0
      %p98 = por %p96, %p97
      %p99 = scmp.ne.s32.totalorder %s88, %s91
      %p100 = scmp.eq.s32.totalorder %s15, 1
      %p101 = por %p99, %p100
      %p102 = scmp.ne.s32.totalorder %s91, %s92
      %p103 = scmp.eq.s32.totalorder %s15, 0
      %p104 = por %p102, %p103
      %p105 = scmp.ne.s32.totalorder %s91, %s92
      %p106 = scmp.eq.s32.totalorder %s16, 1
      %p107 = por %p105, %p106
      %p109 = scmp.ne.s32.totalorder %s92, %s108
      %p110 = scmp.eq.s32.totalorder %s16, 0
      %p111 = por %p109, %p110
      %p112 = scmp.le.s32.totalorder 1, %s10
      %p113 = scmp.lt.s32.totalorder %s10, 3
      %p114 = pnand %p112, %p113
      %p115 = pneg %p114
      // Predicated region
      $region9: #{residual_cnn_forward.1} parent=5 // pred_check
        _
      $region10: #{residual_cnn_forward.1} parent=5 // pred_check_branch
        %117 = sbr.rel (%p114) target = $region12
      $region11: #{residual_cnn_forward.1} parent=5 // pred_region
        %s118 = ssub.s32 %s10, 1
        // Predicated region
        $region13: #{residual_cnn_forward.1} parent=11 // pred_check
          %p119 = pneg %p57
        $region14: #{residual_cnn_forward.1} parent=11 // pred_check_branch
          %121 = sbr.rel (%p119) target = $region16
        $region15: #{residual_cnn_forward.1} parent=11 // pred_region
          %s123 = ssub.s32 1024, 1024
          %124 = vsyncadd [#allocation4], %s123
          %s125 = sshll.u32 [#allocation3], 4
          %s126 = int_to_ptr.vmem [resolvable:$true] %s125
          %131 = dma.hbm_to_vmem [thread:$0]  %s1, 1024, %s126, [#allocation4], 64, 64, 4
        $region16: #{residual_cnn_forward.1} parent=11 // pred_fallthru
          _
        // Predicated region
        $region17: #{residual_cnn_forward.1} parent=11 // pred_check
          %p132 = pneg %p78
        $region18: #{residual_cnn_forward.1} parent=11 // pred_check_branch
          %134 = sbr.rel (%p132) target = $region20
        $region19: #{residual_cnn_forward.1} parent=11 // pred_region
          _
        $region20: #{residual_cnn_forward.1} parent=11 // pred_fallthru
          _
      $region12: #{residual_cnn_forward.1} parent=5 // pred_fallthru
        _
      %p135 = scmp.lt.s32.totalorder %s10, 2
      // Predicated region
      $region21: #{residual_cnn_forward.1} parent=5 // pred_check
        %p136 = pneg %p135
      $region22: #{residual_cnn_forward.1} parent=5 // pred_check_branch
        %138 = sbr.rel (%p136) target = $region24
      $region23: #{residual_cnn_forward.1} parent=5 // pred_region
        // Predicated region
        $region25: #{residual_cnn_forward.1} parent=23 // pred_check
          %p139 = pneg %p30
        $region26: #{residual_cnn_forward.1} parent=23 // pred_check_branch
          %141 = sbr.rel (%p139) target = $region28
        $region27: #{residual_cnn_forward.1} parent=23 // pred_region
          %p142 = scmp.lt.s32.totalorder %s10, 1
          %s143 = scalar_select %p142, %s10, 1
          %s144 = smul.addr %s143, 4
          %s145 = smul.addr %s144, 4
          %s146 = scalar_lea.vmem %s0, %s145
        $region28: #{residual_cnn_forward.1} parent=23 // pred_fallthru
          _
      $region24: #{residual_cnn_forward.1} parent=5 // pred_fallthru
        _
      %p147 = scmp.le.s32.totalorder 1, %s10
      %p148 = scmp.lt.s32.totalorder %s10, 3
      %p149 = pnand %p147, %p148
      %p150 = pneg %p149
      // Predicated region
      $region29: #{residual_cnn_forward.1} parent=5 // pred_check
        _
      $region30: #{residual_cnn_forward.1} parent=5 // pred_check_branch
        %152 = sbr.rel (%p149) target = $region32
      $region31: #{residual_cnn_forward.1} parent=5 // pred_region
        %s153 = ssub.s32 %s10, 1
        // Predicated region
        $region33: #{residual_cnn_forward.1} parent=31 // pred_check
          %p154 = pneg %p57
        $region34: #{residual_cnn_forward.1} parent=31 // pred_check_branch
          %156 = sbr.rel (%p154) target = $region36
        $region35: #{residual_cnn_forward.1} parent=31 // pred_region
          %157 = dma.done [#allocation4], 1024
        $region36: #{residual_cnn_forward.1} parent=31 // pred_fallthru
          _
        %p158 = scmp.lt.s32.totalorder %s15, 1
        %s159 = scalar_select %p158, %s15, 1
        %s160 = smul.addr %s159, 4
        %s161 = smul.addr %s160, 4
        %s162 = scalar_lea.vmem %s0, %s161
        %p163 = pneg %p36
        %p164 = pneg %p33
        %p165 = pneg %p57
        %p166 = pneg %p54
        %p167 = pneg %p78
        %p168 = pneg %p75
        %p169 = pneg %p104
        %p170 = pneg %p101
        %p171 = scmp.lt.s32.totalorder %s15, 1
        %s172 = scalar_select %p171, %s15, 1
        %s173 = smul.addr %s172, 64
        %s174 = smul.addr %s173, 8
        %s175 = scalar_lea.vmem %s3, %s174
        %p176 = scmp.lt.s32.totalorder %s15, 1
        %s177 = scalar_select %p176, %s15, 1
        %s178 = smul.addr %s177, 4
        %s179 = smul.addr %s178, 4
        %s180 = scalar_lea.vmem %s0, %s179
        %p181 = scmp.lt.s32.totalorder %s15, 1
        %s182 = scalar_select %p181, %s15, 1
        %s183 = smul.addr %s182, 64
        %s184 = smul.addr %s183, 8
        %s185 = scalar_lea.vmem %s3, %s184
        %vm187 = vcmask 64512
        %188 = vst.msk [vmem:[#allocation2] sm:$0xff] %vm187, 0
        %189 = vst.msk [vmem:[#allocation2 + $0x28] sm:$0xff] %vm187, 0
        %vm190 = vcmask 130112
        %191 = vst.msk [vmem:[#allocation2 + $0x20] sm:$0xff] %vm190, 0
        %192 = vst.msk [vmem:[#allocation2 + $0x48] sm:$0xff] %vm190, 0
        %v193 = vld [vmem:[%s180] sm:$0x77]
        %v194 = vld [vmem:[%s180 + $0x8] sm:$0x77]
        %v197 = vcombine.high %v193, %v193
        %v198 = vcombine.high %v194, %v194
        %v201 = vpack.c.bf16 %v193, %v193
        %v202 = vpack.c.bf16 %v197, %v197
        %v203 = vpack.c.bf16 %v194, %v194
        %v204 = vpack.c.bf16 %v198, %v198
        %209 = vrot.lane.b32.xlu0 %v201, 8
        %v210 = vpop.permute.xlu0 %209
        %211 = vrot.lane.b32.xlu0 %v202, 8
        %v212 = vpop.permute.xlu0 %211
        %213 = vrot.lane.b32.xlu0 %v203, 8
        %v214 = vpop.permute.xlu0 %213
        %215 = vrot.lane.b32.xlu0 %v204, 8
        %v216 = vpop.permute.xlu0 %215
        %vm217 = vcmask 64512
        %v218 = vsel %vm217, %v210, %v212
        %v219 = vsel %vm217, %v212, %v214
        %v220 = vsel %vm217, %v214, %v216
        %vm226 = vcmask 1041472
        %vm227 = vsmask.f32 1280
        %vm228 = vmand %vm226, %vm227
        %v229 = vld [vmem:[#allocation2] sm:$0x3]
        %v230 = vsel %vm228, %v210, %v229
        %231 = vst [vmem:[#allocation2] sm:$0x3] %v230
        %vm232 = vcmask 1041408
        %vm233 = vmand %vm232, %vm227
        %v234 = vld [vmem:[#allocation2 + $0x8] sm:$0x3]
        %v235 = vsel %vm233, %v218, %v234
        %236 = vst [vmem:[#allocation2 + $0x8] sm:$0x3] %v235
        %v237 = vld [vmem:[#allocation2 + $0x10] sm:$0x3]
        %v238 = vsel %vm233, %v219, %v237
        %239 = vst [vmem:[#allocation2 + $0x10] sm:$0x3] %v238
        %v240 = vld [vmem:[#allocation2 + $0x18] sm:$0x3]
        %v241 = vsel %vm233, %v220, %v240
        %242 = vst [vmem:[#allocation2 + $0x18] sm:$0x3] %v241
        %vm243 = vcmask 58368
        %vm244 = vmand %vm243, %vm227
        %v245 = vld [vmem:[#allocation2 + $0x20] sm:$0x3]
        %v246 = vsel %vm244, %v216, %v245
        %247 = vst [vmem:[#allocation2 + $0x20] sm:$0x3] %v246
        %v248 = vld [vmem:[#allocation3] sm:$0xf]
        %v249 = vld [vmem:[#allocation3 + $0x4] sm:$0xf]
        %v250 = vld [vmem:[#allocation3 + $0x8] sm:$0xf]
        %v251 = vld [vmem:[#allocation3 + $0xc] sm:$0xf]
        %v252 = vld [vmem:[#allocation2] sm:$0x3]
        %v253 = vld [vmem:[#allocation2 + $0x8] sm:$0x3]
        %v254 = vld [vmem:[#allocation2 + $0x10] sm:$0x3]
        %v255 = vld [vmem:[#allocation2 + $0x18] sm:$0x3]
        %v256 = vld [vmem:[#allocation2 + $0x20] sm:$0x3]
        %v261 = vunpack.c.l.b16 %v248
        %v262 = vunpack.c.l.b16 %v249
        %v263 = vunpack.c.l.b16 %v250
        %v264 = vunpack.c.l.b16 %v251
        %v265 = vpack.c.b16 %v262, %v261
        %v266 = vpack.c.b16 %v264, %v263
        %267 = vrot.lane.b32.xlu0 %v265, 125
        %v268 = vpop.permute.xlu0 %267
        %269 = vrot.lane.b32.xlu0 %v266, 125
        %v270 = vpop.permute.xlu0 %269
        %276 = vrot.lane.b32.xlu0 %v252, 124
        %v277 = vpop.permute.xlu0 %276
        %278 = vrot.lane.b32.xlu0 %v253, 124
        %v279 = vpop.permute.xlu0 %278
        %280 = vrot.lane.b32.xlu0 %v254, 124
        %v281 = vpop.permute.xlu0 %280
        %282 = vrot.lane.b32.xlu0 %v255, 124
        %v283 = vpop.permute.xlu0 %282
        %284 = vrot.lane.b32.xlu0 %v256, 124
        %v285 = vpop.permute.xlu0 %284
        %vm286 = vcmask 1014784
        %v287 = vsel %vm286, %v277, %v279
        %v288 = vsel %vm286, %v279, %v281
        %v289 = vsel %vm286, %v281, %v283
        %v290 = vsel %vm286, %v283, %v285
        %vm291 = vcmask 23552
        %v293 = vsel %vm291, %v268, 0
        %v296 = vsel %vm291, %v270, 0
        %vm298 = vcmask 1040384
        %vm299 = vcmask 1041408
        %v300 = vsel %vm298, 4294967295, 65535
        %v301 = vsel %vm299, %v300, 0
        %v303 = vand.u32 %v287, %v301
        %v306 = vand.u32 %v288, %v301
        %v309 = vand.u32 %v289, %v301
        %v312 = vand.u32 %v290, %v301
        %314 = vmatprep.subr.bf16.mxu0 %v306
        %315 = vmatpush1.bf16.msra.mxu0 %v303
        %316 = vmatprep.subr.bf16.mxu0 0
        %317 = vmatpush1.bf16.msra.mxu0 0
        %318 = vmatprep.subr.bf16.mxu0 0
        %319 = vmatpush1.bf16.msra.mxu0 0
        %320 = vmatprep.subr.bf16.mxu0 0
        %321 = vmatpush1.bf16.msra.mxu0 0
        %322 = vmatprep.subr.bf16.mxu0 0
        %323 = vmatpush1.bf16.msra.mxu0 0
        %324 = vmatprep.subr.bf16.mxu0 0
        %325 = vmatpush1.bf16.msra.mxu0 0
        %326 = vmatprep.subr.bf16.mxu0 0
        %327 = vmatpush1.bf16.msra.mxu0 0
        %328 = vmatprep.subr.bf16.mxu0 0
        %329 = vmatpush1.bf16.msra.mxu0 0
        %330 = vmatprep.subr.bf16.mxu0 0
        %331 = vmatpush1.bf16.msra.mxu0 0
        %332 = vmatprep.subr.bf16.mxu0 0
        %333 = vmatpush1.bf16.msra.mxu0 0
        %334 = vmatprep.subr.bf16.mxu0 0
        %335 = vmatpush1.bf16.msra.mxu0 0
        %336 = vmatprep.subr.bf16.mxu0 0
        %337 = vmatpush1.bf16.msra.mxu0 0
        %338 = vmatprep.subr.bf16.mxu0 0
        %339 = vmatpush1.bf16.msra.mxu0 0
        %340 = vmatprep.subr.bf16.mxu0 0
        %341 = vmatpush1.bf16.msra.mxu0 0
        %342 = vmatprep.subr.bf16.mxu0 0
        %343 = vmatpush1.bf16.msra.mxu0 0
        %344 = vmatprep.subr.bf16.mxu0 0
        %345 = vmatpush1.bf16.msra.mxu0 0
        %346 = vmatprep.mubr.bf16.mxu0 0
        %347 = vmatmul.mubr.bf16.gmra.mrb[0].mxu0 %v293
        %v348 = vpop.f32.mrb[0].mxu0
        %v349 = vadd.f32 0.0, %v348
        %v350 = vpop.f32.mrb[0].mxu0
        %v351 = vadd.f32 0.0, %v350
        %v352 = vpop.f32.mrb[0].mxu0
        %v353 = vadd.f32 0.0, %v352
        %v354 = vpop.f32.mrb[0].mxu0
        %v355 = vadd.f32 0.0, %v354
        %356 = vmatprep.mubr.bf16.mxu0 0
        %357 = vmatmul.mubr.bf16.gmra.mrb[0].mxu0 %v296
        %v358 = vpop.f32.mrb[0].mxu0
        %v359 = vadd.f32 0.0, %v358
        %v360 = vpop.f32.mrb[0].mxu0
        %v361 = vadd.f32 0.0, %v360
        %v362 = vpop.f32.mrb[0].mxu0
        %v363 = vadd.f32 0.0, %v362
        %v364 = vpop.f32.mrb[0].mxu0
        %v365 = vadd.f32 0.0, %v364
        %366 = vdwg.mxu0
        %367 = vmatprep.subr.bf16.mxu0 %v312
        %368 = vmatpush1.bf16.msra.mxu0 %v309
        %369 = vmatprep.subr.bf16.mxu0 0
        %370 = vmatpush1.bf16.msra.mxu0 0
        %371 = vmatprep.subr.bf16.mxu0 0
        %372 = vmatpush1.bf16.msra.mxu0 0
        %373 = vmatprep.subr.bf16.mxu0 0
        %374 = vmatpush1.bf16.msra.mxu0 0
        %375 = vmatprep.subr.bf16.mxu0 0
        %376 = vmatpush1.bf16.msra.mxu0 0
        %377 = vmatprep.subr.bf16.mxu0 0
        %378 = vmatpush1.bf16.msra.mxu0 0
        %379 = vmatprep.subr.bf16.mxu0 0
        %380 = vmatpush1.bf16.msra.mxu0 0
        %381 = vmatprep.subr.bf16.mxu0 0
        %382 = vmatpush1.bf16.msra.mxu0 0
        %383 = vmatprep.subr.bf16.mxu0 0
        %384 = vmatpush1.bf16.msra.mxu0 0
        %385 = vmatprep.subr.bf16.mxu0 0
        %386 = vmatpush1.bf16.msra.mxu0 0
        %387 = vmatprep.subr.bf16.mxu0 0
        %388 = vmatpush1.bf16.msra.mxu0 0
        %389 = vmatprep.subr.bf16.mxu0 0
        %390 = vmatpush1.bf16.msra.mxu0 0
        %391 = vmatprep.subr.bf16.mxu0 0
        %392 = vmatpush1.bf16.msra.mxu0 0
        %393 = vmatprep.subr.bf16.mxu0 0
        %394 = vmatpush1.bf16.msra.mxu0 0
        %395 = vmatprep.subr.bf16.mxu0 0
        %396 = vmatpush1.bf16.msra.mxu0 0
        %397 = vmatprep.subr.bf16.mxu0 0
        %398 = vmatpush1.bf16.msra.mxu0 0
        %399 = vmatprep.mubr.bf16.mxu0 0
        %400 = vmatmul.mubr.bf16.gmra.mrb[0].mxu0 %v293
        %v401 = vpop.f32.mrb[0].mxu0
        %v402 = vadd.f32 0.0, %v401
        %v403 = vpop.f32.mrb[0].mxu0
        %v404 = vadd.f32 0.0, %v403
        %v405 = vpop.f32.mrb[0].mxu0
        %v406 = vadd.f32 0.0, %v405
        %v407 = vpop.f32.mrb[0].mxu0
        %v408 = vadd.f32 0.0, %v407
        %409 = vmatprep.mubr.bf16.mxu0 0
        %410 = vmatmul.mubr.bf16.gmra.mrb[0].mxu0 %v296
        %v411 = vpop.f32.mrb[0].mxu0
        %v412 = vadd.f32 0.0, %v411
        %v413 = vpop.f32.mrb[0].mxu0
        %v414 = vadd.f32 0.0, %v413
        %v415 = vpop.f32.mrb[0].mxu0
        %v416 = vadd.f32 0.0, %v415
        %v417 = vpop.f32.mrb[0].mxu0
        %v418 = vadd.f32 0.0, %v417
        %419 = vdwg.mxu0
        %v421 = vsel %vm291, %v265, 0
        %v424 = vsel %vm291, %v266, 0
        %v427 = vand.u32 %v252, %v301
        %v430 = vand.u32 %v253, %v301
        %v433 = vand.u32 %v254, %v301
        %v436 = vand.u32 %v255, %v301
        %438 = vmatprep.subr.bf16.mxu0 %v430
        %439 = vmatpush1.bf16.msra.mxu0 %v427
        %440 = vmatprep.subr.bf16.mxu0 0
        %441 = vmatpush1.bf16.msra.mxu0 0
        %442 = vmatprep.subr.bf16.mxu0 0
        %443 = vmatpush1.bf16.msra.mxu0 0
        %444 = vmatprep.subr.bf16.mxu0 0
        %445 = vmatpush1.bf16.msra.mxu0 0
        %446 = vmatprep.subr.bf16.mxu0 0
        %447 = vmatpush1.bf16.msra.mxu0 0
        %448 = vmatprep.subr.bf16.mxu0 0
        %449 = vmatpush1.bf16.msra.mxu0 0
        %450 = vmatprep.subr.bf16.mxu0 0
        %451 = vmatpush1.bf16.msra.mxu0 0
        %452 = vmatprep.subr.bf16.mxu0 0
        %453 = vmatpush1.bf16.msra.mxu0 0
        %454 = vmatprep.subr.bf16.mxu0 0
        %455 = vmatpush1.bf16.msra.mxu0 0
        %456 = vmatprep.subr.bf16.mxu0 0
        %457 = vmatpush1.bf16.msra.mxu0 0
        %458 = vmatprep.subr.bf16.mxu0 0
        %459 = vmatpush1.bf16.msra.mxu0 0
        %460 = vmatprep.subr.bf16.mxu0 0
        %461 = vmatpush1.bf16.msra.mxu0 0
        %462 = vmatprep.subr.bf16.mxu0 0
        %463 = vmatpush1.bf16.msra.mxu0 0
        %464 = vmatprep.subr.bf16.mxu0 0
        %465 = vmatpush1.bf16.msra.mxu0 0
        %466 = vmatprep.subr.bf16.mxu0 0
        %467 = vmatpush1.bf16.msra.mxu0 0
        %468 = vmatprep.subr.bf16.mxu0 0
        %469 = vmatpush1.bf16.msra.mxu0 0
        %470 = vmatprep.mubr.bf16.mxu0 0
        %471 = vmatmul.mubr.bf16.gmra.mrb[0].mxu0 %v421
        %v472 = vpop.f32.mrb[0].mxu0
        %v473 = vadd.f32 %v349, %v472
        %v474 = vpop.f32.mrb[0].mxu0
        %v475 = vadd.f32 %v351, %v474
        %v476 = vpop.f32.mrb[0].mxu0
        %v477 = vadd.f32 %v353, %v476
        %v478 = vpop.f32.mrb[0].mxu0
        %v479 = vadd.f32 %v355, %v478
        %480 = vmatprep.mubr.bf16.mxu0 0
        %481 = vmatmul.mubr.bf16.gmra.mrb[0].mxu0 %v424
        %v482 = vpop.f32.mrb[0].mxu0
        %v483 = vadd.f32 %v359, %v482
        %v484 = vpop.f32.mrb[0].mxu0
        %v485 = vadd.f32 %v361, %v484
        %v486 = vpop.f32.mrb[0].mxu0
        %v487 = vadd.f32 %v363, %v486
        %v488 = vpop.f32.mrb[0].mxu0
        %v489 = vadd.f32 %v365, %v488
        %490 = vdwg.mxu0
        %491 = vmatprep.subr.bf16.mxu0 %v436
        %492 = vmatpush1.bf16.msra.mxu0 %v433
        %493 = vmatprep.subr.bf16.mxu0 0
        %494 = vmatpush1.bf16.msra.mxu0 0
        %495 = vmatprep.subr.bf16.mxu0 0
        %496 = vmatpush1.bf16.msra.mxu0 0
        %497 = vmatprep.subr.bf16.mxu0 0
        %498 = vmatpush1.bf16.msra.mxu0 0
        %499 = vmatprep.subr.bf16.mxu0 0
        %500 = vmatpush1.bf16.msra.mxu0 0
        %501 = vmatprep.subr.bf16.mxu0 0
        %502 = vmatpush1.bf16.msra.mxu0 0
        %503 = vmatprep.subr.bf16.mxu0 0
        %504 = vmatpush1.bf16.msra.mxu0 0
        %505 = vmatprep.subr.bf16.mxu0 0
        %506 = vmatpush1.bf16.msra.mxu0 0
        %507 = vmatprep.subr.bf16.mxu0 0
        %508 = vmatpush1.bf16.msra.mxu0 0
        %509 = vmatprep.subr.bf16.mxu0 0
        %510 = vmatpush1.bf16.msra.mxu0 0
        %511 = vmatprep.subr.bf16.mxu0 0
        %512 = vmatpush1.bf16.msra.mxu0 0
        %513 = vmatprep.subr.bf16.mxu0 0
        %514 = vmatpush1.bf16.msra.mxu0 0
        %515 = vmatprep.subr.bf16.mxu0 0
        %516 = vmatpush1.bf16.msra.mxu0 0
        %517 = vmatprep.subr.bf16.mxu0 0
        %518 = vmatpush1.bf16.msra.mxu0 0
        %519 = vmatprep.subr.bf16.mxu0 0
        %520 = vmatpush1.bf16.msra.mxu0 0
        %521 = vmatprep.subr.bf16.mxu0 0
        %522 = vmatpush1.bf16.msra.mxu0 0
        %523 = vmatprep.mubr.bf16.mxu0 0
        %524 = vmatmul.mubr.bf16.gmra.mrb[0].mxu0 %v421
        %v525 = vpop.f32.mrb[0].mxu0
        %v526 = vadd.f32 %v402, %v525
        %v527 = vpop.f32.mrb[0].mxu0
        %v528 = vadd.f32 %v404, %v527
        %v529 = vpop.f32.mrb[0].mxu0
        %v530 = vadd.f32 %v406, %v529
        %v531 = vpop.f32.mrb[0].mxu0
        %v532 = vadd.f32 %v408, %v531
        %533 = vmatprep.mubr.bf16.mxu0 0
        %534 = vmatmul.mubr.bf16.gmra.mrb[0].mxu0 %v424
        %v535 = vpop.f32.mrb[0].mxu0
        %v536 = vadd.f32 %v412, %v535
        %v537 = vpop.f32.mrb[0].mxu0
        %v538 = vadd.f32 %v414, %v537
        %v539 = vpop.f32.mrb[0].mxu0
        %v540 = vadd.f32 %v416, %v539
        %v541 = vpop.f32.mrb[0].mxu0
        %v542 = vadd.f32 %v418, %v541
        %543 = vdwg.mxu0
        %544 = vrot.lane.b32.xlu0 %v265, 122
        %v545 = vpop.permute.xlu0 %544
        %546 = vrot.lane.b32.xlu0 %v266, 122
        %v547 = vpop.permute.xlu0 %546
        %548 = vrot.lane.b32.xlu0 %v252, 120
        %v549 = vpop.permute.xlu0 %548
        %550 = vrot.lane.b32.xlu0 %v253, 120
        %v551 = vpop.permute.xlu0 %550
        %552 = vrot.lane.b32.xlu0 %v254, 120
        %v553 = vpop.permute.xlu0 %552
        %554 = vrot.lane.b32.xlu0 %v255, 120
        %v555 = vpop.permute.xlu0 %554
        %556 = vrot.lane.b32.xlu0 %v256, 120
        %v557 = vpop.permute.xlu0 %556
        %vm558 = vcmask 982016
        %v559 = vsel %vm558, %v549, %v551
        %v560 = vsel %vm558, %v551, %v553
        %v561 = vsel %vm558, %v553, %v555
        %v562 = vsel %vm558, %v555, %v557
        %v564 = vsel %vm291, %v545, 0
        %v567 = vsel %vm291, %v547, 0
        %v570 = vand.u32 %v559, %v301
        %v573 = vand.u32 %v560, %v301
        %v576 = vand.u32 %v561, %v301
        %v579 = vand.u32 %v562, %v301
        %581 = vmatprep.subr.bf16.mxu0 %v573
        %582 = vmatpush1.bf16.msra.mxu0 %v570
        %583 = vmatprep.subr.bf16.mxu0 0
        %584 = vmatpush1.bf16.msra.mxu0 0
        %585 = vmatprep.subr.bf16.mxu0 0
        %586 = vmatpush1.bf16.msra.mxu0 0
        %587 = vmatprep.subr.bf16.mxu0 0
        %588 = vmatpush1.bf16.msra.mxu0 0
        %589 = vmatprep.subr.bf16.mxu0 0
        %590 = vmatpush1.bf16.msra.mxu0 0
        %591 = vmatprep.subr.bf16.mxu0 0
        %592 = vmatpush1.bf16.msra.mxu0 0
        %593 = vmatprep.subr.bf16.mxu0 0
        %594 = vmatpush1.bf16.msra.mxu0 0
        %595 = vmatprep.subr.bf16.mxu0 0
        %596 = vmatpush1.bf16.msra.mxu0 0
        %597 = vmatprep.subr.bf16.mxu0 0
        %598 = vmatpush1.bf16.msra.mxu0 0
        %599 = vmatprep.subr.bf16.mxu0 0
        %600 = vmatpush1.bf16.msra.mxu0 0
        %601 = vmatprep.subr.bf16.mxu0 0
        %602 = vmatpush1.bf16.msra.mxu0 0
        %603 = vmatprep.subr.bf16.mxu0 0
        %604 = vmatpush1.bf16.msra.mxu0 0
        %605 = vmatprep.subr.bf16.mxu0 0
        %606 = vmatpush1.bf16.msra.mxu0 0
        %607 = vmatprep.subr.bf16.mxu0 0
        %608 = vmatpush1.bf16.msra.mxu0 0
        %609 = vmatprep.subr.bf16.mxu0 0
        %610 = vmatpush1.bf16.msra.mxu0 0
        %611 = vmatprep.subr.bf16.mxu0 0
        %612 = vmatpush1.bf16.msra.mxu0 0
        %613 = vmatprep.mubr.bf16.mxu0 0
        %614 = vmatmul.mubr.bf16.gmra.mrb[0].mxu0 %v564
        %v615 = vpop.f32.mrb[0].mxu0
        %v616 = vadd.f32 0.0, %v615
        %v617 = vpop.f32.mrb[0].mxu0
        %v618 = vadd.f32 0.0, %v617
        %v619 = vpop.f32.mrb[0].mxu0
        %v620 = vadd.f32 0.0, %v619
        %v621 = vpop.f32.mrb[0].mxu0
        %v622 = vadd.f32 0.0, %v621
        %623 = vmatprep.mubr.bf16.mxu0 0
        %624 = vmatmul.mubr.bf16.gmra.mrb[0].mxu0 %v567
        %v625 = vpop.f32.mrb[0].mxu0
        %v626 = vadd.f32 0.0, %v625
        %v627 = vpop.f32.mrb[0].mxu0
        %v628 = vadd.f32 0.0, %v627
        %v629 = vpop.f32.mrb[0].mxu0
        %v630 = vadd.f32 0.0, %v629
        %v631 = vpop.f32.mrb[0].mxu0
        %v632 = vadd.f32 0.0, %v631
        %633 = vdwg.mxu0
        %634 = vmatprep.subr.bf16.mxu0 %v579
        %635 = vmatpush1.bf16.msra.mxu0 %v576
        %636 = vmatprep.subr.bf16.mxu0 0
        %637 = vmatpush1.bf16.msra.mxu0 0
        %638 = vmatprep.subr.bf16.mxu0 0
        %639 = vmatpush1.bf16.msra.mxu0 0
        %640 = vmatprep.subr.bf16.mxu0 0
        %641 = vmatpush1.bf16.msra.mxu0 0
        %642 = vmatprep.subr.bf16.mxu0 0
        %643 = vmatpush1.bf16.msra.mxu0 0
        %644 = vmatprep.subr.bf16.mxu0 0
        %645 = vmatpush1.bf16.msra.mxu0 0
        %646 = vmatprep.subr.bf16.mxu0 0
        %647 = vmatpush1.bf16.msra.mxu0 0
        %648 = vmatprep.subr.bf16.mxu0 0
        %649 = vmatpush1.bf16.msra.mxu0 0
        %650 = vmatprep.subr.bf16.mxu0 0
        %651 = vmatpush1.bf16.msra.mxu0 0
        %652 = vmatprep.subr.bf16.mxu0 0
        %653 = vmatpush1.bf16.msra.mxu0 0
        %654 = vmatprep.subr.bf16.mxu0 0
        %655 = vmatpush1.bf16.msra.mxu0 0
        %656 = vmatprep.subr.bf16.mxu0 0
        %657 = vmatpush1.bf16.msra.mxu0 0
        %658 = vmatprep.subr.bf16.mxu0 0
        %659 = vmatpush1.bf16.msra.mxu0 0
        %660 = vmatprep.subr.bf16.mxu0 0
        %661 = vmatpush1.bf16.msra.mxu0 0
        %662 = vmatprep.subr.bf16.mxu0 0
        %663 = vmatpush1.bf16.msra.mxu0 0
        %664 = vmatprep.subr.bf16.mxu0 0
        %665 = vmatpush1.bf16.msra.mxu0 0
        %666 = vmatprep.mubr.bf16.mxu0 0
        %667 = vmatmul.mubr.bf16.gmra.mrb[0].mxu0 %v564
        %v668 = vpop.f32.mrb[0].mxu0
        %v669 = vadd.f32 0.0, %v668
        %v670 = vpop.f32.mrb[0].mxu0
        %v671 = vadd.f32 0.0, %v670
        %v672 = vpop.f32.mrb[0].mxu0
        %v673 = vadd.f32 0.0, %v672
        %v674 = vpop.f32.mrb[0].mxu0
        %v675 = vadd.f32 0.0, %v674
        %676 = vmatprep.mubr.bf16.mxu0 0
        %677 = vmatmul.mubr.bf16.gmra.mrb[0].mxu0 %v567
        %v678 = vpop.f32.mrb[0].mxu0
        %v679 = vadd.f32 0.0, %v678
        %v680 = vpop.f32.mrb[0].mxu0
        %v681 = vadd.f32 0.0, %v680
        %v682 = vpop.f32.mrb[0].mxu0
        %v683 = vadd.f32 0.0, %v682
        %v684 = vpop.f32.mrb[0].mxu0
        %v685 = vadd.f32 0.0, %v684
        %686 = vdwg.mxu0
        %v687 = vadd.f32 %v473, %v616
        %v688 = vadd.f32 %v475, %v618
        %v689 = vadd.f32 %v526, %v669
        %v690 = vadd.f32 %v528, %v671
        %v691 = vadd.f32 %v477, %v620
        %v692 = vadd.f32 %v479, %v622
        %v693 = vadd.f32 %v530, %v673
        %v694 = vadd.f32 %v532, %v675
        %v695 = vadd.f32 %v483, %v626
        %v696 = vadd.f32 %v485, %v628
        %v697 = vadd.f32 %v536, %v679
        %v698 = vadd.f32 %v538, %v681
        %v699 = vadd.f32 %v487, %v630
        %v700 = vadd.f32 %v489, %v632
        %v701 = vadd.f32 %v540, %v683
        %v702 = vadd.f32 %v542, %v685
        %703 = vrot.lane.b32.xlu0 %v265, 119
        %v704 = vpop.permute.xlu0 %703
        %705 = vrot.lane.b32.xlu0 %v266, 119
        %v706 = vpop.permute.xlu0 %705
        %707 = vrot.lane.b32.xlu0 %v252, 116
        %v708 = vpop.permute.xlu0 %707
        %709 = vrot.lane.b32.xlu0 %v253, 116
        %v710 = vpop.permute.xlu0 %709
        %711 = vrot.lane.b32.xlu0 %v254, 116
        %v712 = vpop.permute.xlu0 %711
        %713 = vrot.lane.b32.xlu0 %v255, 116
        %v714 = vpop.permute.xlu0 %713
        %715 = vrot.lane.b32.xlu0 %v256, 116
        %v716 = vpop.permute.xlu0 %715
        %vm717 = vcmask 949248
        %v718 = vsel %vm717, %v708, %v710
        %v719 = vsel %vm717, %v710, %v712
        %v720 = vsel %vm717, %v712, %v714
        %v721 = vsel %vm717, %v714, %v716
        %v723 = vsel %vm291, %v704, 0
        %v726 = vsel %vm291, %v706, 0
        %v729 = vand.u32 %v718, %v301
        %v732 = vand.u32 %v719, %v301
        %v735 = vand.u32 %v720, %v301
        %v738 = vand.u32 %v721, %v301
        %740 = vmatprep.subr.bf16.mxu0 %v732
        %741 = vmatpush1.bf16.msra.mxu0 %v729
        %742 = vmatprep.subr.bf16.mxu0 0
        %743 = vmatpush1.bf16.msra.mxu0 0
        %744 = vmatprep.subr.bf16.mxu0 0
        %745 = vmatpush1.bf16.msra.mxu0 0
        %746 = vmatprep.subr.bf16.mxu0 0
        %747 = vmatpush1.bf16.msra.mxu0 0
        %748 = vmatprep.subr.bf16.mxu0 0
        %749 = vmatpush1.bf16.msra.mxu0 0
        %750 = vmatprep.subr.bf16.mxu0 0
        %751 = vmatpush1.bf16.msra.mxu0 0
        %752 = vmatprep.subr.bf16.mxu0 0
        %753 = vmatpush1.bf16.msra.mxu0 0
        %754 = vmatprep.subr.bf16.mxu0 0
        %755 = vmatpush1.bf16.msra.mxu0 0
        %756 = vmatprep.subr.bf16.mxu0 0
        %757 = vmatpush1.bf16.msra.mxu0 0
        %758 = vmatprep.subr.bf16.mxu0 0
        %759 = vmatpush1.bf16.msra.mxu0 0
        %760 = vmatprep.subr.bf16.mxu0 0
        %761 = vmatpush1.bf16.msra.mxu0 0
        %762 = vmatprep.subr.bf16.mxu0 0
        %763 = vmatpush1.bf16.msra.mxu0 0
        %764 = vmatprep.subr.bf16.mxu0 0
        %765 = vmatpush1.bf16.msra.mxu0 0
        %766 = vmatprep.subr.bf16.mxu0 0
        %767 = vmatpush1.bf16.msra.mxu0 0
        %768 = vmatprep.subr.bf16.mxu0 0
        %769 = vmatpush1.bf16.msra.mxu0 0
        %770 = vmatprep.subr.bf16.mxu0 0
        %771 = vmatpush1.bf16.msra.mxu0 0
        %772 = vmatprep.mubr.bf16.mxu0 0
        %773 = vmatmul.mubr.bf16.gmra.mrb[0].mxu0 %v723
        %v774 = vpop.f32.mrb[0].mxu0
        %v775 = vadd.f32 0.0, %v774
        %v776 = vpop.f32.mrb[0].mxu0
        %v777 = vadd.f32 0.0, %v776
        %v778 = vpop.f32.mrb[0].mxu0
        %v779 = vadd.f32 0.0, %v778
        %v780 = vpop.f32.mrb[0].mxu0
        %v781 = vadd.f32 0.0, %v780
        %782 = vmatprep.mubr.bf16.mxu0 0
        %783 = vmatmul.mubr.bf16.gmra.mrb[0].mxu0 %v726
        %v784 = vpop.f32.mrb[0].mxu0
        %v785 = vadd.f32 0.0, %v784
        %v786 = vpop.f32.mrb[0].mxu0
        %v787 = vadd.f32 0.0, %v786
        %v788 = vpop.f32.mrb[0].mxu0
        %v789 = vadd.f32 0.0, %v788
        %v790 = vpop.f32.mrb[0].mxu0
        %v791 = vadd.f32 0.0, %v790
        %792 = vdwg.mxu0
        %793 = vmatprep.subr.bf16.mxu0 %v738
        %794 = vmatpush1.bf16.msra.mxu0 %v735
        %795 = vmatprep.subr.bf16.mxu0 0
        %796 = vmatpush1.bf16.msra.mxu0 0
        %797 = vmatprep.subr.bf16.mxu0 0
        %798 = vmatpush1.bf16.msra.mxu0 0
        %799 = vmatprep.subr.bf16.mxu0 0
        %800 = vmatpush1.bf16.msra.mxu0 0
        %801 = vmatprep.subr.bf16.mxu0 0
        %802 = vmatpush1.bf16.msra.mxu0 0
        %803 = vmatprep.subr.bf16.mxu0 0
        %804 = vmatpush1.bf16.msra.mxu0 0
        %805 = vmatprep.subr.bf16.mxu0 0
        %806 = vmatpush1.bf16.msra.mxu0 0
        %807 = vmatprep.subr.bf16.mxu0 0
        %808 = vmatpush1.bf16.msra.mxu0 0
        %809 = vmatprep.subr.bf16.mxu0 0
        %810 = vmatpush1.bf16.msra.mxu0 0
        %811 = vmatprep.subr.bf16.mxu0 0
        %812 = vmatpush1.bf16.msra.mxu0 0
        %813 = vmatprep.subr.bf16.mxu0 0
        %814 = vmatpush1.bf16.msra.mxu0 0
        %815 = vmatprep.subr.bf16.mxu0 0
        %816 = vmatpush1.bf16.msra.mxu0 0
        %817 = vmatprep.subr.bf16.mxu0 0
        %818 = vmatpush1.bf16.msra.mxu0 0
        %819 = vmatprep.subr.bf16.mxu0 0
        %820 = vmatpush1.bf16.msra.mxu0 0
        %821 = vmatprep.subr.bf16.mxu0 0
        %822 = vmatpush1.bf16.msra.mxu0 0
        %823 = vmatprep.subr.bf16.mxu0 0
        %824 = vmatpush1.bf16.msra.mxu0 0
        %825 = vmatprep.mubr.bf16.mxu0 0
        %826 = vmatmul.mubr.bf16.gmra.mrb[0].mxu0 %v723
        %v827 = vpop.f32.mrb[0].mxu0
        %v828 = vadd.f32 0.0, %v827
        %v829 = vpop.f32.mrb[0].mxu0
        %v830 = vadd.f32 0.0, %v829
        %v831 = vpop.f32.mrb[0].mxu0
        %v832 = vadd.f32 0.0, %v831
        %v833 = vpop.f32.mrb[0].mxu0
        %v834 = vadd.f32 0.0, %v833
        %835 = vmatprep.mubr.bf16.mxu0 0
        %836 = vmatmul.mubr.bf16.gmra.mrb[0].mxu0 %v726
        %v837 = vpop.f32.mrb[0].mxu0
        %v838 = vadd.f32 0.0, %v837
        %v839 = vpop.f32.mrb[0].mxu0
        %v840 = vadd.f32 0.0, %v839
        %v841 = vpop.f32.mrb[0].mxu0
        %v842 = vadd.f32 0.0, %v841
        %v843 = vpop.f32.mrb[0].mxu0
        %v844 = vadd.f32 0.0, %v843
        %845 = vdwg.mxu0
        %v846 = vadd.f32 %v687, %v775
        %v847 = vadd.f32 %v688, %v777
        %v848 = vadd.f32 %v689, %v828
        %v849 = vadd.f32 %v690, %v830
        %v850 = vadd.f32 %v691, %v779
        %v851 = vadd.f32 %v692, %v781
        %v852 = vadd.f32 %v693, %v832
        %v853 = vadd.f32 %v694, %v834
        %v854 = vadd.f32 %v695, %v785
        %v855 = vadd.f32 %v696, %v787
        %v856 = vadd.f32 %v697, %v838
        %v857 = vadd.f32 %v698, %v840
        %v858 = vadd.f32 %v699, %v789
        %v859 = vadd.f32 %v700, %v791
        %v860 = vadd.f32 %v701, %v842
        %v861 = vadd.f32 %v702, %v844
        %862 = vrot.lane.b32.xlu0 %v265, 116
        %v863 = vpop.permute.xlu0 %862
        %864 = vrot.lane.b32.xlu0 %v266, 116
        %v865 = vpop.permute.xlu0 %864
        %866 = vrot.lane.b32.xlu0 %v252, 112
        %v867 = vpop.permute.xlu0 %866
        %868 = vrot.lane.b32.xlu0 %v253, 112
        %v869 = vpop.permute.xlu0 %868
        %870 = vrot.lane.b32.xlu0 %v254, 112
        %v871 = vpop.permute.xlu0 %870
        %872 = vrot.lane.b32.xlu0 %v255, 112
        %v873 = vpop.permute.xlu0 %872
        %874 = vrot.lane.b32.xlu0 %v256, 112
        %v875 = vpop.permute.xlu0 %874
        %vm876 = vcmask 916480
        %v877 = vsel %vm876, %v867, %v869
        %v878 = vsel %vm876, %v869, %v871
        %v879 = vsel %vm876, %v871, %v873
        %v880 = vsel %vm876, %v873, %v875
        %v882 = vsel %vm291, %v863, 0
        %v885 = vsel %vm291, %v865, 0
        %v888 = vand.u32 %v877, %v301
        %v891 = vand.u32 %v878, %v301
        %v894 = vand.u32 %v879, %v301
        %v897 = vand.u32 %v880, %v301
        %899 = vmatprep.subr.bf16.mxu0 %v891
        %900 = vmatpush1.bf16.msra.mxu0 %v888
        %901 = vmatprep.subr.bf16.mxu0 0
        %902 = vmatpush1.bf16.msra.mxu0 0
        %903 = vmatprep.subr.bf16.mxu0 0
        %904 = vmatpush1.bf16.msra.mxu0 0
        %905 = vmatprep.subr.bf16.mxu0 0
        %906 = vmatpush1.bf16.msra.mxu0 0
        %907 = vmatprep.subr.bf16.mxu0 0
        %908 = vmatpush1.bf16.msra.mxu0 0
        %909 = vmatprep.subr.bf16.mxu0 0
        %910 = vmatpush1.bf16.msra.mxu0 0
        %911 = vmatprep.subr.bf16.mxu0 0
        %912 = vmatpush1.bf16.msra.mxu0 0
        %913 = vmatprep.subr.bf16.mxu0 0
        %914 = vmatpush1.bf16.msra.mxu0 0
        %915 = vmatprep.subr.bf16.mxu0 0
        %916 = vmatpush1.bf16.msra.mxu0 0
        %917 = vmatprep.subr.bf16.mxu0 0
        %918 = vmatpush1.bf16.msra.mxu0 0
        %919 = vmatprep.subr.bf16.mxu0 0
        %920 = vmatpush1.bf16.msra.mxu0 0
        %921 = vmatprep.subr.bf16.mxu0 0
        %922 = vmatpush1.bf16.msra.mxu0 0
        %923 = vmatprep.subr.bf16.mxu0 0
        %924 = vmatpush1.bf16.msra.mxu0 0
        %925 = vmatprep.subr.bf16.mxu0 0
        %926 = vmatpush1.bf16.msra.mxu0 0
        %927 = vmatprep.subr.bf16.mxu0 0
        %928 = vmatpush1.bf16.msra.mxu0 0
        %929 = vmatprep.subr.bf16.mxu0 0
        %930 = vmatpush1.bf16.msra.mxu0 0
        %931 = vmatprep.mubr.bf16.mxu0 0
        %932 = vmatmul.mubr.bf16.gmra.mrb[0].mxu0 %v882
        %v933 = vpop.f32.mrb[0].mxu0
        %v934 = vadd.f32 0.0, %v933
        %v935 = vpop.f32.mrb[0].mxu0
        %v936 = vadd.f32 0.0, %v935
        %v937 = vpop.f32.mrb[0].mxu0
        %v938 = vadd.f32 0.0, %v937
        %v939 = vpop.f32.mrb[0].mxu0
        %v940 = vadd.f32 0.0, %v939
        %941 = vmatprep.mubr.bf16.mxu0 0
        %942 = vmatmul.mubr.bf16.gmra.mrb[0].mxu0 %v885
        %v943 = vpop.f32.mrb[0].mxu0
        %v944 = vadd.f32 0.0, %v943
        %v945 = vpop.f32.mrb[0].mxu0
        %v946 = vadd.f32 0.0, %v945
        %v947 = vpop.f32.mrb[0].mxu0
        %v948 = vadd.f32 0.0, %v947
        %v949 = vpop.f32.mrb[0].mxu0
        %v950 = vadd.f32 0.0, %v949
        %951 = vdwg.mxu0
        %952 = vmatprep.subr.bf16.mxu0 %v897
        %953 = vmatpush1.bf16.msra.mxu0 %v894
        %954 = vmatprep.subr.bf16.mxu0 0
        %955 = vmatpush1.bf16.msra.mxu0 0
        %956 = vmatprep.subr.bf16.mxu0 0
        %957 = vmatpush1.bf16.msra.mxu0 0
        %958 = vmatprep.subr.bf16.mxu0 0
        %959 = vmatpush1.bf16.msra.mxu0 0
        %960 = vmatprep.subr.bf16.mxu0 0
        %961 = vmatpush1.bf16.msra.mxu0 0
        %962 = vmatprep.subr.bf16.mxu0 0
        %963 = vmatpush1.bf16.msra.mxu0 0
        %964 = vmatprep.subr.bf16.mxu0 0
        %965 = vmatpush1.bf16.msra.mxu0 0
        %966 = vmatprep.subr.bf16.mxu0 0
        %967 = vmatpush1.bf16.msra.mxu0 0
        %968 = vmatprep.subr.bf16.mxu0 0
        %969 = vmatpush1.bf16.msra.mxu0 0
        %970 = vmatprep.subr.bf16.mxu0 0
        %971 = vmatpush1.bf16.msra.mxu0 0
        %972 = vmatprep.subr.bf16.mxu0 0
        %973 = vmatpush1.bf16.msra.mxu0 0
        %974 = vmatprep.subr.bf16.mxu0 0
        %975 = vmatpush1.bf16.msra.mxu0 0
        %976 = vmatprep.subr.bf16.mxu0 0
        %977 = vmatpush1.bf16.msra.mxu0 0
        %978 = vmatprep.subr.bf16.mxu0 0
        %979 = vmatpush1.bf16.msra.mxu0 0
        %980 = vmatprep.subr.bf16.mxu0 0
        %981 = vmatpush1.bf16.msra.mxu0 0
        %982 = vmatprep.subr.bf16.mxu0 0
        %983 = vmatpush1.bf16.msra.mxu0 0
        %984 = vmatprep.mubr.bf16.mxu0 0
        %985 = vmatmul.mubr.bf16.gmra.mrb[0].mxu0 %v882
        %v986 = vpop.f32.mrb[0].mxu0
        %v987 = vadd.f32 0.0, %v986
        %v988 = vpop.f32.mrb[0].mxu0
        %v989 = vadd.f32 0.0, %v988
        %v990 = vpop.f32.mrb[0].mxu0
        %v991 = vadd.f32 0.0, %v990
        %v992 = vpop.f32.mrb[0].mxu0
        %v993 = vadd.f32 0.0, %v992
        %994 = vmatprep.mubr.bf16.mxu0 0
        %995 = vmatmul.mubr.bf16.gmra.mrb[0].mxu0 %v885
        %v996 = vpop.f32.mrb[0].mxu0
        %v997 = vadd.f32 0.0, %v996
        %v998 = vpop.f32.mrb[0].mxu0
        %v999 = vadd.f32 0.0, %v998
        %v1000 = vpop.f32.mrb[0].mxu0
        %v1001 = vadd.f32 0.0, %v1000
        %v1002 = vpop.f32.mrb[0].mxu0
        %v1003 = vadd.f32 0.0, %v1002
        %1004 = vdwg.mxu0
        %v1005 = vadd.f32 %v846, %v934
        %v1006 = vadd.f32 %v847, %v936
        %v1007 = vadd.f32 %v848, %v987
        %v1008 = vadd.f32 %v849, %v989
        %v1009 = vadd.f32 %v850, %v938
        %v1010 = vadd.f32 %v851, %v940
        %v1011 = vadd.f32 %v852, %v991
        %v1012 = vadd.f32 %v853, %v993
        %v1013 = vadd.f32 %v854, %v944
        %v1014 = vadd.f32 %v855, %v946
        %v1015 = vadd.f32 %v856, %v997
        %v1016 = vadd.f32 %v857, %v999
        %v1017 = vadd.f32 %v858, %v948
        %v1018 = vadd.f32 %v859, %v950
        %v1019 = vadd.f32 %v860, %v1001
        %v1020 = vadd.f32 %v861, %v1003
        %v1021 = vld [vmem:[%s2] sm:$0xff]
        %v1022 = vld [vmem:[%s2 + $0x8] sm:$0xff]
        %v1023 = vld [vmem:[%s2 + $0x10] sm:$0xff]
        %v1024 = vld [vmem:[%s2 + $0x18] sm:$0xff]
        %1026 = vset.pattern.permute.xlu0 0
        %1027 = vperm.xlu0 %1026, %v1021
        %v1028 = vpop.permute.xlu0 %1027
        %1031 = vset.pattern.permute.xlu0 0
        %1032 = vperm.xlu0 %1031, %v1022
        %v1033 = vpop.permute.xlu0 %1032
        %1036 = vset.pattern.permute.xlu0 0
        %1037 = vperm.xlu0 %1036, %v1023
        %v1038 = vpop.permute.xlu0 %1037
        %1041 = vset.pattern.permute.xlu0 0
        %1042 = vperm.xlu0 %1041, %v1024
        %v1043 = vpop.permute.xlu0 %1042
        %v1045 = vadd.f32 %v1005, %v1028
        %v1046 = vadd.f32 %v1006, %v1028
        %v1047 = vadd.f32 %v1007, %v1028
        %v1048 = vadd.f32 %v1008, %v1028
        %v1049 = vadd.f32 %v1009, %v1033
        %v1050 = vadd.f32 %v1010, %v1033
        %v1051 = vadd.f32 %v1011, %v1033
        %v1052 = vadd.f32 %v1012, %v1033
        %v1053 = vadd.f32 %v1013, %v1038
        %v1054 = vadd.f32 %v1014, %v1038
        %v1055 = vadd.f32 %v1015, %v1038
        %v1056 = vadd.f32 %v1016, %v1038
        %v1057 = vadd.f32 %v1017, %v1043
        %v1058 = vadd.f32 %v1018, %v1043
        %v1059 = vadd.f32 %v1019, %v1043
        %v1060 = vadd.f32 %v1020, %v1043
        %1061 = vst [vmem:[%s185] sm:$0xff] %v1045
        %1062 = vst [vmem:[%s185 + $0x8] sm:$0xff] %v1046
        %1063 = vst [vmem:[%s185 + $0x10] sm:$0xff] %v1047
        %1064 = vst [vmem:[%s185 + $0x18] sm:$0xff] %v1048
        %1065 = vst [vmem:[%s185 + $0x20] sm:$0xff] %v1049
        %1066 = vst [vmem:[%s185 + $0x28] sm:$0xff] %v1050
        %1067 = vst [vmem:[%s185 + $0x30] sm:$0xff] %v1051
        %1068 = vst [vmem:[%s185 + $0x38] sm:$0xff] %v1052
        %1069 = vst [vmem:[%s185 + $0x40] sm:$0xff] %v1053
        %1070 = vst [vmem:[%s185 + $0x48] sm:$0xff] %v1054
        %1071 = vst [vmem:[%s185 + $0x50] sm:$0xff] %v1055
        %1072 = vst [vmem:[%s185 + $0x58] sm:$0xff] %v1056
        %1073 = vst [vmem:[%s185 + $0x60] sm:$0xff] %v1057
        %1074 = vst [vmem:[%s185 + $0x68] sm:$0xff] %v1058
        %1075 = vst [vmem:[%s185 + $0x70] sm:$0xff] %v1059
        %1076 = vst [vmem:[%s185 + $0x78] sm:$0xff] %v1060
        %v1077 = vpack.c.bf16 %v1049, %v1045
        %v1078 = vpack.c.bf16 %v1050, %v1046
        %v1079 = vpack.c.bf16 %v1051, %v1047
        %v1080 = vpack.c.bf16 %v1052, %v1048
        %v1081 = vpack.c.bf16 %v1057, %v1053
        %v1082 = vpack.c.bf16 %v1058, %v1054
        %v1083 = vpack.c.bf16 %v1059, %v1055
        %v1084 = vpack.c.bf16 %v1060, %v1056
        %1093 = vrot.lane.b32.xlu0 %v1077, 8
        %v1094 = vpop.permute.xlu0 %1093
        %1095 = vrot.lane.b32.xlu0 %v1078, 8
        %v1096 = vpop.permute.xlu0 %1095
        %1097 = vrot.lane.b32.xlu0 %v1079, 8
        %v1098 = vpop.permute.xlu0 %1097
        %1099 = vrot.lane.b32.xlu0 %v1080, 8
        %v1100 = vpop.permute.xlu0 %1099
        %1101 = vrot.lane.b32.xlu0 %v1081, 8
        %v1102 = vpop.permute.xlu0 %1101
        %1103 = vrot.lane.b32.xlu0 %v1082, 8
        %v1104 = vpop.permute.xlu0 %1103
        %1105 = vrot.lane.b32.xlu0 %v1083, 8
        %v1106 = vpop.permute.xlu0 %1105
        %1107 = vrot.lane.b32.xlu0 %v1084, 8
        %v1108 = vpop.permute.xlu0 %1107
        %v1109 = vsel %vm217, %v1094, %v1096
        %v1110 = vsel %vm217, %v1096, %v1098
        %v1111 = vsel %vm217, %v1098, %v1100
        %v1112 = vsel %vm217, %v1102, %v1104
        %v1113 = vsel %vm217, %v1104, %v1106
        %v1114 = vsel %vm217, %v1106, %v1108
        %vm1125 = vcmask 1047616
        %1126 = vst.msk [vmem:[#allocation2] sm:$0xff] %vm1125, %v1094
        %1127 = vst [vmem:[#allocation2 + $0x8] sm:$0xff] %v1109
        %1128 = vst [vmem:[#allocation2 + $0x10] sm:$0xff] %v1110
        %1129 = vst [vmem:[#allocation2 + $0x18] sm:$0xff] %v1111
        %1130 = vst.msk [vmem:[#allocation2 + $0x20] sm:$0xff] %vm187, %v1100
        %1131 = vst.msk [vmem:[#allocation2 + $0x28] sm:$0xff] %vm1125, %v1102
        %1132 = vst [vmem:[#allocation2 + $0x30] sm:$0xff] %v1112
        %1133 = vst [vmem:[#allocation2 + $0x38] sm:$0xff] %v1113
        %1134 = vst [vmem:[#allocation2 + $0x40] sm:$0xff] %v1114
        %1135 = vst.msk [vmem:[#allocation2 + $0x48] sm:$0xff] %vm187, %v1108
        %s1136 = scalar_lea.vmem [#allocation3], 16
        %v1137 = vld [vmem:[%s1136] sm:$0xf]
        %v1138 = vld [vmem:[%s1136 + $0x4] sm:$0xf]
        %v1139 = vld [vmem:[%s1136 + $0x8] sm:$0xf]
        %v1140 = vld [vmem:[%s1136 + $0xc] sm:$0xf]
        %v1141 = vld [vmem:[#allocation2] sm:$0xff]
        %v1142 = vld [vmem:[#allocation2 + $0x8] sm:$0xff]
        %v1143 = vld [vmem:[#allocation2 + $0x10] sm:$0xff]
        %v1144 = vld [vmem:[#allocation2 + $0x18] sm:$0xff]
        %v1145 = vld [vmem:[#allocation2 + $0x20] sm:$0xff]
        %v1146 = vld [vmem:[#allocation2 + $0x28] sm:$0xff]
        %v1147 = vld [vmem:[#allocation2 + $0x30] sm:$0xff]
        %v1148 = vld [vmem:[#allocation2 + $0x38] sm:$0xff]
        %v1149 = vld [vmem:[#allocation2 + $0x40] sm:$0xff]
        %v1150 = vld [vmem:[#allocation2 + $0x48] sm:$0xff]
        %v1155 = vunpack.c.l.b16 %v1137
        %v1156 = vunpack.c.l.b16 %v1138
        %v1157 = vunpack.c.l.b16 %v1139
        %v1158 = vunpack.c.l.b16 %v1140
        %v1159 = vpack.c.b16 %v1156, %v1155
        %v1160 = vpack.c.b16 %v1158, %v1157
        %1161 = vrot.lane.b32.xlu0 %v1159, 96
        %v1162 = vpop.permute.xlu0 %1161
        %1163 = vrot.lane.b32.xlu0 %v1160, 96
        %v1164 = vpop.permute.xlu0 %1163
        %1175 = vrot.lane.b32.xlu0 %v1141, 120
        %v1176 = vpop.permute.xlu0 %1175
        %1177 = vrot.lane.b32.xlu0 %v1142, 120
        %v1178 = vpop.permute.xlu0 %1177
        %1179 = vrot.lane.b32.xlu0 %v1143, 120
        %v1180 = vpop.permute.xlu0 %1179
        %1181 = vrot.lane.b32.xlu0 %v1144, 120
        %v1182 = vpop.permute.xlu0 %1181
        %1183 = vrot.lane.b32.xlu0 %v1145, 120
        %v1184 = vpop.permute.xlu0 %1183
        %1185 = vrot.lane.b32.xlu0 %v1146, 120
        %v1186 = vpop.permute.xlu0 %1185
        %1187 = vrot.lane.b32.xlu0 %v1147, 120
        %v1188 = vpop.permute.xlu0 %1187
        %1189 = vrot.lane.b32.xlu0 %v1148, 120
        %v1190 = vpop.permute.xlu0 %1189
        %1191 = vrot.lane.b32.xlu0 %v1149, 120
        %v1192 = vpop.permute.xlu0 %1191
        %1193 = vrot.lane.b32.xlu0 %v1150, 120
        %v1194 = vpop.permute.xlu0 %1193
        %v1195 = vsel %vm558, %v1176, %v1178
        %v1196 = vsel %vm558, %v1178, %v1180
        %v1197 = vsel %vm558, %v1180, %v1182
        %v1198 = vsel %vm558, %v1182, %v1184
        %v1199 = vsel %vm558, %v1186, %v1188
        %v1200 = vsel %vm558, %v1188, %v1190
        %v1201 = vsel %vm558, %v1190, %v1192
        %v1202 = vsel %vm558, %v1192, %v1194
        %vm1211 = vcmask 261120
        %v1213 = vsel %vm1211, %v1162, 0
        %v1216 = vsel %vm1211, %v1164, 0
        %1218 = vmatprep.subr.bf16.mxu0 %v1196
        %1219 = vmatpush1.bf16.msra.mxu0 %v1195
        %1220 = vmatprep.subr.bf16.mxu0 %v1200
        %1221 = vmatpush1.bf16.msra.mxu0 %v1199
        %1222 = vmatprep.subr.bf16.mxu0 0
        %1223 = vmatpush1.bf16.msra.mxu0 0
        %1224 = vmatprep.subr.bf16.mxu0 0
        %1225 = vmatpush1.bf16.msra.mxu0 0
        %1226 = vmatprep.subr.bf16.mxu0 0
        %1227 = vmatpush1.bf16.msra.mxu0 0
        %1228 = vmatprep.subr.bf16.mxu0 0
        %1229 = vmatpush1.bf16.msra.mxu0 0
        %1230 = vmatprep.subr.bf16.mxu0 0
        %1231 = vmatpush1.bf16.msra.mxu0 0
        %1232 = vmatprep.subr.bf16.mxu0 0
        %1233 = vmatpush1.bf16.msra.mxu0 0
        %1234 = vmatprep.subr.bf16.mxu0 0
        %1235 = vmatpush1.bf16.msra.mxu0 0
        %1236 = vmatprep.subr.bf16.mxu0 0
        %1237 = vmatpush1.bf16.msra.mxu0 0
        %1238 = vmatprep.subr.bf16.mxu0 0
        %1239 = vmatpush1.bf16.msra.mxu0 0
        %1240 = vmatprep.subr.bf16.mxu0 0
        %1241 = vmatpush1.bf16.msra.mxu0 0
        %1242 = vmatprep.subr.bf16.mxu0 0
        %1243 = vmatpush1.bf16.msra.mxu0 0
        %1244 = vmatprep.subr.bf16.mxu0 0
        %1245 = vmatpush1.bf16.msra.mxu0 0
        %1246 = vmatprep.subr.bf16.mxu0 0
        %1247 = vmatpush1.bf16.msra.mxu0 0
        %1248 = vmatprep.subr.bf16.mxu0 0
        %1249 = vmatpush1.bf16.msra.mxu0 0
        %1250 = vmatprep.mubr.bf16.mxu0 0
        %1251 = vmatmul.mubr.bf16.gmra.mrb[0].mxu0 %v1213
        %v1252 = vpop.f32.mrb[0].mxu0
        %v1253 = vadd.f32 0.0, %v1252
        %v1254 = vpop.f32.mrb[0].mxu0
        %v1255 = vadd.f32 0.0, %v1254
        %v1256 = vpop.f32.mrb[0].mxu0
        %v1257 = vadd.f32 0.0, %v1256
        %v1258 = vpop.f32.mrb[0].mxu0
        %v1259 = vadd.f32 0.0, %v1258
        %1260 = vmatprep.mubr.bf16.mxu0 0
        %1261 = vmatmul.mubr.bf16.gmra.mrb[0].mxu0 %v1216
        %v1262 = vpop.f32.mrb[0].mxu0
        %v1263 = vadd.f32 0.0, %v1262
        %v1264 = vpop.f32.mrb[0].mxu0
        %v1265 = vadd.f32 0.0, %v1264
        %v1266 = vpop.f32.mrb[0].mxu0
        %v1267 = vadd.f32 0.0, %v1266
        %v1268 = vpop.f32.mrb[0].mxu0
        %v1269 = vadd.f32 0.0, %v1268
        %1270 = vdwg.mxu0
        %1271 = vmatprep.subr.bf16.mxu0 %v1198
        %1272 = vmatpush1.bf16.msra.mxu0 %v1197
        %1273 = vmatprep.subr.bf16.mxu0 %v1202
        %1274 = vmatpush1.bf16.msra.mxu0 %v1201
        %1275 = vmatprep.subr.bf16.mxu0 0
        %1276 = vmatpush1.bf16.msra.mxu0 0
        %1277 = vmatprep.subr.bf16.mxu0 0
        %1278 = vmatpush1.bf16.msra.mxu0 0
        %1279 = vmatprep.subr.bf16.mxu0 0
        %1280 = vmatpush1.bf16.msra.mxu0 0
        %1281 = vmatprep.subr.bf16.mxu0 0
        %1282 = vmatpush1.bf16.msra.mxu0 0
        %1283 = vmatprep.subr.bf16.mxu0 0
        %1284 = vmatpush1.bf16.msra.mxu0 0
        %1285 = vmatprep.subr.bf16.mxu0 0
        %1286 = vmatpush1.bf16.msra.mxu0 0
        %1287 = vmatprep.subr.bf16.mxu0 0
        %1288 = vmatpush1.bf16.msra.mxu0 0
        %1289 = vmatprep.subr.bf16.mxu0 0
        %1290 = vmatpush1.bf16.msra.mxu0 0
        %1291 = vmatprep.subr.bf16.mxu0 0
        %1292 = vmatpush1.bf16.msra.mxu0 0
        %1293 = vmatprep.subr.bf16.mxu0 0
        %1294 = vmatpush1.bf16.msra.mxu0 0
        %1295 = vmatprep.subr.bf16.mxu0 0
        %1296 = vmatpush1.bf16.msra.mxu0 0
        %1297 = vmatprep.subr.bf16.mxu0 0
        %1298 = vmatpush1.bf16.msra.mxu0 0
        %1299 = vmatprep.subr.bf16.mxu0 0
        %1300 = vmatpush1.bf16.msra.mxu0 0
        %1301 = vmatprep.subr.bf16.mxu0 0
        %1302 = vmatpush1.bf16.msra.mxu0 0
        %1303 = vmatprep.mubr.bf16.mxu0 0
        %1304 = vmatmul.mubr.bf16.gmra.mrb[0].mxu0 %v1213
        %v1305 = vpop.f32.mrb[0].mxu0
        %v1306 = vadd.f32 0.0, %v1305
        %v1307 = vpop.f32.mrb[0].mxu0
        %v1308 = vadd.f32 0.0, %v1307
        %v1309 = vpop.f32.mrb[0].mxu0
        %v1310 = vadd.f32 0.0, %v1309
        %v1311 = vpop.f32.mrb[0].mxu0
        %v1312 = vadd.f32 0.0, %v1311
        %1313 = vmatprep.mubr.bf16.mxu0 0
        %1314 = vmatmul.mubr.bf16.gmra.mrb[0].mxu0 %v1216
        %v1315 = vpop.f32.mrb[0].mxu0
        %v1316 = vadd.f32 0.0, %v1315
        %v1317 = vpop.f32.mrb[0].mxu0
        %v1318 = vadd.f32 0.0, %v1317
        %v1319 = vpop.f32.mrb[0].mxu0
        %v1320 = vadd.f32 0.0, %v1319
        %v1321 = vpop.f32.mrb[0].mxu0
        %v1322 = vadd.f32 0.0, %v1321
        %1323 = vdwg.mxu0
        %1324 = vrot.lane.b32.xlu0 %v1141, 124
        %v1325 = vpop.permute.xlu0 %1324
        %1326 = vrot.lane.b32.xlu0 %v1142, 124
        %v1327 = vpop.permute.xlu0 %1326
        %1328 = vrot.lane.b32.xlu0 %v1143, 124
        %v1329 = vpop.permute.xlu0 %1328
        %1330 = vrot.lane.b32.xlu0 %v1144, 124
        %v1331 = vpop.permute.xlu0 %1330
        %1332 = vrot.lane.b32.xlu0 %v1145, 124
        %v1333 = vpop.permute.xlu0 %1332
        %1334 = vrot.lane.b32.xlu0 %v1146, 124
        %v1335 = vpop.permute.xlu0 %1334
        %1336 = vrot.lane.b32.xlu0 %v1147, 124
        %v1337 = vpop.permute.xlu0 %1336
        %1338 = vrot.lane.b32.xlu0 %v1148, 124
        %v1339 = vpop.permute.xlu0 %1338
        %1340 = vrot.lane.b32.xlu0 %v1149, 124
        %v1341 = vpop.permute.xlu0 %1340
        %1342 = vrot.lane.b32.xlu0 %v1150, 124
        %v1343 = vpop.permute.xlu0 %1342
        %v1344 = vsel %vm286, %v1325, %v1327
        %v1345 = vsel %vm286, %v1327, %v1329
        %v1346 = vsel %vm286, %v1329, %v1331
        %v1347 = vsel %vm286, %v1331, %v1333
        %v1348 = vsel %vm286, %v1335, %v1337
        %v1349 = vsel %vm286, %v1337, %v1339
        %v1350 = vsel %vm286, %v1339, %v1341
        %v1351 = vsel %vm286, %v1341, %v1343
        %v1361 = vsel %vm1211, %v1159, 0
        %v1364 = vsel %vm1211, %v1160, 0
        %1366 = vmatprep.subr.bf16.mxu0 %v1345
        %1367 = vmatpush1.bf16.msra.mxu0 %v1344
        %1368 = vmatprep.subr.bf16.mxu0 %v1349
        %1369 = vmatpush1.bf16.msra.mxu0 %v1348
        %1370 = vmatprep.subr.bf16.mxu0 0
        %1371 = vmatpush1.bf16.msra.mxu0 0
        %1372 = vmatprep.subr.bf16.mxu0 0
        %1373 = vmatpush1.bf16.msra.mxu0 0
        %1374 = vmatprep.subr.bf16.mxu0 0
        %1375 = vmatpush1.bf16.msra.mxu0 0
        %1376 = vmatprep.subr.bf16.mxu0 0
        %1377 = vmatpush1.bf16.msra.mxu0 0
        %1378 = vmatprep.subr.bf16.mxu0 0
        %1379 = vmatpush1.bf16.msra.mxu0 0
        %1380 = vmatprep.subr.bf16.mxu0 0
        %1381 = vmatpush1.bf16.msra.mxu0 0
        %1382 = vmatprep.subr.bf16.mxu0 0
        %1383 = vmatpush1.bf16.msra.mxu0 0
        %1384 = vmatprep.subr.bf16.mxu0 0
        %1385 = vmatpush1.bf16.msra.mxu0 0
        %1386 = vmatprep.subr.bf16.mxu0 0
        %1387 = vmatpush1.bf16.msra.mxu0 0
        %1388 = vmatprep.subr.bf16.mxu0 0
        %1389 = vmatpush1.bf16.msra.mxu0 0
        %1390 = vmatprep.subr.bf16.mxu0 0
        %1391 = vmatpush1.bf16.msra.mxu0 0
        %1392 = vmatprep.subr.bf16.mxu0 0
        %1393 = vmatpush1.bf16.msra.mxu0 0
        %1394 = vmatprep.subr.bf16.mxu0 0
        %1395 = vmatpush1.bf16.msra.mxu0 0
        %1396 = vmatprep.subr.bf16.mxu0 0
        %1397 = vmatpush1.bf16.msra.mxu0 0
        %1398 = vmatprep.mubr.bf16.mxu0 0
        %1399 = vmatmul.mubr.bf16.gmra.mrb[0].mxu0 %v1361
        %v1400 = vpop.f32.mrb[0].mxu0
        %v1401 = vadd.f32 %v1253, %v1400
        %v1402 = vpop.f32.mrb[0].mxu0
        %v1403 = vadd.f32 %v1255, %v1402
        %v1404 = vpop.f32.mrb[0].mxu0
        %v1405 = vadd.f32 %v1257, %v1404
        %v1406 = vpop.f32.mrb[0].mxu0
        %v1407 = vadd.f32 %v1259, %v1406
        %1408 = vmatprep.mubr.bf16.mxu0 0
        %1409 = vmatmul.mubr.bf16.gmra.mrb[0].mxu0 %v1364
        %v1410 = vpop.f32.mrb[0].mxu0
        %v1411 = vadd.f32 %v1263, %v1410
        %v1412 = vpop.f32.mrb[0].mxu0
        %v1413 = vadd.f32 %v1265, %v1412
        %v1414 = vpop.f32.mrb[0].mxu0
        %v1415 = vadd.f32 %v1267, %v1414
        %v1416 = vpop.f32.mrb[0].mxu0
        %v1417 = vadd.f32 %v1269, %v1416
        %1418 = vdwg.mxu0
        %1419 = vmatprep.subr.bf16.mxu0 %v1347
        %1420 = vmatpush1.bf16.msra.mxu0 %v1346
        %1421 = vmatprep.subr.bf16.mxu0 %v1351
        %1422 = vmatpush1.bf16.msra.mxu0 %v1350
        %1423 = vmatprep.subr.bf16.mxu0 0
        %1424 = vmatpush1.bf16.msra.mxu0 0
        %1425 = vmatprep.subr.bf16.mxu0 0
        %1426 = vmatpush1.bf16.msra.mxu0 0
        %1427 = vmatprep.subr.bf16.mxu0 0
        %1428 = vmatpush1.bf16.msra.mxu0 0
        %1429 = vmatprep.subr.bf16.mxu0 0
        %1430 = vmatpush1.bf16.msra.mxu0 0
        %1431 = vmatprep.subr.bf16.mxu0 0
        %1432 = vmatpush1.bf16.msra.mxu0 0
        %1433 = vmatprep.subr.bf16.mxu0 0
        %1434 = vmatpush1.bf16.msra.mxu0 0
        %1435 = vmatprep.subr.bf16.mxu0 0
        %1436 = vmatpush1.bf16.msra.mxu0 0
        %1437 = vmatprep.subr.bf16.mxu0 0
        %1438 = vmatpush1.bf16.msra.mxu0 0
        %1439 = vmatprep.subr.bf16.mxu0 0
        %1440 = vmatpush1.bf16.msra.mxu0 0
        %1441 = vmatprep.subr.bf16.mxu0 0
        %1442 = vmatpush1.bf16.msra.mxu0 0
        %1443 = vmatprep.subr.bf16.mxu0 0
        %1444 = vmatpush1.bf16.msra.mxu0 0
        %1445 = vmatprep.subr.bf16.mxu0 0
        %1446 = vmatpush1.bf16.msra.mxu0 0
        %1447 = vmatprep.subr.bf16.mxu0 0
        %1448 = vmatpush1.bf16.msra.mxu0 0
        %1449 = vmatprep.subr.bf16.mxu0 0
        %1450 = vmatpush1.bf16.msra.mxu0 0
        %1451 = vmatprep.mubr.bf16.mxu0 0
        %1452 = vmatmul.mubr.bf16.gmra.mrb[0].mxu0 %v1361
        %v1453 = vpop.f32.mrb[0].mxu0
        %v1454 = vadd.f32 %v1306, %v1453
        %v1455 = vpop.f32.mrb[0].mxu0
        %v1456 = vadd.f32 %v1308, %v1455
        %v1457 = vpop.f32.mrb[0].mxu0
        %v1458 = vadd.f32 %v1310, %v1457
        %v1459 = vpop.f32.mrb[0].mxu0
        %v1460 = vadd.f32 %v1312, %v1459
        %1461 = vmatprep.mubr.bf16.mxu0 0
        %1462 = vmatmul.mubr.bf16.gmra.mrb[0].mxu0 %v1364
        %v1463 = vpop.f32.mrb[0].mxu0
        %v1464 = vadd.f32 %v1316, %v1463
        %v1465 = vpop.f32.mrb[0].mxu0
        %v1466 = vadd.f32 %v1318, %v1465
        %v1467 = vpop.f32.mrb[0].mxu0
        %v1468 = vadd.f32 %v1320, %v1467
        %v1469 = vpop.f32.mrb[0].mxu0
        %v1470 = vadd.f32 %v1322, %v1469
        %1471 = vdwg.mxu0
        %1472 = vrot.lane.b32.xlu0 %v1159, 64
        %v1473 = vpop.permute.xlu0 %1472
        %1474 = vrot.lane.b32.xlu0 %v1160, 64
        %v1475 = vpop.permute.xlu0 %1474
        %1476 = vrot.lane.b32.xlu0 %v1141, 116
        %v1477 = vpop.permute.xlu0 %1476
        %1478 = vrot.lane.b32.xlu0 %v1142, 116
        %v1479 = vpop.permute.xlu0 %1478
        %1480 = vrot.lane.b32.xlu0 %v1143, 116
        %v1481 = vpop.permute.xlu0 %1480
        %1482 = vrot.lane.b32.xlu0 %v1144, 116
        %v1483 = vpop.permute.xlu0 %1482
        %1484 = vrot.lane.b32.xlu0 %v1145, 116
        %v1485 = vpop.permute.xlu0 %1484
        %1486 = vrot.lane.b32.xlu0 %v1146, 116
        %v1487 = vpop.permute.xlu0 %1486
        %1488 = vrot.lane.b32.xlu0 %v1147, 116
        %v1489 = vpop.permute.xlu0 %1488
        %1490 = vrot.lane.b32.xlu0 %v1148, 116
        %v1491 = vpop.permute.xlu0 %1490
        %1492 = vrot.lane.b32.xlu0 %v1149, 116
        %v1493 = vpop.permute.xlu0 %1492
        %1494 = vrot.lane.b32.xlu0 %v1150, 116
        %v1495 = vpop.permute.xlu0 %1494
        %v1496 = vsel %vm717, %v1477, %v1479
        %v1497 = vsel %vm717, %v1479, %v1481
        %v1498 = vsel %vm717, %v1481, %v1483
        %v1499 = vsel %vm717, %v1483, %v1485
        %v1500 = vsel %vm717, %v1487, %v1489
        %v1501 = vsel %vm717, %v1489, %v1491
        %v1502 = vsel %vm717, %v1491, %v1493
        %v1503 = vsel %vm717, %v1493, %v1495
        %v1513 = vsel %vm1211, %v1473, 0
        %v1516 = vsel %vm1211, %v1475, 0
        %1518 = vmatprep.subr.bf16.mxu0 %v1497
        %1519 = vmatpush1.bf16.msra.mxu0 %v1496
        %1520 = vmatprep.subr.bf16.mxu0 %v1501
        %1521 = vmatpush1.bf16.msra.mxu0 %v1500
        %1522 = vmatprep.subr.bf16.mxu0 0
        %1523 = vmatpush1.bf16.msra.mxu0 0
        %1524 = vmatprep.subr.bf16.mxu0 0
        %1525 = vmatpush1.bf16.msra.mxu0 0
        %1526 = vmatprep.subr.bf16.mxu0 0
        %1527 = vmatpush1.bf16.msra.mxu0 0
        %1528 = vmatprep.subr.bf16.mxu0 0
        %1529 = vmatpush1.bf16.msra.mxu0 0
        %1530 = vmatprep.subr.bf16.mxu0 0
        %1531 = vmatpush1.bf16.msra.mxu0 0
        %1532 = vmatprep.subr.bf16.mxu0 0
        %1533 = vmatpush1.bf16.msra.mxu0 0
        %1534 = vmatprep.subr.bf16.mxu0 0
        %1535 = vmatpush1.bf16.msra.mxu0 0
        %1536 = vmatprep.subr.bf16.mxu0 0
        %1537 = vmatpush1.bf16.msra.mxu0 0
        %1538 = vmatprep.subr.bf16.mxu0 0
        %1539 = vmatpush1.bf16.msra.mxu0 0
        %1540 = vmatprep.subr.bf16.mxu0 0
        %1541 = vmatpush1.bf16.msra.mxu0 0
        %1542 = vmatprep.subr.bf16.mxu0 0
        %1543 = vmatpush1.bf16.msra.mxu0 0
        %1544 = vmatprep.subr.bf16.mxu0 0
        %1545 = vmatpush1.bf16.msra.mxu0 0
        %1546 = vmatprep.subr.bf16.mxu0 0
        %1547 = vmatpush1.bf16.msra.mxu0 0
        %1548 = vmatprep.subr.bf16.mxu0 0
        %1549 = vmatpush1.bf16.msra.mxu0 0
        %1550 = vmatprep.mubr.bf16.mxu0 0
        %1551 = vmatmul.mubr.bf16.gmra.mrb[0].mxu0 %v1513
        %v1552 = vpop.f32.mrb[0].mxu0
        %v1553 = vadd.f32 0.0, %v1552
        %v1554 = vpop.f32.mrb[0].mxu0
        %v1555 = vadd.f32 0.0, %v1554
        %v1556 = vpop.f32.mrb[0].mxu0
        %v1557 = vadd.f32 0.0, %v1556
        %v1558 = vpop.f32.mrb[0].mxu0
        %v1559 = vadd.f32 0.0, %v1558
        %1560 = vmatprep.mubr.bf16.mxu0 0
        %1561 = vmatmul.mubr.bf16.gmra.mrb[0].mxu0 %v1516
        %v1562 = vpop.f32.mrb[0].mxu0
        %v1563 = vadd.f32 0.0, %v1562
        %v1564 = vpop.f32.mrb[0].mxu0
        %v1565 = vadd.f32 0.0, %v1564
        %v1566 = vpop.f32.mrb[0].mxu0
        %v1567 = vadd.f32 0.0, %v1566
        %v1568 = vpop.f32.mrb[0].mxu0
        %v1569 = vadd.f32 0.0, %v1568
        %1570 = vdwg.mxu0
        %1571 = vmatprep.subr.bf16.mxu0 %v1499
        %1572 = vmatpush1.bf16.msra.mxu0 %v1498
        %1573 = vmatprep.subr.bf16.mxu0 %v1503
        %1574 = vmatpush1.bf16.msra.mxu0 %v1502
        %1575 = vmatprep.subr.bf16.mxu0 0
        %1576 = vmatpush1.bf16.msra.mxu0 0
        %1577 = vmatprep.subr.bf16.mxu0 0
        %1578 = vmatpush1.bf16.msra.mxu0 0
        %1579 = vmatprep.subr.bf16.mxu0 0
        %1580 = vmatpush1.bf16.msra.mxu0 0
        %1581 = vmatprep.subr.bf16.mxu0 0
        %1582 = vmatpush1.bf16.msra.mxu0 0
        %1583 = vmatprep.subr.bf16.mxu0 0
        %1584 = vmatpush1.bf16.msra.mxu0 0
        %1585 = vmatprep.subr.bf16.mxu0 0
        %1586 = vmatpush1.bf16.msra.mxu0 0
        %1587 = vmatprep.subr.bf16.mxu0 0
        %1588 = vmatpush1.bf16.msra.mxu0 0
        %1589 = vmatprep.subr.bf16.mxu0 0
        %1590 = vmatpush1.bf16.msra.mxu0 0
        %1591 = vmatprep.subr.bf16.mxu0 0
        %1592 = vmatpush1.bf16.msra.mxu0 0
        %1593 = vmatprep.subr.bf16.mxu0 0
        %1594 = vmatpush1.bf16.msra.mxu0 0
        %1595 = vmatprep.subr.bf16.mxu0 0
        %1596 = vmatpush1.bf16.msra.mxu0 0
        %1597 = vmatprep.subr.bf16.mxu0 0
        %1598 = vmatpush1.bf16.msra.mxu0 0
        %1599 = vmatprep.subr.bf16.mxu0 0
        %1600 = vmatpush1.bf16.msra.mxu0 0
        %1601 = vmatprep.subr.bf16.mxu0 0
        %1602 = vmatpush1.bf16.msra.mxu0 0
        %1603 = vmatprep.mubr.bf16.mxu0 0
        %1604 = vmatmul.mubr.bf16.gmra.mrb[0].mxu0 %v1513
        %v1605 = vpop.f32.mrb[0].mxu0
        %v1606 = vadd.f32 0.0, %v1605
        %v1607 = vpop.f32.mrb[0].mxu0
        %v1608 = vadd.f32 0.0, %v1607
        %v1609 = vpop.f32.mrb[0].mxu0
        %v1610 = vadd.f32 0.0, %v1609
        %v1611 = vpop.f32.mrb[0].mxu0
        %v1612 = vadd.f32 0.0, %v1611
        %1613 = vmatprep.mubr.bf16.mxu0 0
        %1614 = vmatmul.mubr.bf16.gmra.mrb[0].mxu0 %v1516
        %v1615 = vpop.f32.mrb[0].mxu0
        %v1616 = vadd.f32 0.0, %v1615
        %v1617 = vpop.f32.mrb[0].mxu0
        %v1618 = vadd.f32 0.0, %v1617
        %v1619 = vpop.f32.mrb[0].mxu0
        %v1620 = vadd.f32 0.0, %v1619
        %v1621 = vpop.f32.mrb[0].mxu0
        %v1622 = vadd.f32 0.0, %v1621
        %1623 = vdwg.mxu0
        %v1624 = vadd.f32 %v1401, %v1553
        %v1625 = vadd.f32 %v1403, %v1555
        %v1626 = vadd.f32 %v1454, %v1606
        %v1627 = vadd.f32 %v1456, %v1608
        %v1628 = vadd.f32 %v1405, %v1557
        %v1629 = vadd.f32 %v1407, %v1559
        %v1630 = vadd.f32 %v1458, %v1610
        %v1631 = vadd.f32 %v1460, %v1612
        %v1632 = vadd.f32 %v1411, %v1563
        %v1633 = vadd.f32 %v1413, %v1565
        %v1634 = vadd.f32 %v1464, %v1616
        %v1635 = vadd.f32 %v1466, %v1618
        %v1636 = vadd.f32 %v1415, %v1567
        %v1637 = vadd.f32 %v1417, %v1569
        %v1638 = vadd.f32 %v1468, %v1620
        %v1639 = vadd.f32 %v1470, %v1622
        %v1640 = vld [vmem:[%s2] sm:$0xff]
        %v1641 = vld [vmem:[%s2 + $0x8] sm:$0xff]
        %v1642 = vld [vmem:[%s2 + $0x10] sm:$0xff]
        %v1643 = vld [vmem:[%s2 + $0x18] sm:$0xff]
        %1645 = vset.pattern.permute.xlu0 1
        %1646 = vperm.xlu0 %1645, %v1640
        %v1647 = vpop.permute.xlu0 %1646
        %1650 = vset.pattern.permute.xlu0 1
        %1651 = vperm.xlu0 %1650, %v1641
        %v1652 = vpop.permute.xlu0 %1651
        %1655 = vset.pattern.permute.xlu0 1
        %1656 = vperm.xlu0 %1655, %v1642
        %v1657 = vpop.permute.xlu0 %1656
        %1660 = vset.pattern.permute.xlu0 1
        %1661 = vperm.xlu0 %1660, %v1643
        %v1662 = vpop.permute.xlu0 %1661
        %v1664 = vadd.f32 %v1624, %v1647
        %v1665 = vadd.f32 %v1625, %v1647
        %v1666 = vadd.f32 %v1626, %v1647
        %v1667 = vadd.f32 %v1627, %v1647
        %v1668 = vadd.f32 %v1628, %v1652
        %v1669 = vadd.f32 %v1629, %v1652
        %v1670 = vadd.f32 %v1630, %v1652
        %v1671 = vadd.f32 %v1631, %v1652
        %v1672 = vadd.f32 %v1632, %v1657
        %v1673 = vadd.f32 %v1633, %v1657
        %v1674 = vadd.f32 %v1634, %v1657
        %v1675 = vadd.f32 %v1635, %v1657
        %v1676 = vadd.f32 %v1636, %v1662
        %v1677 = vadd.f32 %v1637, %v1662
        %v1678 = vadd.f32 %v1638, %v1662
        %v1679 = vadd.f32 %v1639, %v1662
        %s1680 = scalar_lea.vmem %s185, 128
        %1681 = vst [vmem:[%s1680] sm:$0xff] %v1664
        %1682 = vst [vmem:[%s1680 + $0x8] sm:$0xff] %v1665
        %1683 = vst [vmem:[%s1680 + $0x10] sm:$0xff] %v1666
        %1684 = vst [vmem:[%s1680 + $0x18] sm:$0xff] %v1667
        %1685 = vst [vmem:[%s1680 + $0x20] sm:$0xff] %v1668
        %1686 = vst [vmem:[%s1680 + $0x28] sm:$0xff] %v1669
        %1687 = vst [vmem:[%s1680 + $0x30] sm:$0xff] %v1670
        %1688 = vst [vmem:[%s1680 + $0x38] sm:$0xff] %v1671
        %1689 = vst [vmem:[%s1680 + $0x40] sm:$0xff] %v1672
        %1690 = vst [vmem:[%s1680 + $0x48] sm:$0xff] %v1673
        %1691 = vst [vmem:[%s1680 + $0x50] sm:$0xff] %v1674
        %1692 = vst [vmem:[%s1680 + $0x58] sm:$0xff] %v1675
        %1693 = vst [vmem:[%s1680 + $0x60] sm:$0xff] %v1676
        %1694 = vst [vmem:[%s1680 + $0x68] sm:$0xff] %v1677
        %1695 = vst [vmem:[%s1680 + $0x70] sm:$0xff] %v1678
        %1696 = vst [vmem:[%s1680 + $0x78] sm:$0xff] %v1679
        %v1697 = vpack.c.bf16 %v1668, %v1664
        %v1698 = vpack.c.bf16 %v1669, %v1665
        %v1699 = vpack.c.bf16 %v1670, %v1666
        %v1700 = vpack.c.bf16 %v1671, %v1667
        %v1701 = vpack.c.bf16 %v1676, %v1672
        %v1702 = vpack.c.bf16 %v1677, %v1673
        %v1703 = vpack.c.bf16 %v1678, %v1674
        %v1704 = vpack.c.bf16 %v1679, %v1675
        %1713 = vrot.lane.b32.xlu0 %v1697, 8
        %v1714 = vpop.permute.xlu0 %1713
        %1715 = vrot.lane.b32.xlu0 %v1698, 8
        %v1716 = vpop.permute.xlu0 %1715
        %1717 = vrot.lane.b32.xlu0 %v1699, 8
        %v1718 = vpop.permute.xlu0 %1717
        %1719 = vrot.lane.b32.xlu0 %v1700, 8
        %v1720 = vpop.permute.xlu0 %1719
        %1721 = vrot.lane.b32.xlu0 %v1701, 8
        %v1722 = vpop.permute.xlu0 %1721
        %1723 = vrot.lane.b32.xlu0 %v1702, 8
        %v1724 = vpop.permute.xlu0 %1723
        %1725 = vrot.lane.b32.xlu0 %v1703, 8
        %v1726 = vpop.permute.xlu0 %1725
        %1727 = vrot.lane.b32.xlu0 %v1704, 8
        %v1728 = vpop.permute.xlu0 %1727
        %v1729 = vsel %vm217, %v1714, %v1716
        %v1730 = vsel %vm217, %v1716, %v1718
        %v1731 = vsel %vm217, %v1718, %v1720
        %v1732 = vsel %vm217, %v1722, %v1724
        %v1733 = vsel %vm217, %v1724, %v1726
        %v1734 = vsel %vm217, %v1726, %v1728
        %1745 = vst.msk [vmem:[#allocation2] sm:$0xff] %vm1125, %v1714
        %1746 = vst [vmem:[#allocation2 + $0x8] sm:$0xff] %v1729
        %1747 = vst [vmem:[#allocation2 + $0x10] sm:$0xff] %v1730
        %1748 = vst [vmem:[#allocation2 + $0x18] sm:$0xff] %v1731
        %1749 = vst.msk [vmem:[#allocation2 + $0x20] sm:$0xff] %vm187, %v1720
        %1750 = vst.msk [vmem:[#allocation2 + $0x28] sm:$0xff] %vm1125, %v1722
        %1751 = vst [vmem:[#allocation2 + $0x30] sm:$0xff] %v1732
        %1752 = vst [vmem:[#allocation2 + $0x38] sm:$0xff] %v1733
        %1753 = vst [vmem:[#allocation2 + $0x40] sm:$0xff] %v1734
        %1754 = vst.msk [vmem:[#allocation2 + $0x48] sm:$0xff] %vm187, %v1728
        %s1755 = scalar_lea.vmem [#allocation3], 32
        %v1756 = vld [vmem:[%s1755] sm:$0xf]
        %v1757 = vld [vmem:[%s1755 + $0x4] sm:$0xf]
        %v1758 = vld [vmem:[%s1755 + $0x8] sm:$0xf]
        %v1759 = vld [vmem:[%s1755 + $0xc] sm:$0xf]
        %v1760 = vld [vmem:[#allocation2] sm:$0xff]
        %v1761 = vld [vmem:[#allocation2 + $0x8] sm:$0xff]
        %v1762 = vld [vmem:[#allocation2 + $0x10] sm:$0xff]
        %v1763 = vld [vmem:[#allocation2 + $0x18] sm:$0xff]
        %v1764 = vld [vmem:[#allocation2 + $0x20] sm:$0xff]
        %v1765 = vld [vmem:[#allocation2 + $0x28] sm:$0xff]
        %v1766 = vld [vmem:[#allocation2 + $0x30] sm:$0xff]
        %v1767 = vld [vmem:[#allocation2 + $0x38] sm:$0xff]
        %v1768 = vld [vmem:[#allocation2 + $0x40] sm:$0xff]
        %v1769 = vld [vmem:[#allocation2 + $0x48] sm:$0xff]
        %v1774 = vunpack.c.l.b16 %v1756
        %v1775 = vunpack.c.l.b16 %v1757
        %v1776 = vunpack.c.l.b16 %v1758
        %v1777 = vunpack.c.l.b16 %v1759
        %v1778 = vpack.c.b16 %v1775, %v1774
        %v1779 = vpack.c.b16 %v1777, %v1776
        %1780 = vrot.lane.b32.xlu0 %v1778, 96
        %v1781 = vpop.permute.xlu0 %1780
        %1782 = vrot.lane.b32.xlu0 %v1779, 96
        %v1783 = vpop.permute.xlu0 %1782
        %1794 = vrot.lane.b32.xlu0 %v1760, 120
        %v1795 = vpop.permute.xlu0 %1794
        %1796 = vrot.lane.b32.xlu0 %v1761, 120
        %v1797 = vpop.permute.xlu0 %1796
        %1798 = vrot.lane.b32.xlu0 %v1762, 120
        %v1799 = vpop.permute.xlu0 %1798
        %1800 = vrot.lane.b32.xlu0 %v1763, 120
        %v1801 = vpop.permute.xlu0 %1800
        %1802 = vrot.lane.b32.xlu0 %v1764, 120
        %v1803 = vpop.permute.xlu0 %1802
        %1804 = vrot.lane.b32.xlu0 %v1765, 120
        %v1805 = vpop.permute.xlu0 %1804
        %1806 = vrot.lane.b32.xlu0 %v1766, 120
        %v1807 = vpop.permute.xlu0 %1806
        %1808 = vrot.lane.b32.xlu0 %v1767, 120
        %v1809 = vpop.permute.xlu0 %1808
        %1810 = vrot.lane.b32.xlu0 %v1768, 120
        %v1811 = vpop.permute.xlu0 %1810
        %1812 = vrot.lane.b32.xlu0 %v1769, 120
        %v1813 = vpop.permute.xlu0 %1812
        %v1814 = vsel %vm558, %v1795, %v1797
        %v1815 = vsel %vm558, %v1797, %v1799
        %v1816 = vsel %vm558, %v1799, %v1801
        %v1817 = vsel %vm558, %v1801, %v1803
        %v1818 = vsel %vm558, %v1805, %v1807
        %v1819 = vsel %vm558, %v1807, %v1809
        %v1820 = vsel %vm558, %v1809, %v1811
        %v1821 = vsel %vm558, %v1811, %v1813
        %v1831 = vsel %vm1211, %v1781, 0
        %v1834 = vsel %vm1211, %v1783, 0
        %1836 = vmatprep.subr.bf16.mxu0 %v1815
        %1837 = vmatpush1.bf16.msra.mxu0 %v1814
        %1838 = vmatprep.subr.bf16.mxu0 %v1819
        %1839 = vmatpush1.bf16.msra.mxu0 %v1818
        %1840 = vmatprep.subr.bf16.mxu0 0
        %1841 = vmatpush1.bf16.msra.mxu0 0
        %1842 = vmatprep.subr.bf16.mxu0 0
        %1843 = vmatpush1.bf16.msra.mxu0 0
        %1844 = vmatprep.subr.bf16.mxu0 0
        %1845 = vmatpush1.bf16.msra.mxu0 0
        %1846 = vmatprep.subr.bf16.mxu0 0
        %1847 = vmatpush1.bf16.msra.mxu0 0
        %1848 = vmatprep.subr.bf16.mxu0 0
        %1849 = vmatpush1.bf16.msra.mxu0 0
        %1850 = vmatprep.subr.bf16.mxu0 0
        %1851 = vmatpush1.bf16.msra.mxu0 0
        %1852 = vmatprep.subr.bf16.mxu0 0
        %1853 = vmatpush1.bf16.msra.mxu0 0
        %1854 = vmatprep.subr.bf16.mxu0 0
        %1855 = vmatpush1.bf16.msra.mxu0 0
        %1856 = vmatprep.subr.bf16.mxu0 0
        %1857 = vmatpush1.bf16.msra.mxu0 0
        %1858 = vmatprep.subr.bf16.mxu0 0
        %1859 = vmatpush1.bf16.msra.mxu0 0
        %1860 = vmatprep.subr.bf16.mxu0 0
        %1861 = vmatpush1.bf16.msra.mxu0 0
        %1862 = vmatprep.subr.bf16.mxu0 0
        %1863 = vmatpush1.bf16.msra.mxu0 0
        %1864 = vmatprep.subr.bf16.mxu0 0
        %1865 = vmatpush1.bf16.msra.mxu0 0
        %1866 = vmatprep.subr.bf16.mxu0 0
        %1867 = vmatpush1.bf16.msra.mxu0 0
        %1868 = vmatprep.mubr.bf16.mxu0 0
        %1869 = vmatmul.mubr.bf16.gmra.mrb[0].mxu0 %v1831
        %v1870 = vpop.f32.mrb[0].mxu0
        %v1871 = vadd.f32 0.0, %v1870
        %v1872 = vpop.f32.mrb[0].mxu0
        %v1873 = vadd.f32 0.0, %v1872
        %v1874 = vpop.f32.mrb[0].mxu0
        %v1875 = vadd.f32 0.0, %v1874
        %v1876 = vpop.f32.mrb[0].mxu0
        %v1877 = vadd.f32 0.0, %v1876
        %1878 = vmatprep.mubr.bf16.mxu0 0
        %1879 = vmatmul.mubr.bf16.gmra.mrb[0].mxu0 %v1834
        %v1880 = vpop.f32.mrb[0].mxu0
        %v1881 = vadd.f32 0.0, %v1880
        %v1882 = vpop.f32.mrb[0].mxu0
        %v1883 = vadd.f32 0.0, %v1882
        %v1884 = vpop.f32.mrb[0].mxu0
        %v1885 = vadd.f32 0.0, %v1884
        %v1886 = vpop.f32.mrb[0].mxu0
        %v1887 = vadd.f32 0.0, %v1886
        %1888 = vdwg.mxu0
        %1889 = vmatprep.subr.bf16.mxu0 %v1817
        %1890 = vmatpush1.bf16.msra.mxu0 %v1816
        %1891 = vmatprep.subr.bf16.mxu0 %v1821
        %1892 = vmatpush1.bf16.msra.mxu0 %v1820
        %1893 = vmatprep.subr.bf16.mxu0 0
        %1894 = vmatpush1.bf16.msra.mxu0 0
        %1895 = vmatprep.subr.bf16.mxu0 0
        %1896 = vmatpush1.bf16.msra.mxu0 0
        %1897 = vmatprep.subr.bf16.mxu0 0
        %1898 = vmatpush1.bf16.msra.mxu0 0
        %1899 = vmatprep.subr.bf16.mxu0 0
        %1900 = vmatpush1.bf16.msra.mxu0 0
        %1901 = vmatprep.subr.bf16.mxu0 0
        %1902 = vmatpush1.bf16.msra.mxu0 0
        %1903 = vmatprep.subr.bf16.mxu0 0
        %1904 = vmatpush1.bf16.msra.mxu0 0
        %1905 = vmatprep.subr.bf16.mxu0 0
        %1906 = vmatpush1.bf16.msra.mxu0 0
        %1907 = vmatprep.subr.bf16.mxu0 0
        %1908 = vmatpush1.bf16.msra.mxu0 0
        %1909 = vmatprep.subr.bf16.mxu0 0
        %1910 = vmatpush1.bf16.msra.mxu0 0
        %1911 = vmatprep.subr.bf16.mxu0 0
        %1912 = vmatpush1.bf16.msra.mxu0 0
        %1913 = vmatprep.subr.bf16.mxu0 0
        %1914 = vmatpush1.bf16.msra.mxu0 0
        %1915 = vmatprep.subr.bf16.mxu0 0
        %1916 = vmatpush1.bf16.msra.mxu0 0
        %1917 = vmatprep.subr.bf16.mxu0 0
        %1918 = vmatpush1.bf16.msra.mxu0 0
        %1919 = vmatprep.subr.bf16.mxu0 0
        %1920 = vmatpush1.bf16.msra.mxu0 0
        %1921 = vmatprep.mubr.bf16.mxu0 0
        %1922 = vmatmul.mubr.bf16.gmra.mrb[0].mxu0 %v1831
        %v1923 = vpop.f32.mrb[0].mxu0
        %v1924 = vadd.f32 0.0, %v1923
        %v1925 = vpop.f32.mrb[0].mxu0
        %v1926 = vadd.f32 0.0, %v1925
        %v1927 = vpop.f32.mrb[0].mxu0
        %v1928 = vadd.f32 0.0, %v1927
        %v1929 = vpop.f32.mrb[0].mxu0
        %v1930 = vadd.f32 0.0, %v1929
        %1931 = vmatprep.mubr.bf16.mxu0 0
        %1932 = vmatmul.mubr.bf16.gmra.mrb[0].mxu0 %v1834
        %v1933 = vpop.f32.mrb[0].mxu0
        %v1934 = vadd.f32 0.0, %v1933
        %v1935 = vpop.f32.mrb[0].mxu0
        %v1936 = vadd.f32 0.0, %v1935
        %v1937 = vpop.f32.mrb[0].mxu0
        %v1938 = vadd.f32 0.0, %v1937
        %v1939 = vpop.f32.mrb[0].mxu0
        %v1940 = vadd.f32 0.0, %v1939
        %1941 = vdwg.mxu0
        %1942 = vrot.lane.b32.xlu0 %v1760, 124
        %v1943 = vpop.permute.xlu0 %1942
        %1944 = vrot.lane.b32.xlu0 %v1761, 124
        %v1945 = vpop.permute.xlu0 %1944
        %1946 = vrot.lane.b32.xlu0 %v1762, 124
        %v1947 = vpop.permute.xlu0 %1946
        %1948 = vrot.lane.b32.xlu0 %v1763, 124
        %v1949 = vpop.permute.xlu0 %1948
        %1950 = vrot.lane.b32.xlu0 %v1764, 124
        %v1951 = vpop.permute.xlu0 %1950
        %1952 = vrot.lane.b32.xlu0 %v1765, 124
        %v1953 = vpop.permute.xlu0 %1952
        %1954 = vrot.lane.b32.xlu0 %v1766, 124
        %v1955 = vpop.permute.xlu0 %1954
        %1956 = vrot.lane.b32.xlu0 %v1767, 124
        %v1957 = vpop.permute.xlu0 %1956
        %1958 = vrot.lane.b32.xlu0 %v1768, 124
        %v1959 = vpop.permute.xlu0 %1958
        %1960 = vrot.lane.b32.xlu0 %v1769, 124
        %v1961 = vpop.permute.xlu0 %1960
        %v1962 = vsel %vm286, %v1943, %v1945
        %v1963 = vsel %vm286, %v1945, %v1947
        %v1964 = vsel %vm286, %v1947, %v1949
        %v1965 = vsel %vm286, %v1949, %v1951
        %v1966 = vsel %vm286, %v1953, %v1955
        %v1967 = vsel %vm286, %v1955, %v1957
        %v1968 = vsel %vm286, %v1957, %v1959
        %v1969 = vsel %vm286, %v1959, %v1961
        %v1979 = vsel %vm1211, %v1778, 0
        %v1982 = vsel %vm1211, %v1779, 0
        %1984 = vmatprep.subr.bf16.mxu0 %v1963
        %1985 = vmatpush1.bf16.msra.mxu0 %v1962
        %1986 = vmatprep.subr.bf16.mxu0 %v1967
        %1987 = vmatpush1.bf16.msra.mxu0 %v1966
        %1988 = vmatprep.subr.bf16.mxu0 0
        %1989 = vmatpush1.bf16.msra.mxu0 0
        %1990 = vmatprep.subr.bf16.mxu0 0
        %1991 = vmatpush1.bf16.msra.mxu0 0
        %1992 = vmatprep.subr.bf16.mxu0 0
        %1993 = vmatpush1.bf16.msra.mxu0 0
        %1994 = vmatprep.subr.bf16.mxu0 0
        %1995 = vmatpush1.bf16.msra.mxu0 0
        %1996 = vmatprep.subr.bf16.mxu0 0
        %1997 = vmatpush1.bf16.msra.mxu0 0
        %1998 = vmatprep.subr.bf16.mxu0 0
        %1999 = vmatpush1.bf16.msra.mxu0 0
        %2000 = vmatprep.subr.bf16.mxu0 0
        %2001 = vmatpush1.bf16.msra.mxu0 0
        %2002 = vmatprep.subr.bf16.mxu0 0
        %2003 = vmatpush1.bf16.msra.mxu0 0
        %2004 = vmatprep.subr.bf16.mxu0 0
        %2005 = vmatpush1.bf16.msra.mxu0 0
        %2006 = vmatprep.subr.bf16.mxu0 0
        %2007 = vmatpush1.bf16.msra.mxu0 0
        %2008 = vmatprep.subr.bf16.mxu0 0
        %2009 = vmatpush1.bf16.msra.mxu0 0
        %2010 = vmatprep.subr.bf16.mxu0 0
        %2011 = vmatpush1.bf16.msra.mxu0 0
        %2012 = vmatprep.subr.bf16.mxu0 0
        %2013 = vmatpush1.bf16.msra.mxu0 0
        %2014 = vmatprep.subr.bf16.mxu0 0
        %2015 = vmatpush1.bf16.msra.mxu0 0
        %2016 = vmatprep.mubr.bf16.mxu0 0
        %2017 = vmatmul.mubr.bf16.gmra.mrb[0].mxu0 %v1979
        %v2018 = vpop.f32.mrb[0].mxu0
        %v2019 = vadd.f32 %v1871, %v2018
        %v2020 = vpop.f32.mrb[0].mxu0
        %v2021 = vadd.f32 %v1873, %v2020
        %v2022 = vpop.f32.mrb[0].mxu0
        %v2023 = vadd.f32 %v1875, %v2022
        %v2024 = vpop.f32.mrb[0].mxu0
        %v2025 = vadd.f32 %v1877, %v2024
        %2026 = vmatprep.mubr.bf16.mxu0 0
        %2027 = vmatmul.mubr.bf16.gmra.mrb[0].mxu0 %v1982
        %v2028 = vpop.f32.mrb[0].mxu0
        %v2029 = vadd.f32 %v1881, %v2028
        %v2030 = vpop.f32.mrb[0].mxu0
        %v2031 = vadd.f32 %v1883, %v2030
        %v2032 = vpop.f32.mrb[0].mxu0
        %v2033 = vadd.f32 %v1885, %v2032
        %v2034 = vpop.f32.mrb[0].mxu0
        %v2035 = vadd.f32 %v1887, %v2034
        %2036 = vdwg.mxu0
        %2037 = vmatprep.subr.bf16.mxu0 %v1965
        %2038 = vmatpush1.bf16.msra.mxu0 %v1964
        %2039 = vmatprep.subr.bf16.mxu0 %v1969
        %2040 = vmatpush1.bf16.msra.mxu0 %v1968
        %2041 = vmatprep.subr.bf16.mxu0 0
        %2042 = vmatpush1.bf16.msra.mxu0 0
        %2043 = vmatprep.subr.bf16.mxu0 0
        %2044 = vmatpush1.bf16.msra.mxu0 0
        %2045 = vmatprep.subr.bf16.mxu0 0
        %2046 = vmatpush1.bf16.msra.mxu0 0
        %2047 = vmatprep.subr.bf16.mxu0 0
        %2048 = vmatpush1.bf16.msra.mxu0 0
        %2049 = vmatprep.subr.bf16.mxu0 0
        %2050 = vmatpush1.bf16.msra.mxu0 0
        %2051 = vmatprep.subr.bf16.mxu0 0
        %2052 = vmatpush1.bf16.msra.mxu0 0
        %2053 = vmatprep.subr.bf16.mxu0 0
        %2054 = vmatpush1.bf16.msra.mxu0 0
        %2055 = vmatprep.subr.bf16.mxu0 0
        %2056 = vmatpush1.bf16.msra.mxu0 0
        %2057 = vmatprep.subr.bf16.mxu0 0
        %2058 = vmatpush1.bf16.msra.mxu0 0
        %2059 = vmatprep.subr.bf16.mxu0 0
        %2060 = vmatpush1.bf16.msra.mxu0 0
        %2061 = vmatprep.subr.bf16.mxu0 0
        %2062 = vmatpush1.bf16.msra.mxu0 0
        %2063 = vmatprep.subr.bf16.mxu0 0
        %2064 = vmatpush1.bf16.msra.mxu0 0
        %2065 = vmatprep.subr.bf16.mxu0 0
        %2066 = vmatpush1.bf16.msra.mxu0 0
        %2067 = vmatprep.subr.bf16.mxu0 0
        %2068 = vmatpush1.bf16.msra.mxu0 0
        %2069 = vmatprep.mubr.bf16.mxu0 0
        %2070 = vmatmul.mubr.bf16.gmra.mrb[0].mxu0 %v1979
        %v2071 = vpop.f32.mrb[0].mxu0
        %v2072 = vadd.f32 %v1924, %v2071
        %v2073 = vpop.f32.mrb[0].mxu0
        %v2074 = vadd.f32 %v1926, %v2073
        %v2075 = vpop.f32.mrb[0].mxu0
        %v2076 = vadd.f32 %v1928, %v2075
        %v2077 = vpop.f32.mrb[0].mxu0
        %v2078 = vadd.f32 %v1930, %v2077
        %2079 = vmatprep.mubr.bf16.mxu0 0
        %2080 = vmatmul.mubr.bf16.gmra.mrb[0].mxu0 %v1982
        %v2081 = vpop.f32.mrb[0].mxu0
        %v2082 = vadd.f32 %v1934, %v2081
        %v2083 = vpop.f32.mrb[0].mxu0
        %v2084 = vadd.f32 %v1936, %v2083
        %v2085 = vpop.f32.mrb[0].mxu0
        %v2086 = vadd.f32 %v1938, %v2085
        %v2087 = vpop.f32.mrb[0].mxu0
        %v2088 = vadd.f32 %v1940, %v2087
        %2089 = vdwg.mxu0
        %2090 = vrot.lane.b32.xlu0 %v1778, 64
        %v2091 = vpop.permute.xlu0 %2090
        %2092 = vrot.lane.b32.xlu0 %v1779, 64
        %v2093 = vpop.permute.xlu0 %2092
        %2094 = vrot.lane.b32.xlu0 %v1760, 116
        %v2095 = vpop.permute.xlu0 %2094
        %2096 = vrot.lane.b32.xlu0 %v1761, 116
        %v2097 = vpop.permute.xlu0 %2096
        %2098 = vrot.lane.b32.xlu0 %v1762, 116
        %v2099 = vpop.permute.xlu0 %2098
        %2100 = vrot.lane.b32.xlu0 %v1763, 116
        %v2101 = vpop.permute.xlu0 %2100
        %2102 = vrot.lane.b32.xlu0 %v1764, 116
        %v2103 = vpop.permute.xlu0 %2102
        %2104 = vrot.lane.b32.xlu0 %v1765, 116
        %v2105 = vpop.permute.xlu0 %2104
        %2106 = vrot.lane.b32.xlu0 %v1766, 116
        %v2107 = vpop.permute.xlu0 %2106
        %2108 = vrot.lane.b32.xlu0 %v1767, 116
        %v2109 = vpop.permute.xlu0 %2108
        %2110 = vrot.lane.b32.xlu0 %v1768, 116
        %v2111 = vpop.permute.xlu0 %2110
        %2112 = vrot.lane.b32.xlu0 %v1769, 116
        %v2113 = vpop.permute.xlu0 %2112
        %v2114 = vsel %vm717, %v2095, %v2097
        %v2115 = vsel %vm717, %v2097, %v2099
        %v2116 = vsel %vm717, %v2099, %v2101
        %v2117 = vsel %vm717, %v2101, %v2103
        %v2118 = vsel %vm717, %v2105, %v2107
        %v2119 = vsel %vm717, %v2107, %v2109
        %v2120 = vsel %vm717, %v2109, %v2111
        %v2121 = vsel %vm717, %v2111, %v2113
        %v2131 = vsel %vm1211, %v2091, 0
        %v2134 = vsel %vm1211, %v2093, 0
        %2136 = vmatprep.subr.bf16.mxu0 %v2115
        %2137 = vmatpush1.bf16.msra.mxu0 %v2114
        %2138 = vmatprep.subr.bf16.mxu0 %v2119
        %2139 = vmatpush1.bf16.msra.mxu0 %v2118
        %2140 = vmatprep.subr.bf16.mxu0 0
        %2141 = vmatpush1.bf16.msra.mxu0 0
        %2142 = vmatprep.subr.bf16.mxu0 0
        %2143 = vmatpush1.bf16.msra.mxu0 0
        %2144 = vmatprep.subr.bf16.mxu0 0
        %2145 = vmatpush1.bf16.msra.mxu0 0
        %2146 = vmatprep.subr.bf16.mxu0 0
        %2147 = vmatpush1.bf16.msra.mxu0 0
        %2148 = vmatprep.subr.bf16.mxu0 0
        %2149 = vmatpush1.bf16.msra.mxu0 0
        %2150 = vmatprep.subr.bf16.mxu0 0
        %2151 = vmatpush1.bf16.msra.mxu0 0
        %2152 = vmatprep.subr.bf16.mxu0 0
        %2153 = vmatpush1.bf16.msra.mxu0 0
        %2154 = vmatprep.subr.bf16.mxu0 0
        %2155 = vmatpush1.bf16.msra.mxu0 0
        %2156 = vmatprep.subr.bf16.mxu0 0
        %2157 = vmatpush1.bf16.msra.mxu0 0
        %2158 = vmatprep.subr.bf16.mxu0 0
        %2159 = vmatpush1.bf16.msra.mxu0 0
        %2160 = vmatprep.subr.bf16.mxu0 0
        %2161 = vmatpush1.bf16.msra.mxu0 0
        %2162 = vmatprep.subr.bf16.mxu0 0
        %2163 = vmatpush1.bf16.msra.mxu0 0
        %2164 = vmatprep.subr.bf16.mxu0 0
        %2165 = vmatpush1.bf16.msra.mxu0 0
        %2166 = vmatprep.subr.bf16.mxu0 0
        %2167 = vmatpush1.bf16.msra.mxu0 0
        %2168 = vmatprep.mubr.bf16.mxu0 0
        %2169 = vmatmul.mubr.bf16.gmra.mrb[0].mxu0 %v2131
        %v2170 = vpop.f32.mrb[0].mxu0
        %v2171 = vadd.f32 0.0, %v2170
        %v2172 = vpop.f32.mrb[0].mxu0
        %v2173 = vadd.f32 0.0, %v2172
        %v2174 = vpop.f32.mrb[0].mxu0
        %v2175 = vadd.f32 0.0, %v2174
        %v2176 = vpop.f32.mrb[0].mxu0
        %v2177 = vadd.f32 0.0, %v2176
        %2178 = vmatprep.mubr.bf16.mxu0 0
        %2179 = vmatmul.mubr.bf16.gmra.mrb[0].mxu0 %v2134
        %v2180 = vpop.f32.mrb[0].mxu0
        %v2181 = vadd.f32 0.0, %v2180
        %v2182 = vpop.f32.mrb[0].mxu0
        %v2183 = vadd.f32 0.0, %v2182
        %v2184 = vpop.f32.mrb[0].mxu0
        %v2185 = vadd.f32 0.0, %v2184
        %v2186 = vpop.f32.mrb[0].mxu0
        %v2187 = vadd.f32 0.0, %v2186
        %2188 = vdwg.mxu0
        %2189 = vmatprep.subr.bf16.mxu0 %v2117
        %2190 = vmatpush1.bf16.msra.mxu0 %v2116
        %2191 = vmatprep.subr.bf16.mxu0 %v2121
        %2192 = vmatpush1.bf16.msra.mxu0 %v2120
        %2193 = vmatprep.subr.bf16.mxu0 0
        %2194 = vmatpush1.bf16.msra.mxu0 0
        %2195 = vmatprep.subr.bf16.mxu0 0
        %2196 = vmatpush1.bf16.msra.mxu0 0
        %2197 = vmatprep.subr.bf16.mxu0 0
        %2198 = vmatpush1.bf16.msra.mxu0 0
        %2199 = vmatprep.subr.bf16.mxu0 0
        %2200 = vmatpush1.bf16.msra.mxu0 0
        %2201 = vmatprep.subr.bf16.mxu0 0
        %2202 = vmatpush1.bf16.msra.mxu0 0
        %2203 = vmatprep.subr.bf16.mxu0 0
        %2204 = vmatpush1.bf16.msra.mxu0 0
        %2205 = vmatprep.subr.bf16.mxu0 0
        %2206 = vmatpush1.bf16.msra.mxu0 0
        %2207 = vmatprep.subr.bf16.mxu0 0
        %2208 = vmatpush1.bf16.msra.mxu0 0
        %2209 = vmatprep.subr.bf16.mxu0 0
        %2210 = vmatpush1.bf16.msra.mxu0 0
        %2211 = vmatprep.subr.bf16.mxu0 0
        %2212 = vmatpush1.bf16.msra.mxu0 0
        %2213 = vmatprep.subr.bf16.mxu0 0
        %2214 = vmatpush1.bf16.msra.mxu0 0
        %2215 = vmatprep.subr.bf16.mxu0 0
        %2216 = vmatpush1.bf16.msra.mxu0 0
        %2217 = vmatprep.subr.bf16.mxu0 0
        %2218 = vmatpush1.bf16.msra.mxu0 0
        %2219 = vmatprep.subr.bf16.mxu0 0
        %2220 = vmatpush1.bf16.msra.mxu0 0
        %2221 = vmatprep.mubr.bf16.mxu0 0
        %2222 = vmatmul.mubr.bf16.gmra.mrb[0].mxu0 %v2131
        %v2223 = vpop.f32.mrb[0].mxu0
        %v2224 = vadd.f32 0.0, %v2223
        %v2225 = vpop.f32.mrb[0].mxu0
        %v2226 = vadd.f32 0.0, %v2225
        %v2227 = vpop.f32.mrb[0].mxu0
        %v2228 = vadd.f32 0.0, %v2227
        %v2229 = vpop.f32.mrb[0].mxu0
        %v2230 = vadd.f32 0.0, %v2229
        %2231 = vmatprep.mubr.bf16.mxu0 0
        %2232 = vmatmul.mubr.bf16.gmra.mrb[0].mxu0 %v2134
        %v2233 = vpop.f32.mrb[0].mxu0
        %v2234 = vadd.f32 0.0, %v2233
        %v2235 = vpop.f32.mrb[0].mxu0
        %v2236 = vadd.f32 0.0, %v2235
        %v2237 = vpop.f32.mrb[0].mxu0
        %v2238 = vadd.f32 0.0, %v2237
        %v2239 = vpop.f32.mrb[0].mxu0
        %v2240 = vadd.f32 0.0, %v2239
        %2241 = vdwg.mxu0
        %v2242 = vadd.f32 %v2019, %v2171
        %v2243 = vadd.f32 %v2021, %v2173
        %v2244 = vadd.f32 %v2072, %v2224
        %v2245 = vadd.f32 %v2074, %v2226
        %v2246 = vadd.f32 %v2023, %v2175
        %v2247 = vadd.f32 %v2025, %v2177
        %v2248 = vadd.f32 %v2076, %v2228
        %v2249 = vadd.f32 %v2078, %v2230
        %v2250 = vadd.f32 %v2029, %v2181
        %v2251 = vadd.f32 %v2031, %v2183
        %v2252 = vadd.f32 %v2082, %v2234
        %v2253 = vadd.f32 %v2084, %v2236
        %v2254 = vadd.f32 %v2033, %v2185
        %v2255 = vadd.f32 %v2035, %v2187
        %v2256 = vadd.f32 %v2086, %v2238
        %v2257 = vadd.f32 %v2088, %v2240
        %v2258 = vld [vmem:[%s2] sm:$0xff]
        %v2259 = vld [vmem:[%s2 + $0x8] sm:$0xff]
        %v2260 = vld [vmem:[%s2 + $0x10] sm:$0xff]
        %v2261 = vld [vmem:[%s2 + $0x18] sm:$0xff]
        %2263 = vset.pattern.permute.xlu0 2
        %2264 = vperm.xlu0 %2263, %v2258
        %v2265 = vpop.permute.xlu0 %2264
        %2268 = vset.pattern.permute.xlu0 2
        %2269 = vperm.xlu0 %2268, %v2259
        %v2270 = vpop.permute.xlu0 %2269
        %2273 = vset.pattern.permute.xlu0 2
        %2274 = vperm.xlu0 %2273, %v2260
        %v2275 = vpop.permute.xlu0 %2274
        %2278 = vset.pattern.permute.xlu0 2
        %2279 = vperm.xlu0 %2278, %v2261
        %v2280 = vpop.permute.xlu0 %2279
        %v2282 = vadd.f32 %v2242, %v2265
        %v2283 = vadd.f32 %v2243, %v2265
        %v2284 = vadd.f32 %v2244, %v2265
        %v2285 = vadd.f32 %v2245, %v2265
        %v2286 = vadd.f32 %v2246, %v2270
        %v2287 = vadd.f32 %v2247, %v2270
        %v2288 = vadd.f32 %v2248, %v2270
        %v2289 = vadd.f32 %v2249, %v2270
        %v2290 = vadd.f32 %v2250, %v2275
        %v2291 = vadd.f32 %v2251, %v2275
        %v2292 = vadd.f32 %v2252, %v2275
        %v2293 = vadd.f32 %v2253, %v2275
        %v2294 = vadd.f32 %v2254, %v2280
        %v2295 = vadd.f32 %v2255, %v2280
        %v2296 = vadd.f32 %v2256, %v2280
        %v2297 = vadd.f32 %v2257, %v2280
        %s2298 = scalar_lea.vmem %s185, 256
        %2299 = vst [vmem:[%s2298] sm:$0xff] %v2282
        %2300 = vst [vmem:[%s2298 + $0x8] sm:$0xff] %v2283
        %2301 = vst [vmem:[%s2298 + $0x10] sm:$0xff] %v2284
        %2302 = vst [vmem:[%s2298 + $0x18] sm:$0xff] %v2285
        %2303 = vst [vmem:[%s2298 + $0x20] sm:$0xff] %v2286
        %2304 = vst [vmem:[%s2298 + $0x28] sm:$0xff] %v2287
        %2305 = vst [vmem:[%s2298 + $0x30] sm:$0xff] %v2288
        %2306 = vst [vmem:[%s2298 + $0x38] sm:$0xff] %v2289
        %2307 = vst [vmem:[%s2298 + $0x40] sm:$0xff] %v2290
        %2308 = vst [vmem:[%s2298 + $0x48] sm:$0xff] %v2291
        %2309 = vst [vmem:[%s2298 + $0x50] sm:$0xff] %v2292
        %2310 = vst [vmem:[%s2298 + $0x58] sm:$0xff] %v2293
        %2311 = vst [vmem:[%s2298 + $0x60] sm:$0xff] %v2294
        %2312 = vst [vmem:[%s2298 + $0x68] sm:$0xff] %v2295
        %2313 = vst [vmem:[%s2298 + $0x70] sm:$0xff] %v2296
        %2314 = vst [vmem:[%s2298 + $0x78] sm:$0xff] %v2297
        %v2315 = vpack.c.bf16 %v2286, %v2282
        %v2316 = vpack.c.bf16 %v2287, %v2283
        %v2317 = vpack.c.bf16 %v2288, %v2284
        %v2318 = vpack.c.bf16 %v2289, %v2285
        %v2319 = vpack.c.bf16 %v2294, %v2290
        %v2320 = vpack.c.bf16 %v2295, %v2291
        %v2321 = vpack.c.bf16 %v2296, %v2292
        %v2322 = vpack.c.bf16 %v2297, %v2293
        %2331 = vrot.lane.b32.xlu0 %v2315, 8
        %v2332 = vpop.permute.xlu0 %2331
        %2333 = vrot.lane.b32.xlu0 %v2316, 8
        %v2334 = vpop.permute.xlu0 %2333
        %2335 = vrot.lane.b32.xlu0 %v2317, 8
        %v2336 = vpop.permute.xlu0 %2335
        %2337 = vrot.lane.b32.xlu0 %v2318, 8
        %v2338 = vpop.permute.xlu0 %2337
        %2339 = vrot.lane.b32.xlu0 %v2319, 8
        %v2340 = vpop.permute.xlu0 %2339
        %2341 = vrot.lane.b32.xlu0 %v2320, 8
        %v2342 = vpop.permute.xlu0 %2341
        %2343 = vrot.lane.b32.xlu0 %v2321, 8
        %v2344 = vpop.permute.xlu0 %2343
        %2345 = vrot.lane.b32.xlu0 %v2322, 8
        %v2346 = vpop.permute.xlu0 %2345
        %v2347 = vsel %vm217, %v2332, %v2334
        %v2348 = vsel %vm217, %v2334, %v2336
        %v2349 = vsel %vm217, %v2336, %v2338
        %v2350 = vsel %vm217, %v2340, %v2342
        %v2351 = vsel %vm217, %v2342, %v2344
        %v2352 = vsel %vm217, %v2344, %v2346
        %2363 = vst.msk [vmem:[#allocation2] sm:$0xff] %vm1125, %v2332
        %2364 = vst [vmem:[#allocation2 + $0x8] sm:$0xff] %v2347
        %2365 = vst [vmem:[#allocation2 + $0x10] sm:$0xff] %v2348
        %2366 = vst [vmem:[#allocation2 + $0x18] sm:$0xff] %v2349
        %2367 = vst.msk [vmem:[#allocation2 + $0x20] sm:$0xff] %vm187, %v2338
        %2368 = vst.msk [vmem:[#allocation2 + $0x28] sm:$0xff] %vm1125, %v2340
        %2369 = vst [vmem:[#allocation2 + $0x30] sm:$0xff] %v2350
        %2370 = vst [vmem:[#allocation2 + $0x38] sm:$0xff] %v2351
        %2371 = vst [vmem:[#allocation2 + $0x40] sm:$0xff] %v2352
        %2372 = vst.msk [vmem:[#allocation2 + $0x48] sm:$0xff] %vm187, %v2346
        %s2373 = scalar_lea.vmem [#allocation3], 48
        %v2374 = vld [vmem:[%s2373] sm:$0xf]
        %v2375 = vld [vmem:[%s2373 + $0x4] sm:$0xf]
        %v2376 = vld [vmem:[%s2373 + $0x8] sm:$0xf]
        %v2377 = vld [vmem:[%s2373 + $0xc] sm:$0xf]
        %v2378 = vld [vmem:[#allocation2] sm:$0xff]
        %v2379 = vld [vmem:[#allocation2 + $0x8] sm:$0xff]
        %v2380 = vld [vmem:[#allocation2 + $0x10] sm:$0xff]
        %v2381 = vld [vmem:[#allocation2 + $0x18] sm:$0xff]
        %v2382 = vld [vmem:[#allocation2 + $0x20] sm:$0xff]
        %v2383 = vld [vmem:[#allocation2 + $0x28] sm:$0xff]
        %v2384 = vld [vmem:[#allocation2 + $0x30] sm:$0xff]
        %v2385 = vld [vmem:[#allocation2 + $0x38] sm:$0xff]
        %v2386 = vld [vmem:[#allocation2 + $0x40] sm:$0xff]
        %v2387 = vld [vmem:[#allocation2 + $0x48] sm:$0xff]
        %v2392 = vunpack.c.l.b16 %v2374
        %v2393 = vunpack.c.l.b16 %v2375
        %v2394 = vunpack.c.l.b16 %v2376
        %v2395 = vunpack.c.l.b16 %v2377
        %v2396 = vpack.c.b16 %v2393, %v2392
        %v2397 = vpack.c.b16 %v2395, %v2394
        %2398 = vrot.lane.b32.xlu0 %v2396, 96
        %v2399 = vpop.permute.xlu0 %2398
        %2400 = vrot.lane.b32.xlu0 %v2397, 96
        %v2401 = vpop.permute.xlu0 %2400
        %2412 = vrot.lane.b32.xlu0 %v2378, 120
        %v2413 = vpop.permute.xlu0 %2412
        %2414 = vrot.lane.b32.xlu0 %v2379, 120
        %v2415 = vpop.permute.xlu0 %2414
        %2416 = vrot.lane.b32.xlu0 %v2380, 120
        %v2417 = vpop.permute.xlu0 %2416
        %2418 = vrot.lane.b32.xlu0 %v2381, 120
        %v2419 = vpop.permute.xlu0 %2418
        %2420 = vrot.lane.b32.xlu0 %v2382, 120
        %v2421 = vpop.permute.xlu0 %2420
        %2422 = vrot.lane.b32.xlu0 %v2383, 120
        %v2423 = vpop.permute.xlu0 %2422
        %2424 = vrot.lane.b32.xlu0 %v2384, 120
        %v2425 = vpop.permute.xlu0 %2424
        %2426 = vrot.lane.b32.xlu0 %v2385, 120
        %v2427 = vpop.permute.xlu0 %2426
        %2428 = vrot.lane.b32.xlu0 %v2386, 120
        %v2429 = vpop.permute.xlu0 %2428
        %2430 = vrot.lane.b32.xlu0 %v2387, 120
        %v2431 = vpop.permute.xlu0 %2430
        %v2432 = vsel %vm558, %v2413, %v2415
        %v2433 = vsel %vm558, %v2415, %v2417
        %v2434 = vsel %vm558, %v2417, %v2419
        %v2435 = vsel %vm558, %v2419, %v2421
        %v2436 = vsel %vm558, %v2423, %v2425
        %v2437 = vsel %vm558, %v2425, %v2427
        %v2438 = vsel %vm558, %v2427, %v2429
        %v2439 = vsel %vm558, %v2429, %v2431
        %v2449 = vsel %vm1211, %v2399, 0
        %v2452 = vsel %vm1211, %v2401, 0
        %2454 = vmatprep.subr.bf16.mxu0 %v2433
        %2455 = vmatpush1.bf16.msra.mxu0 %v2432
        %2456 = vmatprep.subr.bf16.mxu0 %v2437
        %2457 = vmatpush1.bf16.msra.mxu0 %v2436
        %2458 = vmatprep.subr.bf16.mxu0 0
        %2459 = vmatpush1.bf16.msra.mxu0 0
        %2460 = vmatprep.subr.bf16.mxu0 0
        %2461 = vmatpush1.bf16.msra.mxu0 0
        %2462 = vmatprep.subr.bf16.mxu0 0
        %2463 = vmatpush1.bf16.msra.mxu0 0
        %2464 = vmatprep.subr.bf16.mxu0 0
        %2465 = vmatpush1.bf16.msra.mxu0 0
        %2466 = vmatprep.subr.bf16.mxu0 0
        %2467 = vmatpush1.bf16.msra.mxu0 0
        %2468 = vmatprep.subr.bf16.mxu0 0
        %2469 = vmatpush1.bf16.msra.mxu0 0
        %2470 = vmatprep.subr.bf16.mxu0 0
        %2471 = vmatpush1.bf16.msra.mxu0 0
        %2472 = vmatprep.subr.bf16.mxu0 0
        %2473 = vmatpush1.bf16.msra.mxu0 0
        %2474 = vmatprep.subr.bf16.mxu0 0
        %2475 = vmatpush1.bf16.msra.mxu0 0
        %2476 = vmatprep.subr.bf16.mxu0 0
        %2477 = vmatpush1.bf16.msra.mxu0 0
        %2478 = vmatprep.subr.bf16.mxu0 0
        %2479 = vmatpush1.bf16.msra.mxu0 0
        %2480 = vmatprep.subr.bf16.mxu0 0
        %2481 = vmatpush1.bf16.msra.mxu0 0
        %2482 = vmatprep.subr.bf16.mxu0 0
        %2483 = vmatpush1.bf16.msra.mxu0 0
        %2484 = vmatprep.subr.bf16.mxu0 0
        %2485 = vmatpush1.bf16.msra.mxu0 0
        %2486 = vmatprep.mubr.bf16.mxu0 0
        %2487 = vmatmul.mubr.bf16.gmra.mrb[0].mxu0 %v2449
        %v2488 = vpop.f32.mrb[0].mxu0
        %v2489 = vadd.f32 0.0, %v2488
        %v2490 = vpop.f32.mrb[0].mxu0
        %v2491 = vadd.f32 0.0, %v2490
        %v2492 = vpop.f32.mrb[0].mxu0
        %v2493 = vadd.f32 0.0, %v2492
        %v2494 = vpop.f32.mrb[0].mxu0
        %v2495 = vadd.f32 0.0, %v2494
        %2496 = vmatprep.mubr.bf16.mxu0 0
        %2497 = vmatmul.mubr.bf16.gmra.mrb[0].mxu0 %v2452
        %v2498 = vpop.f32.mrb[0].mxu0
        %v2499 = vadd.f32 0.0, %v2498
        %v2500 = vpop.f32.mrb[0].mxu0
        %v2501 = vadd.f32 0.0, %v2500
        %v2502 = vpop.f32.mrb[0].mxu0
        %v2503 = vadd.f32 0.0, %v2502
        %v2504 = vpop.f32.mrb[0].mxu0
        %v2505 = vadd.f32 0.0, %v2504
        %2506 = vdwg.mxu0
        %2507 = vmatprep.subr.bf16.mxu0 %v2435
        %2508 = vmatpush1.bf16.msra.mxu0 %v2434
        %2509 = vmatprep.subr.bf16.mxu0 %v2439
        %2510 = vmatpush1.bf16.msra.mxu0 %v2438
        %2511 = vmatprep.subr.bf16.mxu0 0
        %2512 = vmatpush1.bf16.msra.mxu0 0
        %2513 = vmatprep.subr.bf16.mxu0 0
        %2514 = vmatpush1.bf16.msra.mxu0 0
        %2515 = vmatprep.subr.bf16.mxu0 0
        %2516 = vmatpush1.bf16.msra.mxu0 0
        %2517 = vmatprep.subr.bf16.mxu0 0
        %2518 = vmatpush1.bf16.msra.mxu0 0
        %2519 = vmatprep.subr.bf16.mxu0 0
        %2520 = vmatpush1.bf16.msra.mxu0 0
        %2521 = vmatprep.subr.bf16.mxu0 0
        %2522 = vmatpush1.bf16.msra.mxu0 0
        %2523 = vmatprep.subr.bf16.mxu0 0
        %2524 = vmatpush1.bf16.msra.mxu0 0
        %2525 = vmatprep.subr.bf16.mxu0 0
        %2526 = vmatpush1.bf16.msra.mxu0 0
        %2527 = vmatprep.subr.bf16.mxu0 0
        %2528 = vmatpush1.bf16.msra.mxu0 0
        %2529 = vmatprep.subr.bf16.mxu0 0
        %2530 = vmatpush1.bf16.msra.mxu0 0
        %2531 = vmatprep.subr.bf16.mxu0 0
        %2532 = vmatpush1.bf16.msra.mxu0 0
        %2533 = vmatprep.subr.bf16.mxu0 0
        %2534 = vmatpush1.bf16.msra.mxu0 0
        %2535 = vmatprep.subr.bf16.mxu0 0
        %2536 = vmatpush1.bf16.msra.mxu0 0
        %2537 = vmatprep.subr.bf16.mxu0 0
        %2538 = vmatpush1.bf16.msra.mxu0 0
        %2539 = vmatprep.mubr.bf16.mxu0 0
        %2540 = vmatmul.mubr.bf16.gmra.mrb[0].mxu0 %v2449
        %v2541 = vpop.f32.mrb[0].mxu0
        %v2542 = vadd.f32 0.0, %v2541
        %v2543 = vpop.f32.mrb[0].mxu0
        %v2544 = vadd.f32 0.0, %v2543
        %v2545 = vpop.f32.mrb[0].mxu0
        %v2546 = vadd.f32 0.0, %v2545
        %v2547 = vpop.f32.mrb[0].mxu0
        %v2548 = vadd.f32 0.0, %v2547
        %2549 = vmatprep.mubr.bf16.mxu0 0
        %2550 = vmatmul.mubr.bf16.gmra.mrb[0].mxu0 %v2452
        %v2551 = vpop.f32.mrb[0].mxu0
        %v2552 = vadd.f32 0.0, %v2551
        %v2553 = vpop.f32.mrb[0].mxu0
        %v2554 = vadd.f32 0.0, %v2553
        %v2555 = vpop.f32.mrb[0].mxu0
        %v2556 = vadd.f32 0.0, %v2555
        %v2557 = vpop.f32.mrb[0].mxu0
        %v2558 = vadd.f32 0.0, %v2557
        %2559 = vdwg.mxu0
        %2560 = vrot.lane.b32.xlu0 %v2378, 124
        %v2561 = vpop.permute.xlu0 %2560
        %2562 = vrot.lane.b32.xlu0 %v2379, 124
        %v2563 = vpop.permute.xlu0 %2562
        %2564 = vrot.lane.b32.xlu0 %v2380, 124
        %v2565 = vpop.permute.xlu0 %2564
        %2566 = vrot.lane.b32.xlu0 %v2381, 124
        %v2567 = vpop.permute.xlu0 %2566
        %2568 = vrot.lane.b32.xlu0 %v2382, 124
        %v2569 = vpop.permute.xlu0 %2568
        %2570 = vrot.lane.b32.xlu0 %v2383, 124
        %v2571 = vpop.permute.xlu0 %2570
        %2572 = vrot.lane.b32.xlu0 %v2384, 124
        %v2573 = vpop.permute.xlu0 %2572
        %2574 = vrot.lane.b32.xlu0 %v2385, 124
        %v2575 = vpop.permute.xlu0 %2574
        %2576 = vrot.lane.b32.xlu0 %v2386, 124
        %v2577 = vpop.permute.xlu0 %2576
        %2578 = vrot.lane.b32.xlu0 %v2387, 124
        %v2579 = vpop.permute.xlu0 %2578
        %v2580 = vsel %vm286, %v2561, %v2563
        %v2581 = vsel %vm286, %v2563, %v2565
        %v2582 = vsel %vm286, %v2565, %v2567
        %v2583 = vsel %vm286, %v2567, %v2569
        %v2584 = vsel %vm286, %v2571, %v2573
        %v2585 = vsel %vm286, %v2573, %v2575
        %v2586 = vsel %vm286, %v2575, %v2577
        %v2587 = vsel %vm286, %v2577, %v2579
        %v2597 = vsel %vm1211, %v2396, 0
        %v2600 = vsel %vm1211, %v2397, 0
        %2602 = vmatprep.subr.bf16.mxu0 %v2581
        %2603 = vmatpush1.bf16.msra.mxu0 %v2580
        %2604 = vmatprep.subr.bf16.mxu0 %v2585
        %2605 = vmatpush1.bf16.msra.mxu0 %v2584
        %2606 = vmatprep.subr.bf16.mxu0 0
        %2607 = vmatpush1.bf16.msra.mxu0 0
        %2608 = vmatprep.subr.bf16.mxu0 0
        %2609 = vmatpush1.bf16.msra.mxu0 0
        %2610 = vmatprep.subr.bf16.mxu0 0
        %2611 = vmatpush1.bf16.msra.mxu0 0
        %2612 = vmatprep.subr.bf16.mxu0 0
        %2613 = vmatpush1.bf16.msra.mxu0 0
        %2614 = vmatprep.subr.bf16.mxu0 0
        %2615 = vmatpush1.bf16.msra.mxu0 0
        %2616 = vmatprep.subr.bf16.mxu0 0
        %2617 = vmatpush1.bf16.msra.mxu0 0
        %2618 = vmatprep.subr.bf16.mxu0 0
        %2619 = vmatpush1.bf16.msra.mxu0 0
        %2620 = vmatprep.subr.bf16.mxu0 0
        %2621 = vmatpush1.bf16.msra.mxu0 0
        %2622 = vmatprep.subr.bf16.mxu0 0
        %2623 = vmatpush1.bf16.msra.mxu0 0
        %2624 = vmatprep.subr.bf16.mxu0 0
        %2625 = vmatpush1.bf16.msra.mxu0 0
        %2626 = vmatprep.subr.bf16.mxu0 0
        %2627 = vmatpush1.bf16.msra.mxu0 0
        %2628 = vmatprep.subr.bf16.mxu0 0
        %2629 = vmatpush1.bf16.msra.mxu0 0
        %2630 = vmatprep.subr.bf16.mxu0 0
        %2631 = vmatpush1.bf16.msra.mxu0 0
        %2632 = vmatprep.subr.bf16.mxu0 0
        %2633 = vmatpush1.bf16.msra.mxu0 0
        %2634 = vmatprep.mubr.bf16.mxu0 0
        %2635 = vmatmul.mubr.bf16.gmra.mrb[0].mxu0 %v2597
        %v2636 = vpop.f32.mrb[0].mxu0
        %v2637 = vadd.f32 %v2489, %v2636
        %v2638 = vpop.f32.mrb[0].mxu0
        %v2639 = vadd.f32 %v2491, %v2638
        %v2640 = vpop.f32.mrb[0].mxu0
        %v2641 = vadd.f32 %v2493, %v2640
        %v2642 = vpop.f32.mrb[0].mxu0
        %v2643 = vadd.f32 %v2495, %v2642
        %2644 = vmatprep.mubr.bf16.mxu0 0
        %2645 = vmatmul.mubr.bf16.gmra.mrb[0].mxu0 %v2600
        %v2646 = vpop.f32.mrb[0].mxu0
        %v2647 = vadd.f32 %v2499, %v2646
        %v2648 = vpop.f32.mrb[0].mxu0
        %v2649 = vadd.f32 %v2501, %v2648
        %v2650 = vpop.f32.mrb[0].mxu0
        %v2651 = vadd.f32 %v2503, %v2650
        %v2652 = vpop.f32.mrb[0].mxu0
        %v2653 = vadd.f32 %v2505, %v2652
        %2654 = vdwg.mxu0
        %2655 = vmatprep.subr.bf16.mxu0 %v2583
        %2656 = vmatpush1.bf16.msra.mxu0 %v2582
        %2657 = vmatprep.subr.bf16.mxu0 %v2587
        %2658 = vmatpush1.bf16.msra.mxu0 %v2586
        %2659 = vmatprep.subr.bf16.mxu0 0
        %2660 = vmatpush1.bf16.msra.mxu0 0
        %2661 = vmatprep.subr.bf16.mxu0 0
        %2662 = vmatpush1.bf16.msra.mxu0 0
        %2663 = vmatprep.subr.bf16.mxu0 0
        %2664 = vmatpush1.bf16.msra.mxu0 0
        %2665 = vmatprep.subr.bf16.mxu0 0
        %2666 = vmatpush1.bf16.msra.mxu0 0
        %2667 = vmatprep.subr.bf16.mxu0 0
        %2668 = vmatpush1.bf16.msra.mxu0 0
        %2669 = vmatprep.subr.bf16.mxu0 0
        %2670 = vmatpush1.bf16.msra.mxu0 0
        %2671 = vmatprep.subr.bf16.mxu0 0
        %2672 = vmatpush1.bf16.msra.mxu0 0
        %2673 = vmatprep.subr.bf16.mxu0 0
        %2674 = vmatpush1.bf16.msra.mxu0 0
        %2675 = vmatprep.subr.bf16.mxu0 0
        %2676 = vmatpush1.bf16.msra.mxu0 0
        %2677 = vmatprep.subr.bf16.mxu0 0
        %2678 = vmatpush1.bf16.msra.mxu0 0
        %2679 = vmatprep.subr.bf16.mxu0 0
        %2680 = vmatpush1.bf16.msra.mxu0 0
        %2681 = vmatprep.subr.bf16.mxu0 0
        %2682 = vmatpush1.bf16.msra.mxu0 0
        %2683 = vmatprep.subr.bf16.mxu0 0
        %2684 = vmatpush1.bf16.msra.mxu0 0
        %2685 = vmatprep.subr.bf16.mxu0 0
        %2686 = vmatpush1.bf16.msra.mxu0 0
        %2687 = vmatprep.mubr.bf16.mxu0 0
        %2688 = vmatmul.mubr.bf16.gmra.mrb[0].mxu0 %v2597
        %v2689 = vpop.f32.mrb[0].mxu0
        %v2690 = vadd.f32 %v2542, %v2689
        %v2691 = vpop.f32.mrb[0].mxu0
        %v2692 = vadd.f32 %v2544, %v2691
        %v2693 = vpop.f32.mrb[0].mxu0
        %v2694 = vadd.f32 %v2546, %v2693
        %v2695 = vpop.f32.mrb[0].mxu0
        %v2696 = vadd.f32 %v2548, %v2695
        %2697 = vmatprep.mubr.bf16.mxu0 0
        %2698 = vmatmul.mubr.bf16.gmra.mrb[0].mxu0 %v2600
        %v2699 = vpop.f32.mrb[0].mxu0
        %v2700 = vadd.f32 %v2552, %v2699
        %v2701 = vpop.f32.mrb[0].mxu0
        %v2702 = vadd.f32 %v2554, %v2701
        %v2703 = vpop.f32.mrb[0].mxu0
        %v2704 = vadd.f32 %v2556, %v2703
        %v2705 = vpop.f32.mrb[0].mxu0
        %v2706 = vadd.f32 %v2558, %v2705
        %2707 = vdwg.mxu0
        %2708 = vrot.lane.b32.xlu0 %v2396, 64
        %v2709 = vpop.permute.xlu0 %2708
        %2710 = vrot.lane.b32.xlu0 %v2397, 64
        %v2711 = vpop.permute.xlu0 %2710
        %2712 = vrot.lane.b32.xlu0 %v2378, 116
        %v2713 = vpop.permute.xlu0 %2712
        %2714 = vrot.lane.b32.xlu0 %v2379, 116
        %v2715 = vpop.permute.xlu0 %2714
        %2716 = vrot.lane.b32.xlu0 %v2380, 116
        %v2717 = vpop.permute.xlu0 %2716
        %2718 = vrot.lane.b32.xlu0 %v2381, 116
        %v2719 = vpop.permute.xlu0 %2718
        %2720 = vrot.lane.b32.xlu0 %v2382, 116
        %v2721 = vpop.permute.xlu0 %2720
        %2722 = vrot.lane.b32.xlu0 %v2383, 116
        %v2723 = vpop.permute.xlu0 %2722
        %2724 = vrot.lane.b32.xlu0 %v2384, 116
        %v2725 = vpop.permute.xlu0 %2724
        %2726 = vrot.lane.b32.xlu0 %v2385, 116
        %v2727 = vpop.permute.xlu0 %2726
        %2728 = vrot.lane.b32.xlu0 %v2386, 116
        %v2729 = vpop.permute.xlu0 %2728
        %2730 = vrot.lane.b32.xlu0 %v2387, 116
        %v2731 = vpop.permute.xlu0 %2730
        %v2732 = vsel %vm717, %v2713, %v2715
        %v2733 = vsel %vm717, %v2715, %v2717
        %v2734 = vsel %vm717, %v2717, %v2719
        %v2735 = vsel %vm717, %v2719, %v2721
        %v2736 = vsel %vm717, %v2723, %v2725
        %v2737 = vsel %vm717, %v2725, %v2727
        %v2738 = vsel %vm717, %v2727, %v2729
        %v2739 = vsel %vm717, %v2729, %v2731
        %v2749 = vsel %vm1211, %v2709, 0
        %v2752 = vsel %vm1211, %v2711, 0
        %2754 = vmatprep.subr.bf16.mxu0 %v2733
        %2755 = vmatpush1.bf16.msra.mxu0 %v2732
        %2756 = vmatprep.subr.bf16.mxu0 %v2737
        %2757 = vmatpush1.bf16.msra.mxu0 %v2736
        %2758 = vmatprep.subr.bf16.mxu0 0
        %2759 = vmatpush1.bf16.msra.mxu0 0
        %2760 = vmatprep.subr.bf16.mxu0 0
        %2761 = vmatpush1.bf16.msra.mxu0 0
        %2762 = vmatprep.subr.bf16.mxu0 0
        %2763 = vmatpush1.bf16.msra.mxu0 0
        %2764 = vmatprep.subr.bf16.mxu0 0
        %2765 = vmatpush1.bf16.msra.mxu0 0
        %2766 = vmatprep.subr.bf16.mxu0 0
        %2767 = vmatpush1.bf16.msra.mxu0 0
        %2768 = vmatprep.subr.bf16.mxu0 0
        %2769 = vmatpush1.bf16.msra.mxu0 0
        %2770 = vmatprep.subr.bf16.mxu0 0
        %2771 = vmatpush1.bf16.msra.mxu0 0
        %2772 = vmatprep.subr.bf16.mxu0 0
        %2773 = vmatpush1.bf16.msra.mxu0 0
        %2774 = vmatprep.subr.bf16.mxu0 0
        %2775 = vmatpush1.bf16.msra.mxu0 0
        %2776 = vmatprep.subr.bf16.mxu0 0
        %2777 = vmatpush1.bf16.msra.mxu0 0
        %2778 = vmatprep.subr.bf16.mxu0 0
        %2779 = vmatpush1.bf16.msra.mxu0 0
        %2780 = vmatprep.subr.bf16.mxu0 0
        %2781 = vmatpush1.bf16.msra.mxu0 0
        %2782 = vmatprep.subr.bf16.mxu0 0
        %2783 = vmatpush1.bf16.msra.mxu0 0
        %2784 = vmatprep.subr.bf16.mxu0 0
        %2785 = vmatpush1.bf16.msra.mxu0 0
        %2786 = vmatprep.mubr.bf16.mxu0 0
        %2787 = vmatmul.mubr.bf16.gmra.mrb[0].mxu0 %v2749
        %v2788 = vpop.f32.mrb[0].mxu0
        %v2789 = vadd.f32 0.0, %v2788
        %v2790 = vpop.f32.mrb[0].mxu0
        %v2791 = vadd.f32 0.0, %v2790
        %v2792 = vpop.f32.mrb[0].mxu0
        %v2793 = vadd.f32 0.0, %v2792
        %v2794 = vpop.f32.mrb[0].mxu0
        %v2795 = vadd.f32 0.0, %v2794
        %2796 = vmatprep.mubr.bf16.mxu0 0
        %2797 = vmatmul.mubr.bf16.gmra.mrb[0].mxu0 %v2752
        %v2798 = vpop.f32.mrb[0].mxu0
        %v2799 = vadd.f32 0.0, %v2798
        %v2800 = vpop.f32.mrb[0].mxu0
        %v2801 = vadd.f32 0.0, %v2800
        %v2802 = vpop.f32.mrb[0].mxu0
        %v2803 = vadd.f32 0.0, %v2802
        %v2804 = vpop.f32.mrb[0].mxu0
        %v2805 = vadd.f32 0.0, %v2804
        %2806 = vdwg.mxu0
        %2807 = vmatprep.subr.bf16.mxu0 %v2735
        %2808 = vmatpush1.bf16.msra.mxu0 %v2734
        %2809 = vmatprep.subr.bf16.mxu0 %v2739
        %2810 = vmatpush1.bf16.msra.mxu0 %v2738
        %2811 = vmatprep.subr.bf16.mxu0 0
        %2812 = vmatpush1.bf16.msra.mxu0 0
        %2813 = vmatprep.subr.bf16.mxu0 0
        %2814 = vmatpush1.bf16.msra.mxu0 0
        %2815 = vmatprep.subr.bf16.mxu0 0
        %2816 = vmatpush1.bf16.msra.mxu0 0
        %2817 = vmatprep.subr.bf16.mxu0 0
        %2818 = vmatpush1.bf16.msra.mxu0 0
        %2819 = vmatprep.subr.bf16.mxu0 0
        %2820 = vmatpush1.bf16.msra.mxu0 0
        %2821 = vmatprep.subr.bf16.mxu0 0
        %2822 = vmatpush1.bf16.msra.mxu0 0
        %2823 = vmatprep.subr.bf16.mxu0 0
        %2824 = vmatpush1.bf16.msra.mxu0 0
        %2825 = vmatprep.subr.bf16.mxu0 0
        %2826 = vmatpush1.bf16.msra.mxu0 0
        %2827 = vmatprep.subr.bf16.mxu0 0
        %2828 = vmatpush1.bf16.msra.mxu0 0
        %2829 = vmatprep.subr.bf16.mxu0 0
        %2830 = vmatpush1.bf16.msra.mxu0 0
        %2831 = vmatprep.subr.bf16.mxu0 0
        %2832 = vmatpush1.bf16.msra.mxu0 0
        %2833 = vmatprep.subr.bf16.mxu0 0
        %2834 = vmatpush1.bf16.msra.mxu0 0
        %2835 = vmatprep.subr.bf16.mxu0 0
        %2836 = vmatpush1.bf16.msra.mxu0 0
        %2837 = vmatprep.subr.bf16.mxu0 0
        %2838 = vmatpush1.bf16.msra.mxu0 0
        %2839 = vmatprep.mubr.bf16.mxu0 0
        %2840 = vmatmul.mubr.bf16.gmra.mrb[0].mxu0 %v2749
        %v2841 = vpop.f32.mrb[0].mxu0
        %v2842 = vadd.f32 0.0, %v2841
        %v2843 = vpop.f32.mrb[0].mxu0
        %v2844 = vadd.f32 0.0, %v2843
        %v2845 = vpop.f32.mrb[0].mxu0
        %v2846 = vadd.f32 0.0, %v2845
        %v2847 = vpop.f32.mrb[0].mxu0
        %v2848 = vadd.f32 0.0, %v2847
        %2849 = vmatprep.mubr.bf16.mxu0 0
        %2850 = vmatmul.mubr.bf16.gmra.mrb[0].mxu0 %v2752
        %v2851 = vpop.f32.mrb[0].mxu0
        %v2852 = vadd.f32 0.0, %v2851
        %v2853 = vpop.f32.mrb[0].mxu0
        %v2854 = vadd.f32 0.0, %v2853
        %v2855 = vpop.f32.mrb[0].mxu0
        %v2856 = vadd.f32 0.0, %v2855
        %v2857 = vpop.f32.mrb[0].mxu0
        %v2858 = vadd.f32 0.0, %v2857
        %2859 = vdwg.mxu0
        %v2860 = vadd.f32 %v2637, %v2789
        %v2861 = vadd.f32 %v2639, %v2791
        %v2862 = vadd.f32 %v2690, %v2842
        %v2863 = vadd.f32 %v2692, %v2844
        %v2864 = vadd.f32 %v2641, %v2793
        %v2865 = vadd.f32 %v2643, %v2795
        %v2866 = vadd.f32 %v2694, %v2846
        %v2867 = vadd.f32 %v2696, %v2848
        %v2868 = vadd.f32 %v2647, %v2799
        %v2869 = vadd.f32 %v2649, %v2801
        %v2870 = vadd.f32 %v2700, %v2852
        %v2871 = vadd.f32 %v2702, %v2854
        %v2872 = vadd.f32 %v2651, %v2803
        %v2873 = vadd.f32 %v2653, %v2805
        %v2874 = vadd.f32 %v2704, %v2856
        %v2875 = vadd.f32 %v2706, %v2858
        %v2876 = vld [vmem:[%s2] sm:$0xff]
        %v2877 = vld [vmem:[%s2 + $0x8] sm:$0xff]
        %v2878 = vld [vmem:[%s2 + $0x10] sm:$0xff]
        %v2879 = vld [vmem:[%s2 + $0x18] sm:$0xff]
        %2881 = vset.pattern.permute.xlu0 3
        %2882 = vperm.xlu0 %2881, %v2876
        %v2883 = vpop.permute.xlu0 %2882
        %2886 = vset.pattern.permute.xlu0 3
        %2887 = vperm.xlu0 %2886, %v2877
        %v2888 = vpop.permute.xlu0 %2887
        %2891 = vset.pattern.permute.xlu0 3
        %2892 = vperm.xlu0 %2891, %v2878
        %v2893 = vpop.permute.xlu0 %2892
        %2896 = vset.pattern.permute.xlu0 3
        %2897 = vperm.xlu0 %2896, %v2879
        %v2898 = vpop.permute.xlu0 %2897
        %v2900 = vadd.f32 %v2860, %v2883
        %v2901 = vadd.f32 %v2861, %v2883
        %v2902 = vadd.f32 %v2862, %v2883
        %v2903 = vadd.f32 %v2863, %v2883
        %v2904 = vadd.f32 %v2864, %v2888
        %v2905 = vadd.f32 %v2865, %v2888
        %v2906 = vadd.f32 %v2866, %v2888
        %v2907 = vadd.f32 %v2867, %v2888
        %v2908 = vadd.f32 %v2868, %v2893
        %v2909 = vadd.f32 %v2869, %v2893
        %v2910 = vadd.f32 %v2870, %v2893
        %v2911 = vadd.f32 %v2871, %v2893
        %v2912 = vadd.f32 %v2872, %v2898
        %v2913 = vadd.f32 %v2873, %v2898
        %v2914 = vadd.f32 %v2874, %v2898
        %v2915 = vadd.f32 %v2875, %v2898
        %s2916 = scalar_lea.vmem %s185, 384
        %2917 = vst [vmem:[%s2916] sm:$0xff] %v2900
        %2918 = vst [vmem:[%s2916 + $0x8] sm:$0xff] %v2901
        %2919 = vst [vmem:[%s2916 + $0x10] sm:$0xff] %v2902
        %2920 = vst [vmem:[%s2916 + $0x18] sm:$0xff] %v2903
        %2921 = vst [vmem:[%s2916 + $0x20] sm:$0xff] %v2904
        %2922 = vst [vmem:[%s2916 + $0x28] sm:$0xff] %v2905
        %2923 = vst [vmem:[%s2916 + $0x30] sm:$0xff] %v2906
        %2924 = vst [vmem:[%s2916 + $0x38] sm:$0xff] %v2907
        %2925 = vst [vmem:[%s2916 + $0x40] sm:$0xff] %v2908
        %2926 = vst [vmem:[%s2916 + $0x48] sm:$0xff] %v2909
        %2927 = vst [vmem:[%s2916 + $0x50] sm:$0xff] %v2910
        %2928 = vst [vmem:[%s2916 + $0x58] sm:$0xff] %v2911
        %2929 = vst [vmem:[%s2916 + $0x60] sm:$0xff] %v2912
        %2930 = vst [vmem:[%s2916 + $0x68] sm:$0xff] %v2913
        %2931 = vst [vmem:[%s2916 + $0x70] sm:$0xff] %v2914
        %2932 = vst [vmem:[%s2916 + $0x78] sm:$0xff] %v2915
        %p2933 = scmp.lt.s32.totalorder %s15, 1
        %s2934 = scalar_select %p2933, %s15, 1
        %s2935 = smul.addr %s2934, 64
        %s2936 = smul.addr %s2935, 8
        %s2937 = scalar_lea.vmem %s3, %s2936
        // Predicated region
        $region37: #{residual_cnn_forward.1} parent=31 // pred_check
          %p2938 = pneg %p101
        $region38: #{residual_cnn_forward.1} parent=31 // pred_check_branch
          %2940 = sbr.rel (%p2938) target = $region40
        $region39: #{residual_cnn_forward.1} parent=31 // pred_region
          _
        $region40: #{residual_cnn_forward.1} parent=31 // pred_fallthru
          _
      $region32: #{residual_cnn_forward.1} parent=5 // pred_fallthru
        _
      %p2941 = scmp.le.s32.totalorder 2, %s10
      // Predicated region
      $region41: #{residual_cnn_forward.1} parent=5 // pred_check
        %p2942 = pneg %p2941
      $region42: #{residual_cnn_forward.1} parent=5 // pred_check_branch
        %2944 = sbr.rel (%p2942) target = $region44
      $region43: #{residual_cnn_forward.1} parent=5 // pred_region
        %s2945 = ssub.s32 %s10, 2
        // Predicated region
        $region45: #{residual_cnn_forward.1} parent=43 // pred_check
          %p2946 = pneg %p107
        $region46: #{residual_cnn_forward.1} parent=43 // pred_check_branch
          %2948 = sbr.rel (%p2946) target = $region48
        $region47: #{residual_cnn_forward.1} parent=43 // pred_region
          %p2949 = scmp.lt.s32.totalorder %s16, 1
          %s2950 = scalar_select %p2949, %s16, 1
          %s2951 = smul.addr %s2950, 64
          %s2952 = smul.addr %s2951, 8
          %s2953 = scalar_lea.vmem %s3, %s2952
        $region48: #{residual_cnn_forward.1} parent=43 // pred_fallthru
          _
      $region44: #{residual_cnn_forward.1} parent=5 // pred_fallthru
        _
    $region6: #{residual_cnn_forward.1} parent=1 // loop_footer
      %s14 = sadd.s32 1, %s10
    $region7: #{residual_cnn_forward.1} parent=1 // loop_footer_branch
      %9 = sbr.rel target = $region3
    $region8: #{residual_cnn_forward.1} parent=1 // loop_exit
      _
    %2954 = vsyncpa [#allocation4], 1
    %s2955 = scalar_lea.sflag [#allocation4], 1
    %2956 = vsyncpa %s2955, 1

</llo_original>
